<compile_context>
chip_gen: v7x
topology: tpu7x:2x2x1
jax: 0.10.0
libtpu: 0.0.40
codegen_flags: <defaults>
</compile_context>

<pallas_src>
import functools

import jax
import jax.numpy as jnp
from jax.experimental import pallas as pl
from jax.experimental.pallas import tpu as pltpu


# ----------------------------------------------------------------------------
# Pass 1: conv (bf16 MXU, fp32 accumulate) + optional bias, plus per-tile
#         partial sum / sum-of-squares for BatchNorm statistics.
# ----------------------------------------------------------------------------
def _conv_kernel(x_ref, w_ref, b_ref,                 # inputs
                 o_ref, psum_ref, pssq_ref,           # outputs
                 xp_ref, acc_ref,                     # scratch
                 *, pad, KH, KW, h_tile, use_bn):
    """
    x_ref:    (1, H, W, Cin)        bf16   un-padded image of batch n (resident over i)
    w_ref:    (KH*KW, Cin, Cout)    bf16   conv weight
    b_ref:    (1, Cout)             f32    conv bias (zeros when use_bn)
    o_ref:    (1, h_tile, W_out, Cout) f32 conv output tile (pre-BN when use_bn)
    psum_ref: (1, 1, 8, Cout)       f32    per-tile sum   (row-broadcast, use row 0)
    pssq_ref: (1, 1, 8, Cout)       f32    per-tile sumsq (row-broadcast, use row 0)
    xp_ref:   (H+2p, W+2p, Cin)     bf16   zero-padded image scratch (built at i==0)
    acc_ref:  (h_tile*W_out, Cout)  f32    matmul accumulator scratch
    """
    i = pl.program_id(1)
    _, H, W, Cin = x_ref.shape
    _, _, W_out, Cout = o_ref.shape

    # Build the zero-padded image in VMEM once per batch image.  The input block
    # index only depends on n, so it is reused across all h-tiles of this image.
    @pl.when(i == 0)
    def _():
        xp_ref[...] = jnp.zeros_like(xp_ref)
        xp_ref[pad:pad + H, pad:pad + W, :] = x_ref[0]

    row0 = i * h_tile  # first padded row needed by this output tile

    # Convolution as KH*KW shifted matmuls, accumulated in a fp32 VMEM scratch.
    for kh in range(KH):
        for kw in range(KW):
            patch = xp_ref[pl.ds(row0 + kh, h_tile), pl.ds(kw, W_out), :]
            patch = patch.reshape(h_tile * W_out, Cin)
            contrib = jnp.dot(patch, w_ref[kh * KW + kw],
                              preferred_element_type=jnp.float32)
            if kh == 0 and kw == 0:
                acc_ref[...] = contrib
            else:
                acc_ref[...] += contrib

    acc = acc_ref[...]

    if use_bn:
        # Raw conv output; BN + LeakyReLU are applied by a cheap second pass once
        # the *global* (N,H,W) statistics are known.
        o_ref[...] = acc.reshape(1, h_tile, W_out, Cout)
        s = jnp.sum(acc, axis=0, keepdims=True)            # (1, Cout)
        q = jnp.sum(acc * acc, axis=0, keepdims=True)      # (1, Cout)
        psum_ref[...] = jnp.broadcast_to(s.reshape(1, 1, 1, Cout), psum_ref.shape)
        pssq_ref[...] = jnp.broadcast_to(q.reshape(1, 1, 1, Cout), pssq_ref.shape)
    else:
        # bias = not is_bn  ->  conv bias, no BN / activation.
        o_ref[...] = (acc + b_ref[...]).reshape(1, h_tile, W_out, Cout)
        psum_ref[...] = jnp.zeros_like(psum_ref)
        pssq_ref[...] = jnp.zeros_like(pssq_ref)


# ----------------------------------------------------------------------------
# Pass 2: lane-dense fused scale/shift + LeakyReLU over a (N*H, W*Cout) view.
# ----------------------------------------------------------------------------
def _bn_act_kernel(y_ref, s_ref, b_ref, o_ref, *, neg_slope):
    y = y_ref[...] * s_ref[...] + b_ref[...]
    o_ref[...] = jnp.where(y >= 0, y, neg_slope * y)


# ----------------------------------------------------------------------------
# Tile-size helpers
# ----------------------------------------------------------------------------
def _largest_divisor_leq(total, target):
    t = min(total, max(1, target))
    while total % t:
        t -= 1
    return t


def _pick_row_tile(total, target):
    if total <= target:
        return total
    for t in range(min(target, total), 0, -1):
        if total % t == 0 and t % 8 == 0:
            return t
    return total


# ----------------------------------------------------------------------------
# Wrapper: NCHW in, NCHW out (PyTorch convention).  Stride 1 only.
# ----------------------------------------------------------------------------
def conv_block_forward(x_nchw, weight_oihw, gamma, beta, bias=None, *,
                       padding: int = 1, use_bn: bool = True,
                       eps: float = 1e-5, neg_slope: float = 0.01,
                       h_tile=None, row_tile=None):
    N, Cin, H, W = x_nchw.shape
    Cout, Cin_w, KH, KW = weight_oihw.shape
    assert Cin == Cin_w

    H_pad, W_pad = H + 2 * padding, W + 2 * padding
    H_out = H_pad - KH + 1
    W_out = W_pad - KW + 1

    # Layout glue: NCHW -> NHWC (lane-dense channels), bf16 MXU operands.
    x_nhwc = jnp.transpose(x_nchw, (0, 2, 3, 1)).astype(jnp.bfloat16)
    w_flat = jnp.transpose(weight_oihw, (2, 3, 1, 0)).astype(jnp.bfloat16)
    w_flat = w_flat.reshape(KH * KW, Cin, Cout)
    if bias is None:
        bias = jnp.zeros((Cout,), jnp.float32)
    b2d = bias.reshape(1, Cout).astype(jnp.float32)

    # Pick an h tile so the fp32 output tile stays ~2 MiB (fits the default
    # scoped-VMEM budget on all of v5e / v6e / v7x with double buffering).
    if h_tile is None:
        target_rows = max(1, (2 << 20) // max(1, W_out * Cout * 4))
        h_tile = _largest_divisor_leq(H_out, target_rows)
    assert H_out % h_tile == 0, (H_out, h_tile)
    num_h = H_out // h_tile

    # VMEM budget estimate (bf16 image + padded scratch + fp32 tiles), capped at
    # 48 MiB so it is valid on v7x (64 MiB physical) as well as v5e/v6e.
    est1 = (2 * H * W * Cin * 2 + H_pad * W_pad * Cin * 2
            + 2 * KH * KW * Cin * Cout * 2
            + 3 * h_tile * W_out * Cout * 4
            + 4 * 8 * Cout * 4)
    vmem1 = int(min(max(est1 + (8 << 20), 16 << 20), 48 << 20))

    kernel1 = functools.partial(_conv_kernel, pad=padding, KH=KH, KW=KW,
                                h_tile=h_tile, use_bn=use_bn)

    conv_out, psum, pssq = pl.pallas_call(
        kernel1,
        out_shape=(
            jax.ShapeDtypeStruct((N, H_out, W_out, Cout), jnp.float32),
            jax.ShapeDtypeStruct((N, num_h, 8, Cout), jnp.float32),
            jax.ShapeDtypeStruct((N, num_h, 8, Cout), jnp.float32),
        ),
        grid_spec=pltpu.PrefetchScalarGridSpec(
            num_scalar_prefetch=0,
            grid=(N, num_h),
            in_specs=[
                pl.BlockSpec((1, H, W, Cin), lambda n, i: (n, 0, 0, 0)),
                pl.BlockSpec((KH * KW, Cin, Cout), lambda n, i: (0, 0, 0)),
                pl.BlockSpec((1, Cout), lambda n, i: (0, 0)),
            ],
            out_specs=[
                pl.BlockSpec((1, h_tile, W_out, Cout), lambda n, i: (n, i, 0, 0)),
                pl.BlockSpec((1, 1, 8, Cout), lambda n, i: (n, i, 0, 0)),
                pl.BlockSpec((1, 1, 8, Cout), lambda n, i: (n, i, 0, 0)),
            ],
            scratch_shapes=[
                pltpu.VMEM((H_pad, W_pad, Cin), jnp.bfloat16),     # padded image
                pltpu.VMEM((h_tile * W_out, Cout), jnp.float32),   # accumulator
            ],
        ),
        compiler_params=pltpu.CompilerParams(
            # batch axis parallel (v7x megacore); h-tile axis arbitrary because
            # the padded-image scratch is initialized at i==0 and reused.
            dimension_semantics=("parallel", "arbitrary"),
            vmem_limit_bytes=vmem1,
        ),
    )(x_nhwc, w_flat, b2d)

    if not use_bn:
        return jnp.transpose(conv_out, (0, 3, 1, 2))  # NCHW

    # --- Tiny global reduce + algebraic BN fold (plain JAX, O(Cout) work) -----
    cnt = N * H_out * W_out
    s_tot = psum[:, :, 0, :].sum(axis=(0, 1))
    q_tot = pssq[:, :, 0, :].sum(axis=(0, 1))
    mean = s_tot / cnt
    var = jnp.maximum(q_tot / cnt - mean * mean, 0.0)   # biased (training-mode)
    scale = gamma.astype(jnp.float32) * jax.lax.rsqrt(var + eps)
    shift = beta.astype(jnp.float32) - mean * scale

    # --- Pass 2: lane-dense (N*H, W*Cout) elementwise BN + LeakyReLU ----------
    NR, C2 = N * H_out, W_out * Cout
    y2d = conv_out.reshape(NR, C2)                       # free reshape (row-major)
    scale_row = jnp.tile(scale, W_out).reshape(1, C2)
    shift_row = jnp.tile(shift, W_out).reshape(1, C2)

    if row_tile is None:
        row_tile = _pick_row_tile(NR, 1024)
    assert NR % row_tile == 0

    est2 = 4 * row_tile * C2 * 4 + 4 * C2 * 4
    vmem2 = int(min(max(est2 + (4 << 20), 16 << 20), 48 << 20))

    out2d = pl.pallas_call(
        functools.partial(_bn_act_kernel, neg_slope=neg_slope),
        out_shape=jax.ShapeDtypeStruct((NR, C2), jnp.float32),
        grid_spec=pltpu.PrefetchScalarGridSpec(
            num_scalar_prefetch=0,
            grid=(NR // row_tile,),
            in_specs=[
                pl.BlockSpec((row_tile, C2), lambda r: (r, 0)),
                pl.BlockSpec((1, C2), lambda r: (0, 0)),
                pl.BlockSpec((1, C2), lambda r: (0, 0)),
            ],
            out_specs=pl.BlockSpec((row_tile, C2), lambda r: (r, 0)),
        ),
        compiler_params=pltpu.CompilerParams(
            dimension_semantics=("parallel",),
            vmem_limit_bytes=vmem2,
        ),
    )(y2d, scale_row, shift_row)

    out_nhwc = out2d.reshape(N, H_out, W_out, Cout)
    return jnp.transpose(out_nhwc, (0, 3, 1, 2))  # back to NCHW


# ----------------------------------------------------------------------------
# Pure-JAX reference (same bf16 matmul operands, fp32 accumulation).
# ----------------------------------------------------------------------------
def _reference(x, w, gamma, beta, bias, padding, use_bn, eps, neg_slope):
    xb = jnp.transpose(x, (0, 2, 3, 1)).astype(jnp.bfloat16)
    wb = jnp.transpose(w, (2, 3, 1, 0)).astype(jnp.bfloat16)
    y = jax.lax.conv_general_dilated(
        xb, wb, window_strides=(1, 1),
        padding=[(padding, padding), (padding, padding)],
        dimension_numbers=("NHWC", "HWIO", "NHWC"),
        preferred_element_type=jnp.float32)
    if use_bn:
        mean = y.mean(axis=(0, 1, 2))
        var = ((y - mean) ** 2).mean(axis=(0, 1, 2))
        yn = (y - mean) * jax.lax.rsqrt(var + eps) * gamma + beta
        y = jnp.where(yn >= 0, yn, neg_slope * yn)
    else:
        y = y + bias
    return jnp.transpose(y, (0, 3, 1, 2))


if __name__ == "__main__":
    key = jax.random.PRNGKey(0)
    kx, kw, kg, kb, kb2 = jax.random.split(key, 5)

    N, Cin, Cout, H, W, K = 2, 4, 8, 16, 16, 3

    x = jax.random.normal(kx, (N, Cin, H, W), dtype=jnp.float32)
    weight = 0.1 * jax.random.normal(kw, (Cout, Cin, K, K), dtype=jnp.float32)
    gamma = 1.0 + 0.1 * jax.random.normal(kg, (Cout,), dtype=jnp.float32)  # BN weight
    beta = 0.1 * jax.random.normal(kb, (Cout,), dtype=jnp.float32)         # BN bias
    bias = 0.1 * jax.random.normal(kb2, (Cout,), dtype=jnp.float32)        # conv bias

    # is_bn=True path: LeakyReLU(BN(Conv(x))).  h_tile=8 -> a real (2, 2) grid.
    out_bn = conv_block_forward(x, weight, gamma, beta, padding=1,
                                use_bn=True, h_tile=8)
    jax.block_until_ready(out_bn)
    assert out_bn.shape == (N, Cout, H, W), out_bn.shape

    # is_bn=False path: Conv(x) + bias (no BN, no activation).
    out_nb = conv_block_forward(x, weight, gamma, beta, bias=bias, padding=1,
                                use_bn=False, h_tile=8)
    jax.block_until_ready(out_nb)
    assert out_nb.shape == (N, Cout, H, W), out_nb.shape

    # Numerical check against the pure-JAX reference.
    ref_bn = _reference(x, weight, gamma, beta, bias, 1, True, 1e-5, 0.01)
    ref_nb = _reference(x, weight, gamma, beta, bias, 1, False, 1e-5, 0.01)
    err_bn = float(jnp.max(jnp.abs(out_bn - ref_bn)))
    err_nb = float(jnp.max(jnp.abs(out_nb - ref_nb)))
    assert err_bn < 5e-3, ("bn path mismatch", err_bn)
    assert err_nb < 5e-3, ("no-bn path mismatch", err_nb)

    print("KERNEL_OK")
</pallas_src>

<mosaic_0001>
module attributes {stable_mosaic.version = 11 : i64} {
  func.func @_conv_kernel(%arg0: i32, %arg1: i32, %arg2: memref<1x16x16x4xbf16, #tpu.memory_space<vmem>>, %arg3: memref<9x4x8xbf16, #tpu.memory_space<vmem>>, %arg4: memref<1x8xf32, #tpu.memory_space<vmem>>, %arg5: memref<1x8x16x8xf32, #tpu.memory_space<vmem>>, %arg6: memref<1x1x8x8xf32, #tpu.memory_space<vmem>>, %arg7: memref<1x1x8x8xf32, #tpu.memory_space<vmem>>, %arg8: memref<18x18x4xbf16, #tpu.memory_space<vmem>>, %arg9: memref<128x8xf32, #tpu.memory_space<vmem>>) attributes {dimension_semantics = [#tpu.dimension_semantics<parallel>, #tpu.dimension_semantics<arbitrary>], iteration_bounds = array<i64: 2, 2>, scalar_prefetch = 0 : i64, scratch_operands = 2 : i64, tpu.core_type = #tpu.core_type<tc>, window_params = [{transform_indices = @transform_0, window_bounds = array<i64: 1, 16, 16, 4>}, {pipeline_mode = #tpu.pipeline_mode<synchronous>, transform_indices = @transform_1, window_bounds = array<i64: 9, 4, 8>}, {pipeline_mode = #tpu.pipeline_mode<synchronous>, transform_indices = @transform_2, window_bounds = array<i64: 1, 8>}, {transform_indices = @transform_3, window_bounds = array<i64: 1, 8, 16, 8>}, {transform_indices = @transform_4, window_bounds = array<i64: 1, 1, 8, 8>}, {transform_indices = @transform_5, window_bounds = array<i64: 1, 1, 8, 8>}]} {
    %c0_i32 = arith.constant 0 : i32
    %0 = arith.cmpi eq, %arg1, %c0_i32 : i32
    %1 = arith.extui %0 : i1 to i32
    %c0_i32_0 = arith.constant 0 : i32
    %2 = arith.cmpi ne, %1, %c0_i32_0 : i32
    scf.if %2 {
      %cst_102 = arith.constant 0.000000e+00 : bf16
      %108 = vector.broadcast %cst_102 : bf16 to vector<18x18x4xbf16>
      %c0_103 = arith.constant 0 : index
      %c0_104 = arith.constant 0 : index
      %c0_105 = arith.constant 0 : index
      %109 = vector.load %arg8[%c0_103, %c0_104, %c0_105] : memref<18x18x4xbf16, #tpu.memory_space<vmem>>, vector<18x18x4xbf16>
      tpu.vector_store %arg8[%c0_103, %c0_104, %c0_105], %108 {strides = array<i32>} : memref<18x18x4xbf16, #tpu.memory_space<vmem>>, vector<18x18x4xbf16>,
      %c0_106 = arith.constant 0 : index
      %c0_107 = arith.constant 0 : index
      %c0_108 = arith.constant 0 : index
      %c0_109 = arith.constant 0 : index
      %110 = vector.load %arg2[%c0_106, %c0_107, %c0_108, %c0_109] : memref<1x16x16x4xbf16, #tpu.memory_space<vmem>>, vector<1x16x16x4xbf16>
      %111 = vector.shape_cast %110 : vector<1x16x16x4xbf16> to vector<16x16x4xbf16>
      %c1_110 = arith.constant 1 : index
      %c1_111 = arith.constant 1 : index
      %c0_112 = arith.constant 0 : index
      %112 = vector.load %arg8[%c1_110, %c1_111, %c0_112] : memref<18x18x4xbf16, #tpu.memory_space<vmem>>, vector<16x16x4xbf16>
      tpu.vector_store %arg8[%c1_110, %c1_111, %c0_112], %111 {strides = array<i32>} : memref<18x18x4xbf16, #tpu.memory_space<vmem>>, vector<16x16x4xbf16>,
    } else {
    }
    %c8_i32 = arith.constant 8 : i32
    %3 = arith.muli %arg1, %c8_i32 : i32
    %c0_i32_1 = arith.constant 0 : i32
    %4 = arith.addi %3, %c0_i32_1 : i32
    %5 = arith.index_cast %4 : i32 to index
    %c0 = arith.constant 0 : index
    %c0_2 = arith.constant 0 : index
    %6 = vector.load %arg8[%5, %c0, %c0_2] : memref<18x18x4xbf16, #tpu.memory_space<vmem>>, vector<8x16x4xbf16>
    %7 = vector.shape_cast %6 : vector<8x16x4xbf16> to vector<128x4xbf16>
    %c0_3 = arith.constant 0 : index
    %c0_4 = arith.constant 0 : index
    %c0_5 = arith.constant 0 : index
    %8 = vector.load %arg3[%c0_3, %c0_4, %c0_5] : memref<9x4x8xbf16, #tpu.memory_space<vmem>>, vector<1x4x8xbf16>
    %9 = vector.shape_cast %8 : vector<1x4x8xbf16> to vector<4x8xbf16>
    %cst = arith.constant dense<0.000000e+00> : vector<128x8xf32>
    %10 = tpu.matmul %7, %9, %cst {dimension_numbers = #tpu.dot_dimension_numbers<[1], [0], [0], [1], [0, 0, 1, 1], [], []>} : vector<128x4xbf16>, vector<4x8xbf16>, vector<128x8xf32> -> vector<128x8xf32>
    %c0_6 = arith.constant 0 : index
    %c0_7 = arith.constant 0 : index
    %11 = vector.load %arg9[%c0_6, %c0_7] : memref<128x8xf32, #tpu.memory_space<vmem>>, vector<128x8xf32>
    tpu.vector_store %arg9[%c0_6, %c0_7], %10 {strides = array<i32>} : memref<128x8xf32, #tpu.memory_space<vmem>>, vector<128x8xf32>,
    %c0_i32_8 = arith.constant 0 : i32
    %12 = arith.addi %3, %c0_i32_8 : i32
    %13 = arith.index_cast %12 : i32 to index
    %c1 = arith.constant 1 : index
    %c0_9 = arith.constant 0 : index
    %14 = vector.load %arg8[%13, %c1, %c0_9] : memref<18x18x4xbf16, #tpu.memory_space<vmem>>, vector<8x16x4xbf16>
    %15 = vector.shape_cast %14 : vector<8x16x4xbf16> to vector<128x4xbf16>
    %c1_10 = arith.constant 1 : index
    %c0_11 = arith.constant 0 : index
    %c0_12 = arith.constant 0 : index
    %16 = vector.load %arg3[%c1_10, %c0_11, %c0_12] : memref<9x4x8xbf16, #tpu.memory_space<vmem>>, vector<1x4x8xbf16>
    %17 = vector.shape_cast %16 : vector<1x4x8xbf16> to vector<4x8xbf16>
    %cst_13 = arith.constant dense<0.000000e+00> : vector<128x8xf32>
    %18 = tpu.matmul %15, %17, %cst_13 {dimension_numbers = #tpu.dot_dimension_numbers<[1], [0], [0], [1], [0, 0, 1, 1], [], []>} : vector<128x4xbf16>, vector<4x8xbf16>, vector<128x8xf32> -> vector<128x8xf32>
    %c0_14 = arith.constant 0 : index
    %c0_15 = arith.constant 0 : index
    %19 = vector.load %arg9[%c0_14, %c0_15] : memref<128x8xf32, #tpu.memory_space<vmem>>, vector<128x8xf32>
    %20 = arith.addf %19, %18 : vector<128x8xf32>
    %c0_16 = arith.constant 0 : index
    %c0_17 = arith.constant 0 : index
    %21 = vector.load %arg9[%c0_16, %c0_17] : memref<128x8xf32, #tpu.memory_space<vmem>>, vector<128x8xf32>
    tpu.vector_store %arg9[%c0_16, %c0_17], %20 {strides = array<i32>} : memref<128x8xf32, #tpu.memory_space<vmem>>, vector<128x8xf32>,
    %c0_i32_18 = arith.constant 0 : i32
    %22 = arith.addi %3, %c0_i32_18 : i32
    %23 = arith.index_cast %22 : i32 to index
    %c2 = arith.constant 2 : index
    %c0_19 = arith.constant 0 : index
    %24 = vector.load %arg8[%23, %c2, %c0_19] : memref<18x18x4xbf16, #tpu.memory_space<vmem>>, vector<8x16x4xbf16>
    %25 = vector.shape_cast %24 : vector<8x16x4xbf16> to vector<128x4xbf16>
    %c2_20 = arith.constant 2 : index
    %c0_21 = arith.constant 0 : index
    %c0_22 = arith.constant 0 : index
    %26 = vector.load %arg3[%c2_20, %c0_21, %c0_22] : memref<9x4x8xbf16, #tpu.memory_space<vmem>>, vector<1x4x8xbf16>
    %27 = vector.shape_cast %26 : vector<1x4x8xbf16> to vector<4x8xbf16>
    %cst_23 = arith.constant dense<0.000000e+00> : vector<128x8xf32>
    %28 = tpu.matmul %25, %27, %cst_23 {dimension_numbers = #tpu.dot_dimension_numbers<[1], [0], [0], [1], [0, 0, 1, 1], [], []>} : vector<128x4xbf16>, vector<4x8xbf16>, vector<128x8xf32> -> vector<128x8xf32>
    %c0_24 = arith.constant 0 : index
    %c0_25 = arith.constant 0 : index
    %29 = vector.load %arg9[%c0_24, %c0_25] : memref<128x8xf32, #tpu.memory_space<vmem>>, vector<128x8xf32>
    %30 = arith.addf %29, %28 : vector<128x8xf32>
    %c0_26 = arith.constant 0 : index
    %c0_27 = arith.constant 0 : index
    %31 = vector.load %arg9[%c0_26, %c0_27] : memref<128x8xf32, #tpu.memory_space<vmem>>, vector<128x8xf32>
    tpu.vector_store %arg9[%c0_26, %c0_27], %30 {strides = array<i32>} : memref<128x8xf32, #tpu.memory_space<vmem>>, vector<128x8xf32>,
    %c1_i32 = arith.constant 1 : i32
    %32 = arith.addi %3, %c1_i32 : i32
    %33 = arith.index_cast %32 : i32 to index
    %c0_28 = arith.constant 0 : index
    %c0_29 = arith.constant 0 : index
    %34 = vector.load %arg8[%33, %c0_28, %c0_29] : memref<18x18x4xbf16, #tpu.memory_space<vmem>>, vector<8x16x4xbf16>
    %35 = vector.shape_cast %34 : vector<8x16x4xbf16> to vector<128x4xbf16>
    %c3 = arith.constant 3 : index
    %c0_30 = arith.constant 0 : index
    %c0_31 = arith.constant 0 : index
    %36 = vector.load %arg3[%c3, %c0_30, %c0_31] : memref<9x4x8xbf16, #tpu.memory_space<vmem>>, vector<1x4x8xbf16>
    %37 = vector.shape_cast %36 : vector<1x4x8xbf16> to vector<4x8xbf16>
    %cst_32 = arith.constant dense<0.000000e+00> : vector<128x8xf32>
    %38 = tpu.matmul %35, %37, %cst_32 {dimension_numbers = #tpu.dot_dimension_numbers<[1], [0], [0], [1], [0, 0, 1, 1], [], []>} : vector<128x4xbf16>, vector<4x8xbf16>, vector<128x8xf32> -> vector<128x8xf32>
    %c0_33 = arith.constant 0 : index
    %c0_34 = arith.constant 0 : index
    %39 = vector.load %arg9[%c0_33, %c0_34] : memref<128x8xf32, #tpu.memory_space<vmem>>, vector<128x8xf32>
    %40 = arith.addf %39, %38 : vector<128x8xf32>
    %c0_35 = arith.constant 0 : index
    %c0_36 = arith.constant 0 : index
    %41 = vector.load %arg9[%c0_35, %c0_36] : memref<128x8xf32, #tpu.memory_space<vmem>>, vector<128x8xf32>
    tpu.vector_store %arg9[%c0_35, %c0_36], %40 {strides = array<i32>} : memref<128x8xf32, #tpu.memory_space<vmem>>, vector<128x8xf32>,
    %c1_i32_37 = arith.constant 1 : i32
    %42 = arith.addi %3, %c1_i32_37 : i32
    %43 = arith.index_cast %42 : i32 to index
    %c1_38 = arith.constant 1 : index
    %c0_39 = arith.constant 0 : index
    %44 = vector.load %arg8[%43, %c1_38, %c0_39] : memref<18x18x4xbf16, #tpu.memory_space<vmem>>, vector<8x16x4xbf16>
    %45 = vector.shape_cast %44 : vector<8x16x4xbf16> to vector<128x4xbf16>
    %c4 = arith.constant 4 : index
    %c0_40 = arith.constant 0 : index
    %c0_41 = arith.constant 0 : index
    %46 = vector.load %arg3[%c4, %c0_40, %c0_41] : memref<9x4x8xbf16, #tpu.memory_space<vmem>>, vector<1x4x8xbf16>
    %47 = vector.shape_cast %46 : vector<1x4x8xbf16> to vector<4x8xbf16>
    %cst_42 = arith.constant dense<0.000000e+00> : vector<128x8xf32>
    %48 = tpu.matmul %45, %47, %cst_42 {dimension_numbers = #tpu.dot_dimension_numbers<[1], [0], [0], [1], [0, 0, 1, 1], [], []>} : vector<128x4xbf16>, vector<4x8xbf16>, vector<128x8xf32> -> vector<128x8xf32>
    %c0_43 = arith.constant 0 : index
    %c0_44 = arith.constant 0 : index
    %49 = vector.load %arg9[%c0_43, %c0_44] : memref<128x8xf32, #tpu.memory_space<vmem>>, vector<128x8xf32>
    %50 = arith.addf %49, %48 : vector<128x8xf32>
    %c0_45 = arith.constant 0 : index
    %c0_46 = arith.constant 0 : index
    %51 = vector.load %arg9[%c0_45, %c0_46] : memref<128x8xf32, #tpu.memory_space<vmem>>, vector<128x8xf32>
    tpu.vector_store %arg9[%c0_45, %c0_46], %50 {strides = array<i32>} : memref<128x8xf32, #tpu.memory_space<vmem>>, vector<128x8xf32>,
    %c1_i32_47 = arith.constant 1 : i32
    %52 = arith.addi %3, %c1_i32_47 : i32
    %53 = arith.index_cast %52 : i32 to index
    %c2_48 = arith.constant 2 : index
    %c0_49 = arith.constant 0 : index
    %54 = vector.load %arg8[%53, %c2_48, %c0_49] : memref<18x18x4xbf16, #tpu.memory_space<vmem>>, vector<8x16x4xbf16>
    %55 = vector.shape_cast %54 : vector<8x16x4xbf16> to vector<128x4xbf16>
    %c5 = arith.constant 5 : index
    %c0_50 = arith.constant 0 : index
    %c0_51 = arith.constant 0 : index
    %56 = vector.load %arg3[%c5, %c0_50, %c0_51] : memref<9x4x8xbf16, #tpu.memory_space<vmem>>, vector<1x4x8xbf16>
    %57 = vector.shape_cast %56 : vector<1x4x8xbf16> to vector<4x8xbf16>
    %cst_52 = arith.constant dense<0.000000e+00> : vector<128x8xf32>
    %58 = tpu.matmul %55, %57, %cst_52 {dimension_numbers = #tpu.dot_dimension_numbers<[1], [0], [0], [1], [0, 0, 1, 1], [], []>} : vector<128x4xbf16>, vector<4x8xbf16>, vector<128x8xf32> -> vector<128x8xf32>
    %c0_53 = arith.constant 0 : index
    %c0_54 = arith.constant 0 : index
    %59 = vector.load %arg9[%c0_53, %c0_54] : memref<128x8xf32, #tpu.memory_space<vmem>>, vector<128x8xf32>
    %60 = arith.addf %59, %58 : vector<128x8xf32>
    %c0_55 = arith.constant 0 : index
    %c0_56 = arith.constant 0 : index
    %61 = vector.load %arg9[%c0_55, %c0_56] : memref<128x8xf32, #tpu.memory_space<vmem>>, vector<128x8xf32>
    tpu.vector_store %arg9[%c0_55, %c0_56], %60 {strides = array<i32>} : memref<128x8xf32, #tpu.memory_space<vmem>>, vector<128x8xf32>,
    %c2_i32 = arith.constant 2 : i32
    %62 = arith.addi %3, %c2_i32 : i32
    %63 = arith.index_cast %62 : i32 to index
    %c0_57 = arith.constant 0 : index
    %c0_58 = arith.constant 0 : index
    %64 = vector.load %arg8[%63, %c0_57, %c0_58] : memref<18x18x4xbf16, #tpu.memory_space<vmem>>, vector<8x16x4xbf16>
    %65 = vector.shape_cast %64 : vector<8x16x4xbf16> to vector<128x4xbf16>
    %c6 = arith.constant 6 : index
    %c0_59 = arith.constant 0 : index
    %c0_60 = arith.constant 0 : index
    %66 = vector.load %arg3[%c6, %c0_59, %c0_60] : memref<9x4x8xbf16, #tpu.memory_space<vmem>>, vector<1x4x8xbf16>
    %67 = vector.shape_cast %66 : vector<1x4x8xbf16> to vector<4x8xbf16>
    %cst_61 = arith.constant dense<0.000000e+00> : vector<128x8xf32>
    %68 = tpu.matmul %65, %67, %cst_61 {dimension_numbers = #tpu.dot_dimension_numbers<[1], [0], [0], [1], [0, 0, 1, 1], [], []>} : vector<128x4xbf16>, vector<4x8xbf16>, vector<128x8xf32> -> vector<128x8xf32>
    %c0_62 = arith.constant 0 : index
    %c0_63 = arith.constant 0 : index
    %69 = vector.load %arg9[%c0_62, %c0_63] : memref<128x8xf32, #tpu.memory_space<vmem>>, vector<128x8xf32>
    %70 = arith.addf %69, %68 : vector<128x8xf32>
    %c0_64 = arith.constant 0 : index
    %c0_65 = arith.constant 0 : index
    %71 = vector.load %arg9[%c0_64, %c0_65] : memref<128x8xf32, #tpu.memory_space<vmem>>, vector<128x8xf32>
    tpu.vector_store %arg9[%c0_64, %c0_65], %70 {strides = array<i32>} : memref<128x8xf32, #tpu.memory_space<vmem>>, vector<128x8xf32>,
    %c2_i32_66 = arith.constant 2 : i32
    %72 = arith.addi %3, %c2_i32_66 : i32
    %73 = arith.index_cast %72 : i32 to index
    %c1_67 = arith.constant 1 : index
    %c0_68 = arith.constant 0 : index
    %74 = vector.load %arg8[%73, %c1_67, %c0_68] : memref<18x18x4xbf16, #tpu.memory_space<vmem>>, vector<8x16x4xbf16>
    %75 = vector.shape_cast %74 : vector<8x16x4xbf16> to vector<128x4xbf16>
    %c7 = arith.constant 7 : index
    %c0_69 = arith.constant 0 : index
    %c0_70 = arith.constant 0 : index
    %76 = vector.load %arg3[%c7, %c0_69, %c0_70] : memref<9x4x8xbf16, #tpu.memory_space<vmem>>, vector<1x4x8xbf16>
    %77 = vector.shape_cast %76 : vector<1x4x8xbf16> to vector<4x8xbf16>
    %cst_71 = arith.constant dense<0.000000e+00> : vector<128x8xf32>
    %78 = tpu.matmul %75, %77, %cst_71 {dimension_numbers = #tpu.dot_dimension_numbers<[1], [0], [0], [1], [0, 0, 1, 1], [], []>} : vector<128x4xbf16>, vector<4x8xbf16>, vector<128x8xf32> -> vector<128x8xf32>
    %c0_72 = arith.constant 0 : index
    %c0_73 = arith.constant 0 : index
    %79 = vector.load %arg9[%c0_72, %c0_73] : memref<128x8xf32, #tpu.memory_space<vmem>>, vector<128x8xf32>
    %80 = arith.addf %79, %78 : vector<128x8xf32>
    %c0_74 = arith.constant 0 : index
    %c0_75 = arith.constant 0 : index
    %81 = vector.load %arg9[%c0_74, %c0_75] : memref<128x8xf32, #tpu.memory_space<vmem>>, vector<128x8xf32>
    tpu.vector_store %arg9[%c0_74, %c0_75], %80 {strides = array<i32>} : memref<128x8xf32, #tpu.memory_space<vmem>>, vector<128x8xf32>,
    %c2_i32_76 = arith.constant 2 : i32
    %82 = arith.addi %3, %c2_i32_76 : i32
    %83 = arith.index_cast %82 : i32 to index
    %c2_77 = arith.constant 2 : index
    %c0_78 = arith.constant 0 : index
    %84 = vector.load %arg8[%83, %c2_77, %c0_78] : memref<18x18x4xbf16, #tpu.memory_space<vmem>>, vector<8x16x4xbf16>
    %85 = vector.shape_cast %84 : vector<8x16x4xbf16> to vector<128x4xbf16>
    %c8 = arith.constant 8 : index
    %c0_79 = arith.constant 0 : index
    %c0_80 = arith.constant 0 : index
    %86 = vector.load %arg3[%c8, %c0_79, %c0_80] : memref<9x4x8xbf16, #tpu.memory_space<vmem>>, vector<1x4x8xbf16>
    %87 = vector.shape_cast %86 : vector<1x4x8xbf16> to vector<4x8xbf16>
    %cst_81 = arith.constant dense<0.000000e+00> : vector<128x8xf32>
    %88 = tpu.matmul %85, %87, %cst_81 {dimension_numbers = #tpu.dot_dimension_numbers<[1], [0], [0], [1], [0, 0, 1, 1], [], []>} : vector<128x4xbf16>, vector<4x8xbf16>, vector<128x8xf32> -> vector<128x8xf32>
    %c0_82 = arith.constant 0 : index
    %c0_83 = arith.constant 0 : index
    %89 = vector.load %arg9[%c0_82, %c0_83] : memref<128x8xf32, #tpu.memory_space<vmem>>, vector<128x8xf32>
    %90 = arith.addf %89, %88 : vector<128x8xf32>
    %c0_84 = arith.constant 0 : index
    %c0_85 = arith.constant 0 : index
    %91 = vector.load %arg9[%c0_84, %c0_85] : memref<128x8xf32, #tpu.memory_space<vmem>>, vector<128x8xf32>
    tpu.vector_store %arg9[%c0_84, %c0_85], %90 {strides = array<i32>} : memref<128x8xf32, #tpu.memory_space<vmem>>, vector<128x8xf32>,
    %c0_86 = arith.constant 0 : index
    %c0_87 = arith.constant 0 : index
    %92 = vector.load %arg9[%c0_86, %c0_87] : memref<128x8xf32, #tpu.memory_space<vmem>>, vector<128x8xf32>
    %93 = vector.shape_cast %92 : vector<128x8xf32> to vector<1x8x16x8xf32>
    %c0_88 = arith.constant 0 : index
    %c0_89 = arith.constant 0 : index
    %c0_90 = arith.constant 0 : index
    %c0_91 = arith.constant 0 : index
    %94 = vector.load %arg5[%c0_88, %c0_89, %c0_90, %c0_91] : memref<1x8x16x8xf32, #tpu.memory_space<vmem>>, vector<1x8x16x8xf32>
    tpu.vector_store %arg5[%c0_88, %c0_89, %c0_90, %c0_91], %93 {strides = array<i32>} : memref<1x8x16x8xf32, #tpu.memory_space<vmem>>, vector<1x8x16x8xf32>,
    %cst_92 = arith.constant dense<0.000000e+00> : vector<8xf32>
    %95 = vector.multi_reduction <add>, %92, %cst_92 [0] : vector<128x8xf32> to vector<8xf32>
    %96 = vector.shape_cast %95 : vector<8xf32> to vector<1x8xf32>
    %97 = arith.mulf %92, %92 : vector<128x8xf32>
    %cst_93 = arith.constant dense<0.000000e+00> : vector<8xf32>
    %98 = vector.multi_reduction <add>, %97, %cst_93 [0] : vector<128x8xf32> to vector<8xf32>
    %99 = vector.shape_cast %98 : vector<8xf32> to vector<1x8xf32>
    %100 = vector.shape_cast %96 : vector<1x8xf32> to vector<1x1x1x8xf32>
    %101 = vector.shape_cast %100 : vector<1x1x1x8xf32> to vector<1x1x1x8xf32>
    %102 = vector.broadcast %101 : vector<1x1x1x8xf32> to vector<1x1x8x8xf32>
    %c0_94 = arith.constant 0 : index
    %c0_95 = arith.constant 0 : index
    %c0_96 = arith.constant 0 : index
    %c0_97 = arith.constant 0 : index
    %103 = vector.load %arg6[%c0_94, %c0_95, %c0_96, %c0_97] : memref<1x1x8x8xf32, #tpu.memory_space<vmem>>, vector<1x1x8x8xf32>
    tpu.vector_store %arg6[%c0_94, %c0_95, %c0_96, %c0_97], %102 {strides = array<i32>} : memref<1x1x8x8xf32, #tpu.memory_space<vmem>>, vector<1x1x8x8xf32>,
    %104 = vector.shape_cast %99 : vector<1x8xf32> to vector<1x1x1x8xf32>
    %105 = vector.shape_cast %104 : vector<1x1x1x8xf32> to vector<1x1x1x8xf32>
    %106 = vector.broadcast %105 : vector<1x1x1x8xf32> to vector<1x1x8x8xf32>
    %c0_98 = arith.constant 0 : index
    %c0_99 = arith.constant 0 : index
    %c0_100 = arith.constant 0 : index
    %c0_101 = arith.constant 0 : index
    %107 = vector.load %arg7[%c0_98, %c0_99, %c0_100, %c0_101] : memref<1x1x8x8xf32, #tpu.memory_space<vmem>>, vector<1x1x8x8xf32>
    tpu.vector_store %arg7[%c0_98, %c0_99, %c0_100, %c0_101], %106 {strides = array<i32>} : memref<1x1x8x8xf32, #tpu.memory_space<vmem>>, vector<1x1x8x8xf32>,
    return
  }
  func.func @transform_0(%arg0: i32, %arg1: i32) -> (i32, i32, i32, i32) {
    %c0_i32 = arith.constant 0 : i32
    %c0_i32_0 = arith.constant 0 : i32
    %c0_i32_1 = arith.constant 0 : i32
    %c0_i32_2 = arith.constant 0 : i32
    return %arg0, %c0_i32, %c0_i32_0, %c0_i32_1 : i32, i32, i32, i32
  }
  func.func @transform_1(%arg0: i32, %arg1: i32) -> (i32, i32, i32) {
    %c0_i32 = arith.constant 0 : i32
    %c0_i32_0 = arith.constant 0 : i32
    %c0_i32_1 = arith.constant 0 : i32
    %c0_i32_2 = arith.constant 0 : i32
    return %c0_i32, %c0_i32_0, %c0_i32_1 : i32, i32, i32
  }
  func.func @transform_2(%arg0: i32, %arg1: i32) -> (i32, i32) {
    %c0_i32 = arith.constant 0 : i32
    %c0_i32_0 = arith.constant 0 : i32
    %c0_i32_1 = arith.constant 0 : i32
    return %c0_i32, %c0_i32_0 : i32, i32
  }
  func.func @transform_3(%arg0: i32, %arg1: i32) -> (i32, i32, i32, i32) {
    %c0_i32 = arith.constant 0 : i32
    %c0_i32_0 = arith.constant 0 : i32
    %c0_i32_1 = arith.constant 0 : i32
    return %arg0, %arg1, %c0_i32, %c0_i32_0 : i32, i32, i32, i32
  }
  func.func @transform_4(%arg0: i32, %arg1: i32) -> (i32, i32, i32, i32) {
    %c0_i32 = arith.constant 0 : i32
    %c0_i32_0 = arith.constant 0 : i32
    %c0_i32_1 = arith.constant 0 : i32
    return %arg0, %arg1, %c0_i32, %c0_i32_0 : i32, i32, i32, i32
  }
  func.func @transform_5(%arg0: i32, %arg1: i32) -> (i32, i32, i32, i32) {
    %c0_i32 = arith.constant 0 : i32
    %c0_i32_0 = arith.constant 0 : i32
    %c0_i32_1 = arith.constant 0 : i32
    return %arg0, %arg1, %c0_i32, %c0_i32_0 : i32, i32, i32, i32
  }
}

</mosaic_0001>

<llo_original>
// kernel: tpu_custom_call.1
$region0: #{tpu_custom_call.1}
  #allocation0 [shape = 'u32[]', space=smem, size = 0x4, offset = 0x4, fixed_abs, tag = 'smem constant byte address 0x4 - core index']
  #allocation1 [shape = 'u32[144,128]{1,0:T(1,128)}', space=vmem, size = 0x12000, scoped, tag = 'internal scratch']
  #allocation2 [shape = 'bf16[18,18,4]{2,1,0:T(8,128)(2,1)}', space=vmem, size = 0x1b000, scoped, tag = 'scratch operand']
  #allocation3 [shape = 'f32[128,8]{1,0:T(8,128)}', space=vmem, size = 0x10000, scoped, tag = 'scratch operand']
  %s0 = inlined_call_operand.vmem [shape: bf16[2,16,16,4], index: 0, kind: input, shape index: {}]
  %s1 = inlined_call_operand.vmem [shape: bf16[9,4,8], index: 1, kind: input, shape index: {}]
  %s2 = inlined_call_operand.vmem [shape: f32[1,8], index: 2, kind: input, shape index: {}]
  %s3 = inlined_call_operand.vmem [shape: f32[2,16,16,8], index: 3, kind: output, shape index: {0}]
  %s4 = inlined_call_operand.hbm [shape: f32[2,2,8,8], index: 4, kind: output, shape index: {1}]
  %s5 = inlined_call_operand.hbm [shape: f32[2,2,8,8], index: 5, kind: output, shape index: {2}]
  %6 = xla_tuple %s3, %s4, %s5
  %s7 = sld [smem:[#allocation0]]
  $region65: #{tpu_custom_call.1} parent=0
    _
  %s9 = ssub.s32 1, %s7
  %s10 = scalar_select 0, %s9, %s7
  $region1: #{tpu_custom_call.1} parent=0
    #allocation4 [shape = 'u8[8192]{0}', space=vmem, size = 0x2000, scoped, tag = 'output window, operand 1']
    #allocation5 [shape = 's32[2]{0}', space=sflag, size = 0x8, scoped, tag = 'scoped memory for tpu_custom_call.1']
    #allocation6 [shape = 'u8[8192]{0}', space=vmem, size = 0x2000, scoped, tag = 'output window, operand 2']
    #allocation7 [shape = 's32[2]{0}', space=sflag, size = 0x8, scoped, tag = 'scoped memory for tpu_custom_call.1']
    %11 = vsyncpa [#allocation5], 0
    %s12 = scalar_lea.sflag [#allocation5], 1
    %13 = vsyncpa %s12, 0
    %14 = vsyncpa [#allocation7], 0
    %s15 = scalar_lea.sflag [#allocation7], 1
    %16 = vsyncpa %s15, 0
    loop: start=0, step=1, limit=6
    $region2: #{tpu_custom_call.1} parent=1 // loop_pre_header
      _
    $region3: #{tpu_custom_call.1} parent=1 // loop_header
      %s18 = sphi 0, %s22
      %p19 = scmp.ge.s32.totalorder %s18, 6
      %s25 = sphi 0, %s37
      %s26 = sphi 0, %s33
      %s27 = sphi 0, %s25
      %s28 = sphi 0, %s26
      %s29 = sphi 0, %s27
      %s30 = sphi 0, %s28
      %s40 = sphi 0, %s42
      %s43 = sphi 0, %s40
      %s44 = sphi 0, %s43
      %s60 = sphi 0, %s44
      %s64 = sphi 0, %s64
      %s66 = sphi 0, %s64
      %s67 = sphi 0, %s66
      %s81 = sphi 0, %s67
      %s85 = sphi 0, %s85
      %s87 = sphi 0, %s85
      %s88 = sphi 0, %s87
      %s102 = sphi 0, %s88
      %s110 = sphi 0, %s112
      %s113 = sphi 0, %s110
      %s114 = sphi 0, %s113
      %s130 = sphi 0, %s114
      %s138 = sphi 0, %s140
      %s141 = sphi 0, %s138
      %s142 = sphi 0, %s141
      %s158 = sphi 0, %s142
      %s166 = sphi 0, %s168
      %s169 = sphi 0, %s166
      %s170 = sphi 0, %s169
      %s186 = sphi 0, %s170
    $region4: #{tpu_custom_call.1} parent=1 // loop_header_branch
      %21 = sbr.rel (%p19) target = $region8
    $region5: #{tpu_custom_call.1} parent=1 // loop_body
      %s23 = ssub.s32 %s18, 1
      %s24 = ssub.s32 %s18, 2
      %s31 = sadd.s32 1, %s26
      %p32 = scmp.ge.s32.totalorder %s31, 2
      %s33 = scalar_select %p32, 0, %s31
      %s34 = sadd.s32 1, %s25
      %s35 = scalar_select %p32, %s34, %s25
      %p36 = scmp.ge.s32.totalorder %s35, 2
      %s37 = scalar_select %p36, 0, %s35
      %s38 = ssub.s32 %s25, %s37
      %p39 = scmp.eq.s32.totalorder %s38, 0
      %s41 = sadd.s32 %s40, 1
      %s42 = scalar_select %p39, %s40, %s41
      %p45 = pneg %p39
      %p46 = scmp.eq.s32.totalorder %s18, 3
      %p47 = por %p45, %p46
      %p48 = scmp.ne.s32.totalorder %s40, %s43
      %p49 = scmp.eq.s32.totalorder %s18, 0
      %p50 = por %p48, %p49
      %p51 = scmp.ne.s32.totalorder %s40, %s43
      %p52 = scmp.eq.s32.totalorder %s23, 3
      %p53 = por %p51, %p52
      %p54 = scmp.ne.s32.totalorder %s43, %s44
      %p55 = scmp.eq.s32.totalorder %s23, 0
      %p56 = por %p54, %p55
      %p57 = scmp.ne.s32.totalorder %s43, %s44
      %p58 = scmp.eq.s32.totalorder %s24, 3
      %p59 = por %p57, %p58
      %p61 = scmp.ne.s32.totalorder %s44, %s60
      %p62 = scmp.eq.s32.totalorder %s24, 0
      %p63 = por %p61, %p62
      %s65 = sadd.s32 %s64, 1
      %p68 = scmp.eq.s32.totalorder %s18, 3
      %p69 = scmp.ne.s32.totalorder %s64, %s66
      %p70 = scmp.eq.s32.totalorder %s18, 0
      %p71 = por %p69, %p70
      %p72 = scmp.ne.s32.totalorder %s64, %s66
      %p73 = scmp.eq.s32.totalorder %s23, 3
      %p74 = por %p72, %p73
      %p75 = scmp.ne.s32.totalorder %s66, %s67
      %p76 = scmp.eq.s32.totalorder %s23, 0
      %p77 = por %p75, %p76
      %p78 = scmp.ne.s32.totalorder %s66, %s67
      %p79 = scmp.eq.s32.totalorder %s24, 3
      %p80 = por %p78, %p79
      %p82 = scmp.ne.s32.totalorder %s67, %s81
      %p83 = scmp.eq.s32.totalorder %s24, 0
      %p84 = por %p82, %p83
      %s86 = sadd.s32 %s85, 1
      %p89 = scmp.eq.s32.totalorder %s18, 3
      %p90 = scmp.ne.s32.totalorder %s85, %s87
      %p91 = scmp.eq.s32.totalorder %s18, 0
      %p92 = por %p90, %p91
      %p93 = scmp.ne.s32.totalorder %s85, %s87
      %p94 = scmp.eq.s32.totalorder %s23, 3
      %p95 = por %p93, %p94
      %p96 = scmp.ne.s32.totalorder %s87, %s88
      %p97 = scmp.eq.s32.totalorder %s23, 0
      %p98 = por %p96, %p97
      %p99 = scmp.ne.s32.totalorder %s87, %s88
      %p100 = scmp.eq.s32.totalorder %s24, 3
      %p101 = por %p99, %p100
      %p103 = scmp.ne.s32.totalorder %s88, %s102
      %p104 = scmp.eq.s32.totalorder %s24, 0
      %p105 = por %p103, %p104
      %s106 = ssub.s32 %s25, %s37
      %s107 = ssub.s32 %s26, %s33
      %s108 = sor.u32 %s106, %s107
      %p109 = scmp.eq.s32.totalorder %s108, 0
      %s111 = sadd.s32 %s110, 1
      %s112 = scalar_select %p109, %s110, %s111
      %p115 = pneg %p109
      %p116 = scmp.eq.s32.totalorder %s18, 3
      %p117 = por %p115, %p116
      %p118 = scmp.ne.s32.totalorder %s110, %s113
      %p119 = scmp.eq.s32.totalorder %s18, 0
      %p120 = por %p118, %p119
      %p121 = scmp.ne.s32.totalorder %s110, %s113
      %p122 = scmp.eq.s32.totalorder %s23, 3
      %p123 = por %p121, %p122
      %p124 = scmp.ne.s32.totalorder %s113, %s114
      %p125 = scmp.eq.s32.totalorder %s23, 0
      %p126 = por %p124, %p125
      %p127 = scmp.ne.s32.totalorder %s113, %s114
      %p128 = scmp.eq.s32.totalorder %s24, 3
      %p129 = por %p127, %p128
      %p131 = scmp.ne.s32.totalorder %s114, %s130
      %p132 = scmp.eq.s32.totalorder %s24, 0
      %p133 = por %p131, %p132
      %s134 = ssub.s32 %s25, %s37
      %s135 = ssub.s32 %s26, %s33
      %s136 = sor.u32 %s134, %s135
      %p137 = scmp.eq.s32.totalorder %s136, 0
      %s139 = sadd.s32 %s138, 1
      %s140 = scalar_select %p137, %s138, %s139
      %p143 = pneg %p137
      %p144 = scmp.eq.s32.totalorder %s18, 3
      %p145 = por %p143, %p144
      %p146 = scmp.ne.s32.totalorder %s138, %s141
      %p147 = scmp.eq.s32.totalorder %s18, 0
      %p148 = por %p146, %p147
      %p149 = scmp.ne.s32.totalorder %s138, %s141
      %p150 = scmp.eq.s32.totalorder %s23, 3
      %p151 = por %p149, %p150
      %p152 = scmp.ne.s32.totalorder %s141, %s142
      %p153 = scmp.eq.s32.totalorder %s23, 0
      %p154 = por %p152, %p153
      %p155 = scmp.ne.s32.totalorder %s141, %s142
      %p156 = scmp.eq.s32.totalorder %s24, 3
      %p157 = por %p155, %p156
      %p159 = scmp.ne.s32.totalorder %s142, %s158
      %p160 = scmp.eq.s32.totalorder %s24, 0
      %p161 = por %p159, %p160
      %s162 = ssub.s32 %s25, %s37
      %s163 = ssub.s32 %s26, %s33
      %s164 = sor.u32 %s162, %s163
      %p165 = scmp.eq.s32.totalorder %s164, 0
      %s167 = sadd.s32 %s166, 1
      %s168 = scalar_select %p165, %s166, %s167
      %p171 = pneg %p165
      %p172 = scmp.eq.s32.totalorder %s18, 3
      %p173 = por %p171, %p172
      %p174 = scmp.ne.s32.totalorder %s166, %s169
      %p175 = scmp.eq.s32.totalorder %s18, 0
      %p176 = por %p174, %p175
      %p177 = scmp.ne.s32.totalorder %s166, %s169
      %p178 = scmp.eq.s32.totalorder %s23, 3
      %p179 = por %p177, %p178
      %p180 = scmp.ne.s32.totalorder %s169, %s170
      %p181 = scmp.eq.s32.totalorder %s23, 0
      %p182 = por %p180, %p181
      %p183 = scmp.ne.s32.totalorder %s169, %s170
      %p184 = scmp.eq.s32.totalorder %s24, 3
      %p185 = por %p183, %p184
      %p187 = scmp.ne.s32.totalorder %s170, %s186
      %p188 = scmp.eq.s32.totalorder %s24, 0
      %p189 = por %p187, %p188
      %p190 = scmp.le.s32.totalorder 1, %s18
      %p191 = scmp.lt.s32.totalorder %s18, 5
      %p192 = pnand %p190, %p191
      %p193 = pneg %p192
      // Predicated region
      $region9: #{tpu_custom_call.1} parent=5 // pred_check
        _
      $region10: #{tpu_custom_call.1} parent=5 // pred_check_branch
        %195 = sbr.rel (%p192) target = $region12
      $region11: #{tpu_custom_call.1} parent=5 // pred_region
        %s196 = ssub.s32 %s18, 1
        // Predicated region
        $region13: #{tpu_custom_call.1} parent=11 // pred_check
          %p197 = pneg %p77
        $region14: #{tpu_custom_call.1} parent=11 // pred_check_branch
          %199 = sbr.rel (%p197) target = $region16
        $region15: #{tpu_custom_call.1} parent=11 // pred_region
          _
        $region16: #{tpu_custom_call.1} parent=11 // pred_fallthru
          _
        // Predicated region
        $region17: #{tpu_custom_call.1} parent=11 // pred_check
          %p200 = pneg %p98
        $region18: #{tpu_custom_call.1} parent=11 // pred_check_branch
          %202 = sbr.rel (%p200) target = $region20
        $region19: #{tpu_custom_call.1} parent=11 // pred_region
          _
        $region20: #{tpu_custom_call.1} parent=11 // pred_fallthru
          _
      $region12: #{tpu_custom_call.1} parent=5 // pred_fallthru
        _
      %p203 = scmp.lt.s32.totalorder %s18, 4
      // Predicated region
      $region21: #{tpu_custom_call.1} parent=5 // pred_check
        %p204 = pneg %p203
      $region22: #{tpu_custom_call.1} parent=5 // pred_check_branch
        %206 = sbr.rel (%p204) target = $region24
      $region23: #{tpu_custom_call.1} parent=5 // pred_region
        // Predicated region
        $region25: #{tpu_custom_call.1} parent=23 // pred_check
          %p207 = pneg %p50
        $region26: #{tpu_custom_call.1} parent=23 // pred_check_branch
          %209 = sbr.rel (%p207) target = $region28
        $region27: #{tpu_custom_call.1} parent=23 // pred_region
          %p210 = scmp.lt.s32.totalorder %s25, 1
          %s211 = scalar_select %p210, %s25, 1
          %s212 = smul.addr %s211, 32
          %s213 = smul.addr %s212, 4
          %s214 = scalar_lea.vmem %s0, %s213
        $region28: #{tpu_custom_call.1} parent=23 // pred_fallthru
          _
      $region24: #{tpu_custom_call.1} parent=5 // pred_fallthru
        _
      %p215 = scmp.le.s32.totalorder 1, %s18
      %p216 = scmp.lt.s32.totalorder %s18, 5
      %p217 = pnand %p215, %p216
      %p218 = pneg %p217
      // Predicated region
      $region29: #{tpu_custom_call.1} parent=5 // pred_check
        _
      $region30: #{tpu_custom_call.1} parent=5 // pred_check_branch
        %220 = sbr.rel (%p217) target = $region32
      $region31: #{tpu_custom_call.1} parent=5 // pred_region
        %s221 = ssub.s32 %s18, 1
        %p222 = scmp.lt.s32.totalorder %s27, 1
        %s223 = scalar_select %p222, %s27, 1
        %s224 = smul.addr %s223, 32
        %s225 = smul.addr %s224, 4
        %s226 = scalar_lea.vmem %s0, %s225
        %p227 = pneg %p56
        %p228 = pneg %p53
        %p229 = pneg %p77
        %p230 = pneg %p74
        %p231 = pneg %p98
        %p232 = pneg %p95
        %p233 = pneg %p126
        %p234 = pneg %p123
        %s235 = smul.u32 8, %s28
        %p236 = scmp.lt.s32.totalorder %s27, 1
        %s237 = scalar_select %p236, %s27, 1
        %p238 = scmp.lt.s32.totalorder %s235, 15
        %s239 = scalar_select %p238, %s235, 15
        %s240 = smul.addr %s239, 2
        %s241 = smul.addr %s237, 32
        %s242 = sadd.s32 %s240, %s241
        %s243 = smul.addr %s242, 8
        %s244 = scalar_lea.vmem %s3, %s243
        %p245 = pneg %p154
        %p246 = pneg %p151
        %s247 = sand.u32 %s141, 1
        %s248 = scalar_lea.sflag [#allocation5], %s247
        %s249 = sand.u32 %s141, 1
        %s250 = smul.addr %s249, 8
        %s251 = scalar_lea.vmem [#allocation4], %s250
        %p252 = pneg %p182
        %p253 = pneg %p179
        %s254 = sand.u32 %s169, 1
        %s255 = scalar_lea.sflag [#allocation7], %s254
        %s256 = sand.u32 %s169, 1
        %s257 = smul.addr %s256, 8
        %s258 = scalar_lea.vmem [#allocation6], %s257
        %p259 = scmp.lt.s32.totalorder %s27, 1
        %s260 = scalar_select %p259, %s27, 1
        %s261 = smul.addr %s260, 32
        %s262 = smul.addr %s261, 4
        %s263 = scalar_lea.vmem %s0, %s262
        %s264 = smul.u32 8, %s28
        %p265 = scmp.lt.s32.totalorder %s27, 1
        %s266 = scalar_select %p265, %s27, 1
        %p267 = scmp.lt.s32.totalorder %s264, 15
        %s268 = scalar_select %p267, %s264, 15
        %s269 = smul.addr %s268, 2
        %s270 = smul.addr %s266, 32
        %s271 = sadd.s32 %s269, %s270
        %s272 = smul.addr %s271, 8
        %s273 = scalar_lea.vmem %s3, %s272
        %s274 = smul.u32 8, %s28
        %p276 = scmp.eq.s32.totalorder %s28, 0
        // Predicated region
        $region33: #{tpu_custom_call.1} parent=31 // pred_check
          %p277 = pneg %p276
        $region34: #{tpu_custom_call.1} parent=31 // pred_check_branch
          %279 = sbr.rel (%p277) target = $region36
        $region35: #{tpu_custom_call.1} parent=31 // pred_region
          %vm280 = vcmask 27648
          %281 = vst.msk [vmem:[#allocation2] sm:$0xf] %vm280, 0
          %282 = vst.msk [vmem:[#allocation2 + $0x4] sm:$0xf] %vm280, 0
          %vm283 = vcmask 24576
          %284 = vst.msk [vmem:[#allocation2 + $0x8] sm:$0x1] %vm283, 0
          %285 = vst.msk [vmem:[#allocation2 + $0xc] sm:$0xf] %vm280, 0
          %286 = vst.msk [vmem:[#allocation2 + $0x10] sm:$0xf] %vm280, 0
          %287 = vst.msk [vmem:[#allocation2 + $0x14] sm:$0x1] %vm283, 0
          %288 = vst.msk [vmem:[#allocation2 + $0x18] sm:$0xf] %vm280, 0
          %289 = vst.msk [vmem:[#allocation2 + $0x1c] sm:$0xf] %vm280, 0
          %290 = vst.msk [vmem:[#allocation2 + $0x20] sm:$0x1] %vm283, 0
          %291 = vst.msk [vmem:[#allocation2 + $0x24] sm:$0xf] %vm280, 0
          %292 = vst.msk [vmem:[#allocation2 + $0x28] sm:$0xf] %vm280, 0
          %293 = vst.msk [vmem:[#allocation2 + $0x2c] sm:$0x1] %vm283, 0
          %294 = vst.msk [vmem:[#allocation2 + $0x30] sm:$0xf] %vm280, 0
          %295 = vst.msk [vmem:[#allocation2 + $0x34] sm:$0xf] %vm280, 0
          %296 = vst.msk [vmem:[#allocation2 + $0x38] sm:$0x1] %vm283, 0
          %297 = vst.msk [vmem:[#allocation2 + $0x3c] sm:$0xf] %vm280, 0
          %298 = vst.msk [vmem:[#allocation2 + $0x40] sm:$0xf] %vm280, 0
          %299 = vst.msk [vmem:[#allocation2 + $0x44] sm:$0x1] %vm283, 0
          %300 = vst.msk [vmem:[#allocation2 + $0x48] sm:$0xf] %vm280, 0
          %301 = vst.msk [vmem:[#allocation2 + $0x4c] sm:$0xf] %vm280, 0
          %302 = vst.msk [vmem:[#allocation2 + $0x50] sm:$0x1] %vm283, 0
          %303 = vst.msk [vmem:[#allocation2 + $0x54] sm:$0xf] %vm280, 0
          %304 = vst.msk [vmem:[#allocation2 + $0x58] sm:$0xf] %vm280, 0
          %305 = vst.msk [vmem:[#allocation2 + $0x5c] sm:$0x1] %vm283, 0
          %306 = vst.msk [vmem:[#allocation2 + $0x60] sm:$0xf] %vm280, 0
          %307 = vst.msk [vmem:[#allocation2 + $0x64] sm:$0xf] %vm280, 0
          %308 = vst.msk [vmem:[#allocation2 + $0x68] sm:$0x1] %vm283, 0
          %309 = vst.msk [vmem:[#allocation2 + $0x6c] sm:$0xf] %vm280, 0
          %310 = vst.msk [vmem:[#allocation2 + $0x70] sm:$0xf] %vm280, 0
          %311 = vst.msk [vmem:[#allocation2 + $0x74] sm:$0x1] %vm283, 0
          %312 = vst.msk [vmem:[#allocation2 + $0x78] sm:$0xf] %vm280, 0
          %313 = vst.msk [vmem:[#allocation2 + $0x7c] sm:$0xf] %vm280, 0
          %314 = vst.msk [vmem:[#allocation2 + $0x80] sm:$0x1] %vm283, 0
          %315 = vst.msk [vmem:[#allocation2 + $0x84] sm:$0xf] %vm280, 0
          %316 = vst.msk [vmem:[#allocation2 + $0x88] sm:$0xf] %vm280, 0
          %317 = vst.msk [vmem:[#allocation2 + $0x8c] sm:$0x1] %vm283, 0
          %318 = vst.msk [vmem:[#allocation2 + $0x90] sm:$0xf] %vm280, 0
          %319 = vst.msk [vmem:[#allocation2 + $0x94] sm:$0xf] %vm280, 0
          %320 = vst.msk [vmem:[#allocation2 + $0x98] sm:$0x1] %vm283, 0
          %321 = vst.msk [vmem:[#allocation2 + $0x9c] sm:$0xf] %vm280, 0
          %322 = vst.msk [vmem:[#allocation2 + $0xa0] sm:$0xf] %vm280, 0
          %323 = vst.msk [vmem:[#allocation2 + $0xa4] sm:$0x1] %vm283, 0
          %324 = vst.msk [vmem:[#allocation2 + $0xa8] sm:$0xf] %vm280, 0
          %325 = vst.msk [vmem:[#allocation2 + $0xac] sm:$0xf] %vm280, 0
          %326 = vst.msk [vmem:[#allocation2 + $0xb0] sm:$0x1] %vm283, 0
          %327 = vst.msk [vmem:[#allocation2 + $0xb4] sm:$0xf] %vm280, 0
          %328 = vst.msk [vmem:[#allocation2 + $0xb8] sm:$0xf] %vm280, 0
          %329 = vst.msk [vmem:[#allocation2 + $0xbc] sm:$0x1] %vm283, 0
          %330 = vst.msk [vmem:[#allocation2 + $0xc0] sm:$0xf] %vm280, 0
          %331 = vst.msk [vmem:[#allocation2 + $0xc4] sm:$0xf] %vm280, 0
          %332 = vst.msk [vmem:[#allocation2 + $0xc8] sm:$0x1] %vm283, 0
          %333 = vst.msk [vmem:[#allocation2 + $0xcc] sm:$0xf] %vm280, 0
          %334 = vst.msk [vmem:[#allocation2 + $0xd0] sm:$0xf] %vm280, 0
          %335 = vst.msk [vmem:[#allocation2 + $0xd4] sm:$0x1] %vm283, 0
          %v336 = vld [vmem:[%s263] sm:$0xf]
          %v337 = vld [vmem:[%s263 + $0x4] sm:$0xf]
          %v338 = vld [vmem:[%s263 + $0x8] sm:$0xf]
          %v339 = vld [vmem:[%s263 + $0xc] sm:$0xf]
          %v340 = vld [vmem:[%s263 + $0x10] sm:$0xf]
          %v341 = vld [vmem:[%s263 + $0x14] sm:$0xf]
          %v342 = vld [vmem:[%s263 + $0x18] sm:$0xf]
          %v343 = vld [vmem:[%s263 + $0x1c] sm:$0xf]
          %v344 = vld [vmem:[%s263 + $0x20] sm:$0xf]
          %v345 = vld [vmem:[%s263 + $0x24] sm:$0xf]
          %v346 = vld [vmem:[%s263 + $0x28] sm:$0xf]
          %v347 = vld [vmem:[%s263 + $0x2c] sm:$0xf]
          %v348 = vld [vmem:[%s263 + $0x30] sm:$0xf]
          %v349 = vld [vmem:[%s263 + $0x34] sm:$0xf]
          %v350 = vld [vmem:[%s263 + $0x38] sm:$0xf]
          %v351 = vld [vmem:[%s263 + $0x3c] sm:$0xf]
          %v352 = vld [vmem:[%s263 + $0x40] sm:$0xf]
          %v353 = vld [vmem:[%s263 + $0x44] sm:$0xf]
          %v354 = vld [vmem:[%s263 + $0x48] sm:$0xf]
          %v355 = vld [vmem:[%s263 + $0x4c] sm:$0xf]
          %v356 = vld [vmem:[%s263 + $0x50] sm:$0xf]
          %v357 = vld [vmem:[%s263 + $0x54] sm:$0xf]
          %v358 = vld [vmem:[%s263 + $0x58] sm:$0xf]
          %v359 = vld [vmem:[%s263 + $0x5c] sm:$0xf]
          %v360 = vld [vmem:[%s263 + $0x60] sm:$0xf]
          %v361 = vld [vmem:[%s263 + $0x64] sm:$0xf]
          %v362 = vld [vmem:[%s263 + $0x68] sm:$0xf]
          %v363 = vld [vmem:[%s263 + $0x6c] sm:$0xf]
          %v364 = vld [vmem:[%s263 + $0x70] sm:$0xf]
          %v365 = vld [vmem:[%s263 + $0x74] sm:$0xf]
          %v366 = vld [vmem:[%s263 + $0x78] sm:$0xf]
          %v367 = vld [vmem:[%s263 + $0x7c] sm:$0xf]
          %vm368 = vsmask.f32 256
          %vm369 = vsmask.f32 4368
          %vm370 = vmor %vm368, %vm369
          %v372 = vshrl.u32 %v336, 16
          %v374 = vrot.slane %v372, 7
          %v375 = vshll.u32 %v336, 16
          %v377 = vor.u32 %v374, %v375
          %v378 = vrot.slane %v374, 4
          %v380 = vshrl.u32 %v337, 16
          %v382 = vrot.slane %v380, 7
          %v383 = vshll.u32 %v337, 16
          %v385 = vor.u32 %v382, %v383
          %v386 = vsel %vm370, %v378, %v385
          %v387 = vrot.slane %v382, 4
          %v389 = vshrl.u32 %v338, 16
          %v391 = vrot.slane %v389, 7
          %v392 = vshll.u32 %v338, 16
          %v394 = vor.u32 %v391, %v392
          %v395 = vrot.slane %v391, 4
          %v397 = vshrl.u32 %v339, 16
          %v399 = vrot.slane %v397, 7
          %v400 = vshll.u32 %v339, 16
          %v402 = vor.u32 %v399, %v400
          %v403 = vsel %vm370, %v395, %v402
          %v404 = vrot.slane %v399, 4
          %v406 = vshrl.u32 %v340, 16
          %v408 = vrot.slane %v406, 7
          %v409 = vshll.u32 %v340, 16
          %v411 = vor.u32 %v408, %v409
          %v412 = vrot.slane %v408, 4
          %v414 = vshrl.u32 %v341, 16
          %v416 = vrot.slane %v414, 7
          %v417 = vshll.u32 %v341, 16
          %v419 = vor.u32 %v416, %v417
          %v420 = vsel %vm370, %v412, %v419
          %v421 = vrot.slane %v416, 4
          %v423 = vshrl.u32 %v342, 16
          %v425 = vrot.slane %v423, 7
          %v426 = vshll.u32 %v342, 16
          %v428 = vor.u32 %v425, %v426
          %v429 = vrot.slane %v425, 4
          %v431 = vshrl.u32 %v343, 16
          %v433 = vrot.slane %v431, 7
          %v434 = vshll.u32 %v343, 16
          %v436 = vor.u32 %v433, %v434
          %v437 = vsel %vm370, %v429, %v436
          %v438 = vrot.slane %v433, 4
          %v440 = vshrl.u32 %v344, 16
          %v442 = vrot.slane %v440, 7
          %v443 = vshll.u32 %v344, 16
          %v445 = vor.u32 %v442, %v443
          %v446 = vrot.slane %v442, 4
          %v448 = vshrl.u32 %v345, 16
          %v450 = vrot.slane %v448, 7
          %v451 = vshll.u32 %v345, 16
          %v453 = vor.u32 %v450, %v451
          %v454 = vsel %vm370, %v446, %v453
          %v455 = vrot.slane %v450, 4
          %v457 = vshrl.u32 %v346, 16
          %v459 = vrot.slane %v457, 7
          %v460 = vshll.u32 %v346, 16
          %v462 = vor.u32 %v459, %v460
          %v463 = vrot.slane %v459, 4
          %v465 = vshrl.u32 %v347, 16
          %v467 = vrot.slane %v465, 7
          %v468 = vshll.u32 %v347, 16
          %v470 = vor.u32 %v467, %v468
          %v471 = vsel %vm370, %v463, %v470
          %v472 = vrot.slane %v467, 4
          %v474 = vshrl.u32 %v348, 16
          %v476 = vrot.slane %v474, 7
          %v477 = vshll.u32 %v348, 16
          %v479 = vor.u32 %v476, %v477
          %v480 = vrot.slane %v476, 4
          %v482 = vshrl.u32 %v349, 16
          %v484 = vrot.slane %v482, 7
          %v485 = vshll.u32 %v349, 16
          %v487 = vor.u32 %v484, %v485
          %v488 = vsel %vm370, %v480, %v487
          %v489 = vrot.slane %v484, 4
          %v491 = vshrl.u32 %v350, 16
          %v493 = vrot.slane %v491, 7
          %v494 = vshll.u32 %v350, 16
          %v496 = vor.u32 %v493, %v494
          %v497 = vrot.slane %v493, 4
          %v499 = vshrl.u32 %v351, 16
          %v501 = vrot.slane %v499, 7
          %v502 = vshll.u32 %v351, 16
          %v504 = vor.u32 %v501, %v502
          %v505 = vsel %vm370, %v497, %v504
          %v506 = vrot.slane %v501, 4
          %v508 = vshrl.u32 %v352, 16
          %v510 = vrot.slane %v508, 7
          %v511 = vshll.u32 %v352, 16
          %v513 = vor.u32 %v510, %v511
          %v514 = vrot.slane %v510, 4
          %v516 = vshrl.u32 %v353, 16
          %v518 = vrot.slane %v516, 7
          %v519 = vshll.u32 %v353, 16
          %v521 = vor.u32 %v518, %v519
          %v522 = vsel %vm370, %v514, %v521
          %v523 = vrot.slane %v518, 4
          %v525 = vshrl.u32 %v354, 16
          %v527 = vrot.slane %v525, 7
          %v528 = vshll.u32 %v354, 16
          %v530 = vor.u32 %v527, %v528
          %v531 = vrot.slane %v527, 4
          %v533 = vshrl.u32 %v355, 16
          %v535 = vrot.slane %v533, 7
          %v536 = vshll.u32 %v355, 16
          %v538 = vor.u32 %v535, %v536
          %v539 = vsel %vm370, %v531, %v538
          %v540 = vrot.slane %v535, 4
          %v542 = vshrl.u32 %v356, 16
          %v544 = vrot.slane %v542, 7
          %v545 = vshll.u32 %v356, 16
          %v547 = vor.u32 %v544, %v545
          %v548 = vrot.slane %v544, 4
          %v550 = vshrl.u32 %v357, 16
          %v552 = vrot.slane %v550, 7
          %v553 = vshll.u32 %v357, 16
          %v555 = vor.u32 %v552, %v553
          %v556 = vsel %vm370, %v548, %v555
          %v557 = vrot.slane %v552, 4
          %v559 = vshrl.u32 %v358, 16
          %v561 = vrot.slane %v559, 7
          %v562 = vshll.u32 %v358, 16
          %v564 = vor.u32 %v561, %v562
          %v565 = vrot.slane %v561, 4
          %v567 = vshrl.u32 %v359, 16
          %v569 = vrot.slane %v567, 7
          %v570 = vshll.u32 %v359, 16
          %v572 = vor.u32 %v569, %v570
          %v573 = vsel %vm370, %v565, %v572
          %v574 = vrot.slane %v569, 4
          %v576 = vshrl.u32 %v360, 16
          %v578 = vrot.slane %v576, 7
          %v579 = vshll.u32 %v360, 16
          %v581 = vor.u32 %v578, %v579
          %v582 = vrot.slane %v578, 4
          %v584 = vshrl.u32 %v361, 16
          %v586 = vrot.slane %v584, 7
          %v587 = vshll.u32 %v361, 16
          %v589 = vor.u32 %v586, %v587
          %v590 = vsel %vm370, %v582, %v589
          %v591 = vrot.slane %v586, 4
          %v593 = vshrl.u32 %v362, 16
          %v595 = vrot.slane %v593, 7
          %v596 = vshll.u32 %v362, 16
          %v598 = vor.u32 %v595, %v596
          %v599 = vrot.slane %v595, 4
          %v601 = vshrl.u32 %v363, 16
          %v603 = vrot.slane %v601, 7
          %v604 = vshll.u32 %v363, 16
          %v606 = vor.u32 %v603, %v604
          %v607 = vsel %vm370, %v599, %v606
          %v608 = vrot.slane %v603, 4
          %v610 = vshrl.u32 %v364, 16
          %v612 = vrot.slane %v610, 7
          %v613 = vshll.u32 %v364, 16
          %v615 = vor.u32 %v612, %v613
          %v616 = vrot.slane %v612, 4
          %v618 = vshrl.u32 %v365, 16
          %v620 = vrot.slane %v618, 7
          %v621 = vshll.u32 %v365, 16
          %v623 = vor.u32 %v620, %v621
          %v624 = vsel %vm370, %v616, %v623
          %v625 = vrot.slane %v620, 4
          %v627 = vshrl.u32 %v366, 16
          %v629 = vrot.slane %v627, 7
          %v630 = vshll.u32 %v366, 16
          %v632 = vor.u32 %v629, %v630
          %v633 = vrot.slane %v629, 4
          %v635 = vshrl.u32 %v367, 16
          %v637 = vrot.slane %v635, 7
          %v638 = vshll.u32 %v367, 16
          %v640 = vor.u32 %v637, %v638
          %v641 = vsel %vm370, %v633, %v640
          %v642 = vrot.slane %v637, 4
          %s691 = scalar_lea.vmem [#allocation2], 12
          %vm692 = vcmask 27648
          %vm693 = vsmask.f32 7938
          %vm694 = vmand %vm692, %vm693
          %v695 = vld [vmem:[%s691] sm:$0xf]
          %v696 = vsel %vm694, %v377, %v695
          %697 = vst [vmem:[%s691] sm:$0xf] %v696
          %698 = vst.msk [vmem:[%s691 + $0x4] sm:$0xf] %vm280, %v386
          %vm699 = vcmask 24576
          %vm700 = vmand %vm699, %vm368
          %v701 = vld [vmem:[%s691 + $0x8] sm:$0x1]
          %v702 = vsel %vm700, %v387, %v701
          %703 = vst [vmem:[%s691 + $0x8] sm:$0x1] %v702
          %v704 = vld [vmem:[%s691 + $0xc] sm:$0xf]
          %v705 = vsel %vm694, %v394, %v704
          %706 = vst [vmem:[%s691 + $0xc] sm:$0xf] %v705
          %707 = vst.msk [vmem:[%s691 + $0x10] sm:$0xf] %vm280, %v403
          %v708 = vld [vmem:[%s691 + $0x14] sm:$0x1]
          %v709 = vsel %vm700, %v404, %v708
          %710 = vst [vmem:[%s691 + $0x14] sm:$0x1] %v709
          %v711 = vld [vmem:[%s691 + $0x18] sm:$0xf]
          %v712 = vsel %vm694, %v411, %v711
          %713 = vst [vmem:[%s691 + $0x18] sm:$0xf] %v712
          %714 = vst.msk [vmem:[%s691 + $0x1c] sm:$0xf] %vm280, %v420
          %v715 = vld [vmem:[%s691 + $0x20] sm:$0x1]
          %v716 = vsel %vm700, %v421, %v715
          %717 = vst [vmem:[%s691 + $0x20] sm:$0x1] %v716
          %v718 = vld [vmem:[%s691 + $0x24] sm:$0xf]
          %v719 = vsel %vm694, %v428, %v718
          %720 = vst [vmem:[%s691 + $0x24] sm:$0xf] %v719
          %721 = vst.msk [vmem:[%s691 + $0x28] sm:$0xf] %vm280, %v437
          %v722 = vld [vmem:[%s691 + $0x2c] sm:$0x1]
          %v723 = vsel %vm700, %v438, %v722
          %724 = vst [vmem:[%s691 + $0x2c] sm:$0x1] %v723
          %v725 = vld [vmem:[%s691 + $0x30] sm:$0xf]
          %v726 = vsel %vm694, %v445, %v725
          %727 = vst [vmem:[%s691 + $0x30] sm:$0xf] %v726
          %728 = vst.msk [vmem:[%s691 + $0x34] sm:$0xf] %vm280, %v454
          %v729 = vld [vmem:[%s691 + $0x38] sm:$0x1]
          %v730 = vsel %vm700, %v455, %v729
          %731 = vst [vmem:[%s691 + $0x38] sm:$0x1] %v730
          %v732 = vld [vmem:[%s691 + $0x3c] sm:$0xf]
          %v733 = vsel %vm694, %v462, %v732
          %734 = vst [vmem:[%s691 + $0x3c] sm:$0xf] %v733
          %735 = vst.msk [vmem:[%s691 + $0x40] sm:$0xf] %vm280, %v471
          %v736 = vld [vmem:[%s691 + $0x44] sm:$0x1]
          %v737 = vsel %vm700, %v472, %v736
          %738 = vst [vmem:[%s691 + $0x44] sm:$0x1] %v737
          %v739 = vld [vmem:[%s691 + $0x48] sm:$0xf]
          %v740 = vsel %vm694, %v479, %v739
          %741 = vst [vmem:[%s691 + $0x48] sm:$0xf] %v740
          %742 = vst.msk [vmem:[%s691 + $0x4c] sm:$0xf] %vm280, %v488
          %v743 = vld [vmem:[%s691 + $0x50] sm:$0x1]
          %v744 = vsel %vm700, %v489, %v743
          %745 = vst [vmem:[%s691 + $0x50] sm:$0x1] %v744
          %v746 = vld [vmem:[%s691 + $0x54] sm:$0xf]
          %v747 = vsel %vm694, %v496, %v746
          %748 = vst [vmem:[%s691 + $0x54] sm:$0xf] %v747
          %749 = vst.msk [vmem:[%s691 + $0x58] sm:$0xf] %vm280, %v505
          %v750 = vld [vmem:[%s691 + $0x5c] sm:$0x1]
          %v751 = vsel %vm700, %v506, %v750
          %752 = vst [vmem:[%s691 + $0x5c] sm:$0x1] %v751
          %v753 = vld [vmem:[%s691 + $0x60] sm:$0xf]
          %v754 = vsel %vm694, %v513, %v753
          %755 = vst [vmem:[%s691 + $0x60] sm:$0xf] %v754
          %756 = vst.msk [vmem:[%s691 + $0x64] sm:$0xf] %vm280, %v522
          %v757 = vld [vmem:[%s691 + $0x68] sm:$0x1]
          %v758 = vsel %vm700, %v523, %v757
          %759 = vst [vmem:[%s691 + $0x68] sm:$0x1] %v758
          %v760 = vld [vmem:[%s691 + $0x6c] sm:$0xf]
          %v761 = vsel %vm694, %v530, %v760
          %762 = vst [vmem:[%s691 + $0x6c] sm:$0xf] %v761
          %763 = vst.msk [vmem:[%s691 + $0x70] sm:$0xf] %vm280, %v539
          %v764 = vld [vmem:[%s691 + $0x74] sm:$0x1]
          %v765 = vsel %vm700, %v540, %v764
          %766 = vst [vmem:[%s691 + $0x74] sm:$0x1] %v765
          %v767 = vld [vmem:[%s691 + $0x78] sm:$0xf]
          %v768 = vsel %vm694, %v547, %v767
          %769 = vst [vmem:[%s691 + $0x78] sm:$0xf] %v768
          %770 = vst.msk [vmem:[%s691 + $0x7c] sm:$0xf] %vm280, %v556
          %v771 = vld [vmem:[%s691 + $0x80] sm:$0x1]
          %v772 = vsel %vm700, %v557, %v771
          %773 = vst [vmem:[%s691 + $0x80] sm:$0x1] %v772
          %v774 = vld [vmem:[%s691 + $0x84] sm:$0xf]
          %v775 = vsel %vm694, %v564, %v774
          %776 = vst [vmem:[%s691 + $0x84] sm:$0xf] %v775
          %777 = vst.msk [vmem:[%s691 + $0x88] sm:$0xf] %vm280, %v573
          %v778 = vld [vmem:[%s691 + $0x8c] sm:$0x1]
          %v779 = vsel %vm700, %v574, %v778
          %780 = vst [vmem:[%s691 + $0x8c] sm:$0x1] %v779
          %v781 = vld [vmem:[%s691 + $0x90] sm:$0xf]
          %v782 = vsel %vm694, %v581, %v781
          %783 = vst [vmem:[%s691 + $0x90] sm:$0xf] %v782
          %784 = vst.msk [vmem:[%s691 + $0x94] sm:$0xf] %vm280, %v590
          %v785 = vld [vmem:[%s691 + $0x98] sm:$0x1]
          %v786 = vsel %vm700, %v591, %v785
          %787 = vst [vmem:[%s691 + $0x98] sm:$0x1] %v786
          %v788 = vld [vmem:[%s691 + $0x9c] sm:$0xf]
          %v789 = vsel %vm694, %v598, %v788
          %790 = vst [vmem:[%s691 + $0x9c] sm:$0xf] %v789
          %791 = vst.msk [vmem:[%s691 + $0xa0] sm:$0xf] %vm280, %v607
          %v792 = vld [vmem:[%s691 + $0xa4] sm:$0x1]
          %v793 = vsel %vm700, %v608, %v792
          %794 = vst [vmem:[%s691 + $0xa4] sm:$0x1] %v793
          %v795 = vld [vmem:[%s691 + $0xa8] sm:$0xf]
          %v796 = vsel %vm694, %v615, %v795
          %797 = vst [vmem:[%s691 + $0xa8] sm:$0xf] %v796
          %798 = vst.msk [vmem:[%s691 + $0xac] sm:$0xf] %vm280, %v624
          %v799 = vld [vmem:[%s691 + $0xb0] sm:$0x1]
          %v800 = vsel %vm700, %v625, %v799
          %801 = vst [vmem:[%s691 + $0xb0] sm:$0x1] %v800
          %v802 = vld [vmem:[%s691 + $0xb4] sm:$0xf]
          %v803 = vsel %vm694, %v632, %v802
          %804 = vst [vmem:[%s691 + $0xb4] sm:$0xf] %v803
          %805 = vst.msk [vmem:[%s691 + $0xb8] sm:$0xf] %vm280, %v641
          %v806 = vld [vmem:[%s691 + $0xbc] sm:$0x1]
          %v807 = vsel %vm700, %v642, %v806
          %808 = vst [vmem:[%s691 + $0xbc] sm:$0x1] %v807
        $region36: #{tpu_custom_call.1} parent=31 // pred_fallthru
          _
        %s809 = smul.u32 %s28, 8
        %s810 = smul.u32 %s809, 3
        %s811 = smul.addr %s810, 4
        %s812 = scalar_lea.vmem [#allocation2], %s811
        %v813 = vld [vmem:[%s812] sm:$0xf]
        %v814 = vld [vmem:[%s812 + $0x4] sm:$0xf]
        %v815 = vld [vmem:[%s812 + $0xc] sm:$0xf]
        %v816 = vld [vmem:[%s812 + $0x10] sm:$0xf]
        %v817 = vld [vmem:[%s812 + $0x18] sm:$0xf]
        %v818 = vld [vmem:[%s812 + $0x1c] sm:$0xf]
        %v819 = vld [vmem:[%s812 + $0x24] sm:$0xf]
        %v820 = vld [vmem:[%s812 + $0x28] sm:$0xf]
        %v821 = vld [vmem:[%s812 + $0x30] sm:$0xf]
        %v822 = vld [vmem:[%s812 + $0x34] sm:$0xf]
        %v823 = vld [vmem:[%s812 + $0x3c] sm:$0xf]
        %v824 = vld [vmem:[%s812 + $0x40] sm:$0xf]
        %v825 = vld [vmem:[%s812 + $0x48] sm:$0xf]
        %v826 = vld [vmem:[%s812 + $0x4c] sm:$0xf]
        %v827 = vld [vmem:[%s812 + $0x54] sm:$0xf]
        %v828 = vld [vmem:[%s812 + $0x58] sm:$0xf]
        %v829 = vld [vmem:[%s1] sm:$0x3]
        %v846 = vunpack.c.l.b16 %v813
        %v847 = vunpack.c.l.b16 %v814
        %v848 = vunpack.c.l.b16 %v815
        %v849 = vunpack.c.l.b16 %v816
        %v850 = vunpack.c.l.b16 %v817
        %v851 = vunpack.c.l.b16 %v818
        %v852 = vunpack.c.l.b16 %v819
        %v853 = vunpack.c.l.b16 %v820
        %v854 = vunpack.c.l.b16 %v821
        %v855 = vunpack.c.l.b16 %v822
        %v856 = vunpack.c.l.b16 %v823
        %v857 = vunpack.c.l.b16 %v824
        %v858 = vunpack.c.l.b16 %v825
        %v859 = vunpack.c.l.b16 %v826
        %v860 = vunpack.c.l.b16 %v827
        %v861 = vunpack.c.l.b16 %v828
        %v862 = vpack.c.b16 %v847, %v846
        %v863 = vpack.c.b16 %v849, %v848
        %v864 = vpack.c.b16 %v851, %v850
        %v865 = vpack.c.b16 %v853, %v852
        %v866 = vpack.c.b16 %v855, %v854
        %v867 = vpack.c.b16 %v857, %v856
        %v868 = vpack.c.b16 %v859, %v858
        %v869 = vpack.c.b16 %v861, %v860
        %vm870 = vcmask 31744
        %v872 = vsel %vm870, %v862, 0
        %v875 = vsel %vm870, %v863, 0
        %v878 = vsel %vm870, %v864, 0
        %v881 = vsel %vm870, %v865, 0
        %v884 = vsel %vm870, %v866, 0
        %v887 = vsel %vm870, %v867, 0
        %v890 = vsel %vm870, %v868, 0
        %v893 = vsel %vm870, %v869, 0
        %vm895 = vcmask 1041408
        %v897 = vsel %vm895, %v829, 0
        %899 = vmatprep.subr.bf16.mxu0 0
        %900 = vmatpush1.bf16.msra.mxu0 %v897
        %901 = vmatprep.subr.bf16.mxu0 0
        %902 = vmatpush1.bf16.msra.mxu0 0
        %903 = vmatprep.subr.bf16.mxu0 0
        %904 = vmatpush1.bf16.msra.mxu0 0
        %905 = vmatprep.subr.bf16.mxu0 0
        %906 = vmatpush1.bf16.msra.mxu0 0
        %907 = vmatprep.subr.bf16.mxu0 0
        %908 = vmatpush1.bf16.msra.mxu0 0
        %909 = vmatprep.subr.bf16.mxu0 0
        %910 = vmatpush1.bf16.msra.mxu0 0
        %911 = vmatprep.subr.bf16.mxu0 0
        %912 = vmatpush1.bf16.msra.mxu0 0
        %913 = vmatprep.subr.bf16.mxu0 0
        %914 = vmatpush1.bf16.msra.mxu0 0
        %915 = vmatprep.subr.bf16.mxu0 0
        %916 = vmatpush1.bf16.msra.mxu0 0
        %917 = vmatprep.subr.bf16.mxu0 0
        %918 = vmatpush1.bf16.msra.mxu0 0
        %919 = vmatprep.subr.bf16.mxu0 0
        %920 = vmatpush1.bf16.msra.mxu0 0
        %921 = vmatprep.subr.bf16.mxu0 0
        %922 = vmatpush1.bf16.msra.mxu0 0
        %923 = vmatprep.subr.bf16.mxu0 0
        %924 = vmatpush1.bf16.msra.mxu0 0
        %925 = vmatprep.subr.bf16.mxu0 0
        %926 = vmatpush1.bf16.msra.mxu0 0
        %927 = vmatprep.subr.bf16.mxu0 0
        %928 = vmatpush1.bf16.msra.mxu0 0
        %929 = vmatprep.subr.bf16.mxu0 0
        %930 = vmatpush1.bf16.msra.mxu0 0
        %931 = vmatprep.mubr.bf16.mxu0 0
        %932 = vmatmul.mubr.bf16.gmra.mrb[0].mxu0 %v872
        %v933 = vpop.f32.mrb[0].mxu0
        %v934 = vadd.f32 0.0, %v933
        %v935 = vpop.f32.mrb[0].mxu0
        %v936 = vpop.f32.mrb[0].mxu0
        %v937 = vadd.f32 0.0, %v936
        %v938 = vpop.f32.mrb[0].mxu0
        %939 = vmatprep.mubr.bf16.mxu0 0
        %940 = vmatmul.mubr.bf16.gmra.mrb[0].mxu0 %v875
        %v941 = vpop.f32.mrb[0].mxu0
        %v942 = vadd.f32 0.0, %v941
        %v943 = vpop.f32.mrb[0].mxu0
        %v944 = vpop.f32.mrb[0].mxu0
        %v945 = vadd.f32 0.0, %v944
        %v946 = vpop.f32.mrb[0].mxu0
        %947 = vmatprep.mubr.bf16.mxu0 0
        %948 = vmatmul.mubr.bf16.gmra.mrb[0].mxu0 %v878
        %v949 = vpop.f32.mrb[0].mxu0
        %v950 = vadd.f32 0.0, %v949
        %v951 = vpop.f32.mrb[0].mxu0
        %v952 = vpop.f32.mrb[0].mxu0
        %v953 = vadd.f32 0.0, %v952
        %v954 = vpop.f32.mrb[0].mxu0
        %955 = vmatprep.mubr.bf16.mxu0 0
        %956 = vmatmul.mubr.bf16.gmra.mrb[0].mxu0 %v881
        %v957 = vpop.f32.mrb[0].mxu0
        %v958 = vadd.f32 0.0, %v957
        %v959 = vpop.f32.mrb[0].mxu0
        %v960 = vpop.f32.mrb[0].mxu0
        %v961 = vadd.f32 0.0, %v960
        %v962 = vpop.f32.mrb[0].mxu0
        %963 = vmatprep.mubr.bf16.mxu0 0
        %964 = vmatmul.mubr.bf16.gmra.mrb[0].mxu0 %v884
        %v965 = vpop.f32.mrb[0].mxu0
        %v966 = vadd.f32 0.0, %v965
        %v967 = vpop.f32.mrb[0].mxu0
        %v968 = vpop.f32.mrb[0].mxu0
        %v969 = vadd.f32 0.0, %v968
        %v970 = vpop.f32.mrb[0].mxu0
        %971 = vmatprep.mubr.bf16.mxu0 0
        %972 = vmatmul.mubr.bf16.gmra.mrb[0].mxu0 %v887
        %v973 = vpop.f32.mrb[0].mxu0
        %v974 = vadd.f32 0.0, %v973
        %v975 = vpop.f32.mrb[0].mxu0
        %v976 = vpop.f32.mrb[0].mxu0
        %v977 = vadd.f32 0.0, %v976
        %v978 = vpop.f32.mrb[0].mxu0
        %979 = vmatprep.mubr.bf16.mxu0 0
        %980 = vmatmul.mubr.bf16.gmra.mrb[0].mxu0 %v890
        %v981 = vpop.f32.mrb[0].mxu0
        %v982 = vadd.f32 0.0, %v981
        %v983 = vpop.f32.mrb[0].mxu0
        %v984 = vpop.f32.mrb[0].mxu0
        %v985 = vadd.f32 0.0, %v984
        %v986 = vpop.f32.mrb[0].mxu0
        %987 = vmatprep.mubr.bf16.mxu0 0
        %988 = vmatmul.mubr.bf16.gmra.mrb[0].mxu0 %v893
        %v989 = vpop.f32.mrb[0].mxu0
        %v990 = vadd.f32 0.0, %v989
        %v991 = vpop.f32.mrb[0].mxu0
        %v992 = vpop.f32.mrb[0].mxu0
        %v993 = vadd.f32 0.0, %v992
        %v994 = vpop.f32.mrb[0].mxu0
        %995 = vdwg.mxu0
        %vm996 = vcmask 64512
        %997 = vst.msk [vmem:[#allocation3] sm:$0xff] %vm996, %v934
        %998 = vst.msk [vmem:[#allocation3 + $0x8] sm:$0xff] %vm996, %v937
        %999 = vst.msk [vmem:[#allocation3 + $0x10] sm:$0xff] %vm996, %v942
        %1000 = vst.msk [vmem:[#allocation3 + $0x18] sm:$0xff] %vm996, %v945
        %1001 = vst.msk [vmem:[#allocation3 + $0x20] sm:$0xff] %vm996, %v950
        %1002 = vst.msk [vmem:[#allocation3 + $0x28] sm:$0xff] %vm996, %v953
        %1003 = vst.msk [vmem:[#allocation3 + $0x30] sm:$0xff] %vm996, %v958
        %1004 = vst.msk [vmem:[#allocation3 + $0x38] sm:$0xff] %vm996, %v961
        %1005 = vst.msk [vmem:[#allocation3 + $0x40] sm:$0xff] %vm996, %v966
        %1006 = vst.msk [vmem:[#allocation3 + $0x48] sm:$0xff] %vm996, %v969
        %1007 = vst.msk [vmem:[#allocation3 + $0x50] sm:$0xff] %vm996, %v974
        %1008 = vst.msk [vmem:[#allocation3 + $0x58] sm:$0xff] %vm996, %v977
        %1009 = vst.msk [vmem:[#allocation3 + $0x60] sm:$0xff] %vm996, %v982
        %1010 = vst.msk [vmem:[#allocation3 + $0x68] sm:$0xff] %vm996, %v985
        %1011 = vst.msk [vmem:[#allocation3 + $0x70] sm:$0xff] %vm996, %v990
        %1012 = vst.msk [vmem:[#allocation3 + $0x78] sm:$0xff] %vm996, %v993
        %v1013 = vld [vmem:[%s812] sm:$0xf]
        %v1014 = vld [vmem:[%s812 + $0x4] sm:$0xf]
        %v1015 = vld [vmem:[%s812 + $0x8] sm:$0x1]
        %v1016 = vld [vmem:[%s812 + $0xc] sm:$0xf]
        %v1017 = vld [vmem:[%s812 + $0x10] sm:$0xf]
        %v1018 = vld [vmem:[%s812 + $0x14] sm:$0x1]
        %v1019 = vld [vmem:[%s812 + $0x18] sm:$0xf]
        %v1020 = vld [vmem:[%s812 + $0x1c] sm:$0xf]
        %v1021 = vld [vmem:[%s812 + $0x20] sm:$0x1]
        %v1022 = vld [vmem:[%s812 + $0x24] sm:$0xf]
        %v1023 = vld [vmem:[%s812 + $0x28] sm:$0xf]
        %v1024 = vld [vmem:[%s812 + $0x2c] sm:$0x1]
        %v1025 = vld [vmem:[%s812 + $0x30] sm:$0xf]
        %v1026 = vld [vmem:[%s812 + $0x34] sm:$0xf]
        %v1027 = vld [vmem:[%s812 + $0x38] sm:$0x1]
        %v1028 = vld [vmem:[%s812 + $0x3c] sm:$0xf]
        %v1029 = vld [vmem:[%s812 + $0x40] sm:$0xf]
        %v1030 = vld [vmem:[%s812 + $0x44] sm:$0x1]
        %v1031 = vld [vmem:[%s812 + $0x48] sm:$0xf]
        %v1032 = vld [vmem:[%s812 + $0x4c] sm:$0xf]
        %v1033 = vld [vmem:[%s812 + $0x50] sm:$0x1]
        %v1034 = vld [vmem:[%s812 + $0x54] sm:$0xf]
        %v1035 = vld [vmem:[%s812 + $0x58] sm:$0xf]
        %v1036 = vld [vmem:[%s812 + $0x5c] sm:$0x1]
        %vm1037 = vsmask.f32 3328
        %vm1038 = vsmask.f32 7440
        %vm1039 = vmor %vm1037, %vm1038
        %v1041 = vshrl.u32 %v1013, 16
        %v1043 = vrot.slane %v1041, 4
        %v1044 = vshll.u32 %v1013, 16
        %v1046 = vrot.slane %v1044, 5
        %v1047 = vor.u32 %v1043, %v1046
        %v1048 = vrot.slane %v1047, 4
        %v1050 = vshll.u32 %v1014, 16
        %v1052 = vrot.slane %v1050, 5
        %v1053 = vsel %vm1039, %v1048, %v1052
        %v1054 = vshrl.u32 %v1014, 16
        %v1056 = vrot.slane %v1054, 4
        %v1057 = vor.u32 %v1056, %v1052
        %v1058 = vrot.slane %v1057, 4
        %v1060 = vshll.u32 %v1015, 16
        %v1062 = vrot.slane %v1060, 5
        %v1063 = vsel %vm1039, %v1058, %v1062
        %v1065 = vshrl.u32 %v1016, 16
        %v1067 = vrot.slane %v1065, 4
        %v1068 = vshll.u32 %v1016, 16
        %v1070 = vrot.slane %v1068, 5
        %v1071 = vor.u32 %v1067, %v1070
        %v1072 = vrot.slane %v1071, 4
        %v1074 = vshll.u32 %v1017, 16
        %v1076 = vrot.slane %v1074, 5
        %v1077 = vsel %vm1039, %v1072, %v1076
        %v1078 = vshrl.u32 %v1017, 16
        %v1080 = vrot.slane %v1078, 4
        %v1081 = vor.u32 %v1080, %v1076
        %v1082 = vrot.slane %v1081, 4
        %v1084 = vshll.u32 %v1018, 16
        %v1086 = vrot.slane %v1084, 5
        %v1087 = vsel %vm1039, %v1082, %v1086
        %v1089 = vshrl.u32 %v1019, 16
        %v1091 = vrot.slane %v1089, 4
        %v1092 = vshll.u32 %v1019, 16
        %v1094 = vrot.slane %v1092, 5
        %v1095 = vor.u32 %v1091, %v1094
        %v1096 = vrot.slane %v1095, 4
        %v1098 = vshll.u32 %v1020, 16
        %v1100 = vrot.slane %v1098, 5
        %v1101 = vsel %vm1039, %v1096, %v1100
        %v1102 = vshrl.u32 %v1020, 16
        %v1104 = vrot.slane %v1102, 4
        %v1105 = vor.u32 %v1104, %v1100
        %v1106 = vrot.slane %v1105, 4
        %v1108 = vshll.u32 %v1021, 16
        %v1110 = vrot.slane %v1108, 5
        %v1111 = vsel %vm1039, %v1106, %v1110
        %v1113 = vshrl.u32 %v1022, 16
        %v1115 = vrot.slane %v1113, 4
        %v1116 = vshll.u32 %v1022, 16
        %v1118 = vrot.slane %v1116, 5
        %v1119 = vor.u32 %v1115, %v1118
        %v1120 = vrot.slane %v1119, 4
        %v1122 = vshll.u32 %v1023, 16
        %v1124 = vrot.slane %v1122, 5
        %v1125 = vsel %vm1039, %v1120, %v1124
        %v1126 = vshrl.u32 %v1023, 16
        %v1128 = vrot.slane %v1126, 4
        %v1129 = vor.u32 %v1128, %v1124
        %v1130 = vrot.slane %v1129, 4
        %v1132 = vshll.u32 %v1024, 16
        %v1134 = vrot.slane %v1132, 5
        %v1135 = vsel %vm1039, %v1130, %v1134
        %v1137 = vshrl.u32 %v1025, 16
        %v1139 = vrot.slane %v1137, 4
        %v1140 = vshll.u32 %v1025, 16
        %v1142 = vrot.slane %v1140, 5
        %v1143 = vor.u32 %v1139, %v1142
        %v1144 = vrot.slane %v1143, 4
        %v1146 = vshll.u32 %v1026, 16
        %v1148 = vrot.slane %v1146, 5
        %v1149 = vsel %vm1039, %v1144, %v1148
        %v1150 = vshrl.u32 %v1026, 16
        %v1152 = vrot.slane %v1150, 4
        %v1153 = vor.u32 %v1152, %v1148
        %v1154 = vrot.slane %v1153, 4
        %v1156 = vshll.u32 %v1027, 16
        %v1158 = vrot.slane %v1156, 5
        %v1159 = vsel %vm1039, %v1154, %v1158
        %v1161 = vshrl.u32 %v1028, 16
        %v1163 = vrot.slane %v1161, 4
        %v1164 = vshll.u32 %v1028, 16
        %v1166 = vrot.slane %v1164, 5
        %v1167 = vor.u32 %v1163, %v1166
        %v1168 = vrot.slane %v1167, 4
        %v1170 = vshll.u32 %v1029, 16
        %v1172 = vrot.slane %v1170, 5
        %v1173 = vsel %vm1039, %v1168, %v1172
        %v1174 = vshrl.u32 %v1029, 16
        %v1176 = vrot.slane %v1174, 4
        %v1177 = vor.u32 %v1176, %v1172
        %v1178 = vrot.slane %v1177, 4
        %v1180 = vshll.u32 %v1030, 16
        %v1182 = vrot.slane %v1180, 5
        %v1183 = vsel %vm1039, %v1178, %v1182
        %v1185 = vshrl.u32 %v1031, 16
        %v1187 = vrot.slane %v1185, 4
        %v1188 = vshll.u32 %v1031, 16
        %v1190 = vrot.slane %v1188, 5
        %v1191 = vor.u32 %v1187, %v1190
        %v1192 = vrot.slane %v1191, 4
        %v1194 = vshll.u32 %v1032, 16
        %v1196 = vrot.slane %v1194, 5
        %v1197 = vsel %vm1039, %v1192, %v1196
        %v1198 = vshrl.u32 %v1032, 16
        %v1200 = vrot.slane %v1198, 4
        %v1201 = vor.u32 %v1200, %v1196
        %v1202 = vrot.slane %v1201, 4
        %v1204 = vshll.u32 %v1033, 16
        %v1206 = vrot.slane %v1204, 5
        %v1207 = vsel %vm1039, %v1202, %v1206
        %v1209 = vshrl.u32 %v1034, 16
        %v1211 = vrot.slane %v1209, 4
        %v1212 = vshll.u32 %v1034, 16
        %v1214 = vrot.slane %v1212, 5
        %v1215 = vor.u32 %v1211, %v1214
        %v1216 = vrot.slane %v1215, 4
        %v1218 = vshll.u32 %v1035, 16
        %v1220 = vrot.slane %v1218, 5
        %v1221 = vsel %vm1039, %v1216, %v1220
        %v1222 = vshrl.u32 %v1035, 16
        %v1224 = vrot.slane %v1222, 4
        %v1225 = vor.u32 %v1224, %v1220
        %v1226 = vrot.slane %v1225, 4
        %v1228 = vshll.u32 %v1036, 16
        %v1230 = vrot.slane %v1228, 5
        %v1231 = vsel %vm1039, %v1226, %v1230
        %s1232 = scalar_lea.vmem %s1, 2
        %v1233 = vld [vmem:[%s1232] sm:$0x3]
        %v1234 = vunpack.c.l.b16 %v1053
        %v1235 = vunpack.c.l.b16 %v1063
        %v1236 = vunpack.c.l.b16 %v1077
        %v1237 = vunpack.c.l.b16 %v1087
        %v1238 = vunpack.c.l.b16 %v1101
        %v1239 = vunpack.c.l.b16 %v1111
        %v1240 = vunpack.c.l.b16 %v1125
        %v1241 = vunpack.c.l.b16 %v1135
        %v1242 = vunpack.c.l.b16 %v1149
        %v1243 = vunpack.c.l.b16 %v1159
        %v1244 = vunpack.c.l.b16 %v1173
        %v1245 = vunpack.c.l.b16 %v1183
        %v1246 = vunpack.c.l.b16 %v1197
        %v1247 = vunpack.c.l.b16 %v1207
        %v1248 = vunpack.c.l.b16 %v1221
        %v1249 = vunpack.c.l.b16 %v1231
        %v1250 = vpack.c.b16 %v1235, %v1234
        %v1251 = vpack.c.b16 %v1237, %v1236
        %v1252 = vpack.c.b16 %v1239, %v1238
        %v1253 = vpack.c.b16 %v1241, %v1240
        %v1254 = vpack.c.b16 %v1243, %v1242
        %v1255 = vpack.c.b16 %v1245, %v1244
        %v1256 = vpack.c.b16 %v1247, %v1246
        %v1257 = vpack.c.b16 %v1249, %v1248
        %v1259 = vsel %vm870, %v1250, 0
        %v1262 = vsel %vm870, %v1251, 0
        %v1265 = vsel %vm870, %v1252, 0
        %v1268 = vsel %vm870, %v1253, 0
        %v1271 = vsel %vm870, %v1254, 0
        %v1274 = vsel %vm870, %v1255, 0
        %v1277 = vsel %vm870, %v1256, 0
        %v1280 = vsel %vm870, %v1257, 0
        %v1283 = vsel %vm895, %v1233, 0
        %1285 = vmatprep.subr.bf16.mxu0 0
        %1286 = vmatpush1.bf16.msra.mxu0 %v1283
        %1287 = vmatprep.subr.bf16.mxu0 0
        %1288 = vmatpush1.bf16.msra.mxu0 0
        %1289 = vmatprep.subr.bf16.mxu0 0
        %1290 = vmatpush1.bf16.msra.mxu0 0
        %1291 = vmatprep.subr.bf16.mxu0 0
        %1292 = vmatpush1.bf16.msra.mxu0 0
        %1293 = vmatprep.subr.bf16.mxu0 0
        %1294 = vmatpush1.bf16.msra.mxu0 0
        %1295 = vmatprep.subr.bf16.mxu0 0
        %1296 = vmatpush1.bf16.msra.mxu0 0
        %1297 = vmatprep.subr.bf16.mxu0 0
        %1298 = vmatpush1.bf16.msra.mxu0 0
        %1299 = vmatprep.subr.bf16.mxu0 0
        %1300 = vmatpush1.bf16.msra.mxu0 0
        %1301 = vmatprep.subr.bf16.mxu0 0
        %1302 = vmatpush1.bf16.msra.mxu0 0
        %1303 = vmatprep.subr.bf16.mxu0 0
        %1304 = vmatpush1.bf16.msra.mxu0 0
        %1305 = vmatprep.subr.bf16.mxu0 0
        %1306 = vmatpush1.bf16.msra.mxu0 0
        %1307 = vmatprep.subr.bf16.mxu0 0
        %1308 = vmatpush1.bf16.msra.mxu0 0
        %1309 = vmatprep.subr.bf16.mxu0 0
        %1310 = vmatpush1.bf16.msra.mxu0 0
        %1311 = vmatprep.subr.bf16.mxu0 0
        %1312 = vmatpush1.bf16.msra.mxu0 0
        %1313 = vmatprep.subr.bf16.mxu0 0
        %1314 = vmatpush1.bf16.msra.mxu0 0
        %1315 = vmatprep.subr.bf16.mxu0 0
        %1316 = vmatpush1.bf16.msra.mxu0 0
        %1317 = vmatprep.mubr.bf16.mxu0 0
        %1318 = vmatmul.mubr.bf16.gmra.mrb[0].mxu0 %v1259
        %v1319 = vpop.f32.mrb[0].mxu0
        %v1320 = vadd.f32 0.0, %v1319
        %v1321 = vpop.f32.mrb[0].mxu0
        %v1322 = vpop.f32.mrb[0].mxu0
        %v1323 = vadd.f32 0.0, %v1322
        %v1324 = vpop.f32.mrb[0].mxu0
        %1325 = vmatprep.mubr.bf16.mxu0 0
        %1326 = vmatmul.mubr.bf16.gmra.mrb[0].mxu0 %v1262
        %v1327 = vpop.f32.mrb[0].mxu0
        %v1328 = vadd.f32 0.0, %v1327
        %v1329 = vpop.f32.mrb[0].mxu0
        %v1330 = vpop.f32.mrb[0].mxu0
        %v1331 = vadd.f32 0.0, %v1330
        %v1332 = vpop.f32.mrb[0].mxu0
        %1333 = vmatprep.mubr.bf16.mxu0 0
        %1334 = vmatmul.mubr.bf16.gmra.mrb[0].mxu0 %v1265
        %v1335 = vpop.f32.mrb[0].mxu0
        %v1336 = vadd.f32 0.0, %v1335
        %v1337 = vpop.f32.mrb[0].mxu0
        %v1338 = vpop.f32.mrb[0].mxu0
        %v1339 = vadd.f32 0.0, %v1338
        %v1340 = vpop.f32.mrb[0].mxu0
        %1341 = vmatprep.mubr.bf16.mxu0 0
        %1342 = vmatmul.mubr.bf16.gmra.mrb[0].mxu0 %v1268
        %v1343 = vpop.f32.mrb[0].mxu0
        %v1344 = vadd.f32 0.0, %v1343
        %v1345 = vpop.f32.mrb[0].mxu0
        %v1346 = vpop.f32.mrb[0].mxu0
        %v1347 = vadd.f32 0.0, %v1346
        %v1348 = vpop.f32.mrb[0].mxu0
        %1349 = vmatprep.mubr.bf16.mxu0 0
        %1350 = vmatmul.mubr.bf16.gmra.mrb[0].mxu0 %v1271
        %v1351 = vpop.f32.mrb[0].mxu0
        %v1352 = vadd.f32 0.0, %v1351
        %v1353 = vpop.f32.mrb[0].mxu0
        %v1354 = vpop.f32.mrb[0].mxu0
        %v1355 = vadd.f32 0.0, %v1354
        %v1356 = vpop.f32.mrb[0].mxu0
        %1357 = vmatprep.mubr.bf16.mxu0 0
        %1358 = vmatmul.mubr.bf16.gmra.mrb[0].mxu0 %v1274
        %v1359 = vpop.f32.mrb[0].mxu0
        %v1360 = vadd.f32 0.0, %v1359
        %v1361 = vpop.f32.mrb[0].mxu0
        %v1362 = vpop.f32.mrb[0].mxu0
        %v1363 = vadd.f32 0.0, %v1362
        %v1364 = vpop.f32.mrb[0].mxu0
        %1365 = vmatprep.mubr.bf16.mxu0 0
        %1366 = vmatmul.mubr.bf16.gmra.mrb[0].mxu0 %v1277
        %v1367 = vpop.f32.mrb[0].mxu0
        %v1368 = vadd.f32 0.0, %v1367
        %v1369 = vpop.f32.mrb[0].mxu0
        %v1370 = vpop.f32.mrb[0].mxu0
        %v1371 = vadd.f32 0.0, %v1370
        %v1372 = vpop.f32.mrb[0].mxu0
        %1373 = vmatprep.mubr.bf16.mxu0 0
        %1374 = vmatmul.mubr.bf16.gmra.mrb[0].mxu0 %v1280
        %v1375 = vpop.f32.mrb[0].mxu0
        %v1376 = vadd.f32 0.0, %v1375
        %v1377 = vpop.f32.mrb[0].mxu0
        %v1378 = vpop.f32.mrb[0].mxu0
        %v1379 = vadd.f32 0.0, %v1378
        %v1380 = vpop.f32.mrb[0].mxu0
        %1381 = vdwg.mxu0
        %v1382 = vld [vmem:[#allocation3] sm:$0xff]
        %v1383 = vld [vmem:[#allocation3 + $0x8] sm:$0xff]
        %v1384 = vld [vmem:[#allocation3 + $0x10] sm:$0xff]
        %v1385 = vld [vmem:[#allocation3 + $0x18] sm:$0xff]
        %v1386 = vld [vmem:[#allocation3 + $0x20] sm:$0xff]
        %v1387 = vld [vmem:[#allocation3 + $0x28] sm:$0xff]
        %v1388 = vld [vmem:[#allocation3 + $0x30] sm:$0xff]
        %v1389 = vld [vmem:[#allocation3 + $0x38] sm:$0xff]
        %v1390 = vld [vmem:[#allocation3 + $0x40] sm:$0xff]
        %v1391 = vld [vmem:[#allocation3 + $0x48] sm:$0xff]
        %v1392 = vld [vmem:[#allocation3 + $0x50] sm:$0xff]
        %v1393 = vld [vmem:[#allocation3 + $0x58] sm:$0xff]
        %v1394 = vld [vmem:[#allocation3 + $0x60] sm:$0xff]
        %v1395 = vld [vmem:[#allocation3 + $0x68] sm:$0xff]
        %v1396 = vld [vmem:[#allocation3 + $0x70] sm:$0xff]
        %v1397 = vld [vmem:[#allocation3 + $0x78] sm:$0xff]
        %v1398 = vadd.f32 %v1382, %v1320
        %v1399 = vadd.f32 %v1383, %v1323
        %v1400 = vadd.f32 %v1384, %v1328
        %v1401 = vadd.f32 %v1385, %v1331
        %v1402 = vadd.f32 %v1386, %v1336
        %v1403 = vadd.f32 %v1387, %v1339
        %v1404 = vadd.f32 %v1388, %v1344
        %v1405 = vadd.f32 %v1389, %v1347
        %v1406 = vadd.f32 %v1390, %v1352
        %v1407 = vadd.f32 %v1391, %v1355
        %v1408 = vadd.f32 %v1392, %v1360
        %v1409 = vadd.f32 %v1393, %v1363
        %v1410 = vadd.f32 %v1394, %v1368
        %v1411 = vadd.f32 %v1395, %v1371
        %v1412 = vadd.f32 %v1396, %v1376
        %v1413 = vadd.f32 %v1397, %v1379
        %1414 = vst.msk [vmem:[#allocation3] sm:$0xff] %vm996, %v1398
        %1415 = vst.msk [vmem:[#allocation3 + $0x8] sm:$0xff] %vm996, %v1399
        %1416 = vst.msk [vmem:[#allocation3 + $0x10] sm:$0xff] %vm996, %v1400
        %1417 = vst.msk [vmem:[#allocation3 + $0x18] sm:$0xff] %vm996, %v1401
        %1418 = vst.msk [vmem:[#allocation3 + $0x20] sm:$0xff] %vm996, %v1402
        %1419 = vst.msk [vmem:[#allocation3 + $0x28] sm:$0xff] %vm996, %v1403
        %1420 = vst.msk [vmem:[#allocation3 + $0x30] sm:$0xff] %vm996, %v1404
        %1421 = vst.msk [vmem:[#allocation3 + $0x38] sm:$0xff] %vm996, %v1405
        %1422 = vst.msk [vmem:[#allocation3 + $0x40] sm:$0xff] %vm996, %v1406
        %1423 = vst.msk [vmem:[#allocation3 + $0x48] sm:$0xff] %vm996, %v1407
        %1424 = vst.msk [vmem:[#allocation3 + $0x50] sm:$0xff] %vm996, %v1408
        %1425 = vst.msk [vmem:[#allocation3 + $0x58] sm:$0xff] %vm996, %v1409
        %1426 = vst.msk [vmem:[#allocation3 + $0x60] sm:$0xff] %vm996, %v1410
        %1427 = vst.msk [vmem:[#allocation3 + $0x68] sm:$0xff] %vm996, %v1411
        %1428 = vst.msk [vmem:[#allocation3 + $0x70] sm:$0xff] %vm996, %v1412
        %1429 = vst.msk [vmem:[#allocation3 + $0x78] sm:$0xff] %vm996, %v1413
        %v1430 = vld [vmem:[%s812] sm:$0xe]
        %v1431 = vld [vmem:[%s812 + $0x4] sm:$0xf]
        %v1432 = vld [vmem:[%s812 + $0x8] sm:$0x1]
        %v1433 = vld [vmem:[%s812 + $0xc] sm:$0xe]
        %v1434 = vld [vmem:[%s812 + $0x10] sm:$0xf]
        %v1435 = vld [vmem:[%s812 + $0x14] sm:$0x1]
        %v1436 = vld [vmem:[%s812 + $0x18] sm:$0xe]
        %v1437 = vld [vmem:[%s812 + $0x1c] sm:$0xf]
        %v1438 = vld [vmem:[%s812 + $0x20] sm:$0x1]
        %v1439 = vld [vmem:[%s812 + $0x24] sm:$0xe]
        %v1440 = vld [vmem:[%s812 + $0x28] sm:$0xf]
        %v1441 = vld [vmem:[%s812 + $0x2c] sm:$0x1]
        %v1442 = vld [vmem:[%s812 + $0x30] sm:$0xe]
        %v1443 = vld [vmem:[%s812 + $0x34] sm:$0xf]
        %v1444 = vld [vmem:[%s812 + $0x38] sm:$0x1]
        %v1445 = vld [vmem:[%s812 + $0x3c] sm:$0xe]
        %v1446 = vld [vmem:[%s812 + $0x40] sm:$0xf]
        %v1447 = vld [vmem:[%s812 + $0x44] sm:$0x1]
        %v1448 = vld [vmem:[%s812 + $0x48] sm:$0xe]
        %v1449 = vld [vmem:[%s812 + $0x4c] sm:$0xf]
        %v1450 = vld [vmem:[%s812 + $0x50] sm:$0x1]
        %v1451 = vld [vmem:[%s812 + $0x54] sm:$0xe]
        %v1452 = vld [vmem:[%s812 + $0x58] sm:$0xf]
        %v1453 = vld [vmem:[%s812 + $0x5c] sm:$0x1]
        %vm1478 = vcmask 1042432
        %vm1479 = vcmask 1046532
        %vm1480 = vmor %vm1478, %vm1479
        %v1481 = vrot.slane %v1430, 5
        %v1482 = vrot.slane %v1481, 4
        %v1483 = vrot.slane %v1431, 5
        %v1484 = vsel %vm1480, %v1482, %v1483
        %v1485 = vrot.slane %v1483, 4
        %v1486 = vrot.slane %v1432, 5
        %v1487 = vsel %vm1480, %v1485, %v1486
        %v1488 = vrot.slane %v1433, 5
        %v1489 = vrot.slane %v1488, 4
        %v1490 = vrot.slane %v1434, 5
        %v1491 = vsel %vm1480, %v1489, %v1490
        %v1492 = vrot.slane %v1490, 4
        %v1493 = vrot.slane %v1435, 5
        %v1494 = vsel %vm1480, %v1492, %v1493
        %v1495 = vrot.slane %v1436, 5
        %v1496 = vrot.slane %v1495, 4
        %v1497 = vrot.slane %v1437, 5
        %v1498 = vsel %vm1480, %v1496, %v1497
        %v1499 = vrot.slane %v1497, 4
        %v1500 = vrot.slane %v1438, 5
        %v1501 = vsel %vm1480, %v1499, %v1500
        %v1502 = vrot.slane %v1439, 5
        %v1503 = vrot.slane %v1502, 4
        %v1504 = vrot.slane %v1440, 5
        %v1505 = vsel %vm1480, %v1503, %v1504
        %v1506 = vrot.slane %v1504, 4
        %v1507 = vrot.slane %v1441, 5
        %v1508 = vsel %vm1480, %v1506, %v1507
        %v1509 = vrot.slane %v1442, 5
        %v1510 = vrot.slane %v1509, 4
        %v1511 = vrot.slane %v1443, 5
        %v1512 = vsel %vm1480, %v1510, %v1511
        %v1513 = vrot.slane %v1511, 4
        %v1514 = vrot.slane %v1444, 5
        %v1515 = vsel %vm1480, %v1513, %v1514
        %v1516 = vrot.slane %v1445, 5
        %v1517 = vrot.slane %v1516, 4
        %v1518 = vrot.slane %v1446, 5
        %v1519 = vsel %vm1480, %v1517, %v1518
        %v1520 = vrot.slane %v1518, 4
        %v1521 = vrot.slane %v1447, 5
        %v1522 = vsel %vm1480, %v1520, %v1521
        %v1523 = vrot.slane %v1448, 5
        %v1524 = vrot.slane %v1523, 4
        %v1525 = vrot.slane %v1449, 5
        %v1526 = vsel %vm1480, %v1524, %v1525
        %v1527 = vrot.slane %v1525, 4
        %v1528 = vrot.slane %v1450, 5
        %v1529 = vsel %vm1480, %v1527, %v1528
        %v1530 = vrot.slane %v1451, 5
        %v1531 = vrot.slane %v1530, 4
        %v1532 = vrot.slane %v1452, 5
        %v1533 = vsel %vm1480, %v1531, %v1532
        %v1534 = vrot.slane %v1532, 4
        %v1535 = vrot.slane %v1453, 5
        %v1536 = vsel %vm1480, %v1534, %v1535
        %s1537 = scalar_lea.vmem %s1, 4
        %v1538 = vld [vmem:[%s1537] sm:$0x3]
        %v1539 = vunpack.c.l.b16 %v1484
        %v1540 = vunpack.c.l.b16 %v1487
        %v1541 = vunpack.c.l.b16 %v1491
        %v1542 = vunpack.c.l.b16 %v1494
        %v1543 = vunpack.c.l.b16 %v1498
        %v1544 = vunpack.c.l.b16 %v1501
        %v1545 = vunpack.c.l.b16 %v1505
        %v1546 = vunpack.c.l.b16 %v1508
        %v1547 = vunpack.c.l.b16 %v1512
        %v1548 = vunpack.c.l.b16 %v1515
        %v1549 = vunpack.c.l.b16 %v1519
        %v1550 = vunpack.c.l.b16 %v1522
        %v1551 = vunpack.c.l.b16 %v1526
        %v1552 = vunpack.c.l.b16 %v1529
        %v1553 = vunpack.c.l.b16 %v1533
        %v1554 = vunpack.c.l.b16 %v1536
        %v1555 = vpack.c.b16 %v1540, %v1539
        %v1556 = vpack.c.b16 %v1542, %v1541
        %v1557 = vpack.c.b16 %v1544, %v1543
        %v1558 = vpack.c.b16 %v1546, %v1545
        %v1559 = vpack.c.b16 %v1548, %v1547
        %v1560 = vpack.c.b16 %v1550, %v1549
        %v1561 = vpack.c.b16 %v1552, %v1551
        %v1562 = vpack.c.b16 %v1554, %v1553
        %v1564 = vsel %vm870, %v1555, 0
        %v1567 = vsel %vm870, %v1556, 0
        %v1570 = vsel %vm870, %v1557, 0
        %v1573 = vsel %vm870, %v1558, 0
        %v1576 = vsel %vm870, %v1559, 0
        %v1579 = vsel %vm870, %v1560, 0
        %v1582 = vsel %vm870, %v1561, 0
        %v1585 = vsel %vm870, %v1562, 0
        %v1588 = vsel %vm895, %v1538, 0
        %1590 = vmatprep.subr.bf16.mxu0 0
        %1591 = vmatpush1.bf16.msra.mxu0 %v1588
        %1592 = vmatprep.subr.bf16.mxu0 0
        %1593 = vmatpush1.bf16.msra.mxu0 0
        %1594 = vmatprep.subr.bf16.mxu0 0
        %1595 = vmatpush1.bf16.msra.mxu0 0
        %1596 = vmatprep.subr.bf16.mxu0 0
        %1597 = vmatpush1.bf16.msra.mxu0 0
        %1598 = vmatprep.subr.bf16.mxu0 0
        %1599 = vmatpush1.bf16.msra.mxu0 0
        %1600 = vmatprep.subr.bf16.mxu0 0
        %1601 = vmatpush1.bf16.msra.mxu0 0
        %1602 = vmatprep.subr.bf16.mxu0 0
        %1603 = vmatpush1.bf16.msra.mxu0 0
        %1604 = vmatprep.subr.bf16.mxu0 0
        %1605 = vmatpush1.bf16.msra.mxu0 0
        %1606 = vmatprep.subr.bf16.mxu0 0
        %1607 = vmatpush1.bf16.msra.mxu0 0
        %1608 = vmatprep.subr.bf16.mxu0 0
        %1609 = vmatpush1.bf16.msra.mxu0 0
        %1610 = vmatprep.subr.bf16.mxu0 0
        %1611 = vmatpush1.bf16.msra.mxu0 0
        %1612 = vmatprep.subr.bf16.mxu0 0
        %1613 = vmatpush1.bf16.msra.mxu0 0
        %1614 = vmatprep.subr.bf16.mxu0 0
        %1615 = vmatpush1.bf16.msra.mxu0 0
        %1616 = vmatprep.subr.bf16.mxu0 0
        %1617 = vmatpush1.bf16.msra.mxu0 0
        %1618 = vmatprep.subr.bf16.mxu0 0
        %1619 = vmatpush1.bf16.msra.mxu0 0
        %1620 = vmatprep.subr.bf16.mxu0 0
        %1621 = vmatpush1.bf16.msra.mxu0 0
        %1622 = vmatprep.mubr.bf16.mxu0 0
        %1623 = vmatmul.mubr.bf16.gmra.mrb[0].mxu0 %v1564
        %v1624 = vpop.f32.mrb[0].mxu0
        %v1625 = vadd.f32 0.0, %v1624
        %v1626 = vpop.f32.mrb[0].mxu0
        %v1627 = vpop.f32.mrb[0].mxu0
        %v1628 = vadd.f32 0.0, %v1627
        %v1629 = vpop.f32.mrb[0].mxu0
        %1630 = vmatprep.mubr.bf16.mxu0 0
        %1631 = vmatmul.mubr.bf16.gmra.mrb[0].mxu0 %v1567
        %v1632 = vpop.f32.mrb[0].mxu0
        %v1633 = vadd.f32 0.0, %v1632
        %v1634 = vpop.f32.mrb[0].mxu0
        %v1635 = vpop.f32.mrb[0].mxu0
        %v1636 = vadd.f32 0.0, %v1635
        %v1637 = vpop.f32.mrb[0].mxu0
        %1638 = vmatprep.mubr.bf16.mxu0 0
        %1639 = vmatmul.mubr.bf16.gmra.mrb[0].mxu0 %v1570
        %v1640 = vpop.f32.mrb[0].mxu0
        %v1641 = vadd.f32 0.0, %v1640
        %v1642 = vpop.f32.mrb[0].mxu0
        %v1643 = vpop.f32.mrb[0].mxu0
        %v1644 = vadd.f32 0.0, %v1643
        %v1645 = vpop.f32.mrb[0].mxu0
        %1646 = vmatprep.mubr.bf16.mxu0 0
        %1647 = vmatmul.mubr.bf16.gmra.mrb[0].mxu0 %v1573
        %v1648 = vpop.f32.mrb[0].mxu0
        %v1649 = vadd.f32 0.0, %v1648
        %v1650 = vpop.f32.mrb[0].mxu0
        %v1651 = vpop.f32.mrb[0].mxu0
        %v1652 = vadd.f32 0.0, %v1651
        %v1653 = vpop.f32.mrb[0].mxu0
        %1654 = vmatprep.mubr.bf16.mxu0 0
        %1655 = vmatmul.mubr.bf16.gmra.mrb[0].mxu0 %v1576
        %v1656 = vpop.f32.mrb[0].mxu0
        %v1657 = vadd.f32 0.0, %v1656
        %v1658 = vpop.f32.mrb[0].mxu0
        %v1659 = vpop.f32.mrb[0].mxu0
        %v1660 = vadd.f32 0.0, %v1659
        %v1661 = vpop.f32.mrb[0].mxu0
        %1662 = vmatprep.mubr.bf16.mxu0 0
        %1663 = vmatmul.mubr.bf16.gmra.mrb[0].mxu0 %v1579
        %v1664 = vpop.f32.mrb[0].mxu0
        %v1665 = vadd.f32 0.0, %v1664
        %v1666 = vpop.f32.mrb[0].mxu0
        %v1667 = vpop.f32.mrb[0].mxu0
        %v1668 = vadd.f32 0.0, %v1667
        %v1669 = vpop.f32.mrb[0].mxu0
        %1670 = vmatprep.mubr.bf16.mxu0 0
        %1671 = vmatmul.mubr.bf16.gmra.mrb[0].mxu0 %v1582
        %v1672 = vpop.f32.mrb[0].mxu0
        %v1673 = vadd.f32 0.0, %v1672
        %v1674 = vpop.f32.mrb[0].mxu0
        %v1675 = vpop.f32.mrb[0].mxu0
        %v1676 = vadd.f32 0.0, %v1675
        %v1677 = vpop.f32.mrb[0].mxu0
        %1678 = vmatprep.mubr.bf16.mxu0 0
        %1679 = vmatmul.mubr.bf16.gmra.mrb[0].mxu0 %v1585
        %v1680 = vpop.f32.mrb[0].mxu0
        %v1681 = vadd.f32 0.0, %v1680
        %v1682 = vpop.f32.mrb[0].mxu0
        %v1683 = vpop.f32.mrb[0].mxu0
        %v1684 = vadd.f32 0.0, %v1683
        %v1685 = vpop.f32.mrb[0].mxu0
        %1686 = vdwg.mxu0
        %v1687 = vld [vmem:[#allocation3] sm:$0xff]
        %v1688 = vld [vmem:[#allocation3 + $0x8] sm:$0xff]
        %v1689 = vld [vmem:[#allocation3 + $0x10] sm:$0xff]
        %v1690 = vld [vmem:[#allocation3 + $0x18] sm:$0xff]
        %v1691 = vld [vmem:[#allocation3 + $0x20] sm:$0xff]
        %v1692 = vld [vmem:[#allocation3 + $0x28] sm:$0xff]
        %v1693 = vld [vmem:[#allocation3 + $0x30] sm:$0xff]
        %v1694 = vld [vmem:[#allocation3 + $0x38] sm:$0xff]
        %v1695 = vld [vmem:[#allocation3 + $0x40] sm:$0xff]
        %v1696 = vld [vmem:[#allocation3 + $0x48] sm:$0xff]
        %v1697 = vld [vmem:[#allocation3 + $0x50] sm:$0xff]
        %v1698 = vld [vmem:[#allocation3 + $0x58] sm:$0xff]
        %v1699 = vld [vmem:[#allocation3 + $0x60] sm:$0xff]
        %v1700 = vld [vmem:[#allocation3 + $0x68] sm:$0xff]
        %v1701 = vld [vmem:[#allocation3 + $0x70] sm:$0xff]
        %v1702 = vld [vmem:[#allocation3 + $0x78] sm:$0xff]
        %v1703 = vadd.f32 %v1687, %v1625
        %v1704 = vadd.f32 %v1688, %v1628
        %v1705 = vadd.f32 %v1689, %v1633
        %v1706 = vadd.f32 %v1690, %v1636
        %v1707 = vadd.f32 %v1691, %v1641
        %v1708 = vadd.f32 %v1692, %v1644
        %v1709 = vadd.f32 %v1693, %v1649
        %v1710 = vadd.f32 %v1694, %v1652
        %v1711 = vadd.f32 %v1695, %v1657
        %v1712 = vadd.f32 %v1696, %v1660
        %v1713 = vadd.f32 %v1697, %v1665
        %v1714 = vadd.f32 %v1698, %v1668
        %v1715 = vadd.f32 %v1699, %v1673
        %v1716 = vadd.f32 %v1700, %v1676
        %v1717 = vadd.f32 %v1701, %v1681
        %v1718 = vadd.f32 %v1702, %v1684
        %1719 = vst.msk [vmem:[#allocation3] sm:$0xff] %vm996, %v1703
        %1720 = vst.msk [vmem:[#allocation3 + $0x8] sm:$0xff] %vm996, %v1704
        %1721 = vst.msk [vmem:[#allocation3 + $0x10] sm:$0xff] %vm996, %v1705
        %1722 = vst.msk [vmem:[#allocation3 + $0x18] sm:$0xff] %vm996, %v1706
        %1723 = vst.msk [vmem:[#allocation3 + $0x20] sm:$0xff] %vm996, %v1707
        %1724 = vst.msk [vmem:[#allocation3 + $0x28] sm:$0xff] %vm996, %v1708
        %1725 = vst.msk [vmem:[#allocation3 + $0x30] sm:$0xff] %vm996, %v1709
        %1726 = vst.msk [vmem:[#allocation3 + $0x38] sm:$0xff] %vm996, %v1710
        %1727 = vst.msk [vmem:[#allocation3 + $0x40] sm:$0xff] %vm996, %v1711
        %1728 = vst.msk [vmem:[#allocation3 + $0x48] sm:$0xff] %vm996, %v1712
        %1729 = vst.msk [vmem:[#allocation3 + $0x50] sm:$0xff] %vm996, %v1713
        %1730 = vst.msk [vmem:[#allocation3 + $0x58] sm:$0xff] %vm996, %v1714
        %1731 = vst.msk [vmem:[#allocation3 + $0x60] sm:$0xff] %vm996, %v1715
        %1732 = vst.msk [vmem:[#allocation3 + $0x68] sm:$0xff] %vm996, %v1716
        %1733 = vst.msk [vmem:[#allocation3 + $0x70] sm:$0xff] %vm996, %v1717
        %1734 = vst.msk [vmem:[#allocation3 + $0x78] sm:$0xff] %vm996, %v1718
        %s1735 = sadd.s32 %s809, 1
        %s1736 = smul.u32 %s1735, 3
        %s1737 = smul.addr %s1736, 4
        %s1738 = scalar_lea.vmem [#allocation2], %s1737
        %v1739 = vld [vmem:[%s1738] sm:$0xf]
        %v1740 = vld [vmem:[%s1738 + $0x4] sm:$0xf]
        %v1741 = vld [vmem:[%s1738 + $0xc] sm:$0xf]
        %v1742 = vld [vmem:[%s1738 + $0x10] sm:$0xf]
        %v1743 = vld [vmem:[%s1738 + $0x18] sm:$0xf]
        %v1744 = vld [vmem:[%s1738 + $0x1c] sm:$0xf]
        %v1745 = vld [vmem:[%s1738 + $0x24] sm:$0xf]
        %v1746 = vld [vmem:[%s1738 + $0x28] sm:$0xf]
        %v1747 = vld [vmem:[%s1738 + $0x30] sm:$0xf]
        %v1748 = vld [vmem:[%s1738 + $0x34] sm:$0xf]
        %v1749 = vld [vmem:[%s1738 + $0x3c] sm:$0xf]
        %v1750 = vld [vmem:[%s1738 + $0x40] sm:$0xf]
        %v1751 = vld [vmem:[%s1738 + $0x48] sm:$0xf]
        %v1752 = vld [vmem:[%s1738 + $0x4c] sm:$0xf]
        %v1753 = vld [vmem:[%s1738 + $0x54] sm:$0xf]
        %v1754 = vld [vmem:[%s1738 + $0x58] sm:$0xf]
        %s1755 = scalar_lea.vmem %s1, 6
        %v1756 = vld [vmem:[%s1755] sm:$0x3]
        %v1773 = vunpack.c.l.b16 %v1739
        %v1774 = vunpack.c.l.b16 %v1740
        %v1775 = vunpack.c.l.b16 %v1741
        %v1776 = vunpack.c.l.b16 %v1742
        %v1777 = vunpack.c.l.b16 %v1743
        %v1778 = vunpack.c.l.b16 %v1744
        %v1779 = vunpack.c.l.b16 %v1745
        %v1780 = vunpack.c.l.b16 %v1746
        %v1781 = vunpack.c.l.b16 %v1747
        %v1782 = vunpack.c.l.b16 %v1748
        %v1783 = vunpack.c.l.b16 %v1749
        %v1784 = vunpack.c.l.b16 %v1750
        %v1785 = vunpack.c.l.b16 %v1751
        %v1786 = vunpack.c.l.b16 %v1752
        %v1787 = vunpack.c.l.b16 %v1753
        %v1788 = vunpack.c.l.b16 %v1754
        %v1789 = vpack.c.b16 %v1774, %v1773
        %v1790 = vpack.c.b16 %v1776, %v1775
        %v1791 = vpack.c.b16 %v1778, %v1777
        %v1792 = vpack.c.b16 %v1780, %v1779
        %v1793 = vpack.c.b16 %v1782, %v1781
        %v1794 = vpack.c.b16 %v1784, %v1783
        %v1795 = vpack.c.b16 %v1786, %v1785
        %v1796 = vpack.c.b16 %v1788, %v1787
        %v1798 = vsel %vm870, %v1789, 0
        %v1801 = vsel %vm870, %v1790, 0
        %v1804 = vsel %vm870, %v1791, 0
        %v1807 = vsel %vm870, %v1792, 0
        %v1810 = vsel %vm870, %v1793, 0
        %v1813 = vsel %vm870, %v1794, 0
        %v1816 = vsel %vm870, %v1795, 0
        %v1819 = vsel %vm870, %v1796, 0
        %v1822 = vsel %vm895, %v1756, 0
        %1824 = vmatprep.subr.bf16.mxu0 0
        %1825 = vmatpush1.bf16.msra.mxu0 %v1822
        %1826 = vmatprep.subr.bf16.mxu0 0
        %1827 = vmatpush1.bf16.msra.mxu0 0
        %1828 = vmatprep.subr.bf16.mxu0 0
        %1829 = vmatpush1.bf16.msra.mxu0 0
        %1830 = vmatprep.subr.bf16.mxu0 0
        %1831 = vmatpush1.bf16.msra.mxu0 0
        %1832 = vmatprep.subr.bf16.mxu0 0
        %1833 = vmatpush1.bf16.msra.mxu0 0
        %1834 = vmatprep.subr.bf16.mxu0 0
        %1835 = vmatpush1.bf16.msra.mxu0 0
        %1836 = vmatprep.subr.bf16.mxu0 0
        %1837 = vmatpush1.bf16.msra.mxu0 0
        %1838 = vmatprep.subr.bf16.mxu0 0
        %1839 = vmatpush1.bf16.msra.mxu0 0
        %1840 = vmatprep.subr.bf16.mxu0 0
        %1841 = vmatpush1.bf16.msra.mxu0 0
        %1842 = vmatprep.subr.bf16.mxu0 0
        %1843 = vmatpush1.bf16.msra.mxu0 0
        %1844 = vmatprep.subr.bf16.mxu0 0
        %1845 = vmatpush1.bf16.msra.mxu0 0
        %1846 = vmatprep.subr.bf16.mxu0 0
        %1847 = vmatpush1.bf16.msra.mxu0 0
        %1848 = vmatprep.subr.bf16.mxu0 0
        %1849 = vmatpush1.bf16.msra.mxu0 0
        %1850 = vmatprep.subr.bf16.mxu0 0
        %1851 = vmatpush1.bf16.msra.mxu0 0
        %1852 = vmatprep.subr.bf16.mxu0 0
        %1853 = vmatpush1.bf16.msra.mxu0 0
        %1854 = vmatprep.subr.bf16.mxu0 0
        %1855 = vmatpush1.bf16.msra.mxu0 0
        %1856 = vmatprep.mubr.bf16.mxu0 0
        %1857 = vmatmul.mubr.bf16.gmra.mrb[0].mxu0 %v1798
        %v1858 = vpop.f32.mrb[0].mxu0
        %v1859 = vadd.f32 0.0, %v1858
        %v1860 = vpop.f32.mrb[0].mxu0
        %v1861 = vpop.f32.mrb[0].mxu0
        %v1862 = vadd.f32 0.0, %v1861
        %v1863 = vpop.f32.mrb[0].mxu0
        %1864 = vmatprep.mubr.bf16.mxu0 0
        %1865 = vmatmul.mubr.bf16.gmra.mrb[0].mxu0 %v1801
        %v1866 = vpop.f32.mrb[0].mxu0
        %v1867 = vadd.f32 0.0, %v1866
        %v1868 = vpop.f32.mrb[0].mxu0
        %v1869 = vpop.f32.mrb[0].mxu0
        %v1870 = vadd.f32 0.0, %v1869
        %v1871 = vpop.f32.mrb[0].mxu0
        %1872 = vmatprep.mubr.bf16.mxu0 0
        %1873 = vmatmul.mubr.bf16.gmra.mrb[0].mxu0 %v1804
        %v1874 = vpop.f32.mrb[0].mxu0
        %v1875 = vadd.f32 0.0, %v1874
        %v1876 = vpop.f32.mrb[0].mxu0
        %v1877 = vpop.f32.mrb[0].mxu0
        %v1878 = vadd.f32 0.0, %v1877
        %v1879 = vpop.f32.mrb[0].mxu0
        %1880 = vmatprep.mubr.bf16.mxu0 0
        %1881 = vmatmul.mubr.bf16.gmra.mrb[0].mxu0 %v1807
        %v1882 = vpop.f32.mrb[0].mxu0
        %v1883 = vadd.f32 0.0, %v1882
        %v1884 = vpop.f32.mrb[0].mxu0
        %v1885 = vpop.f32.mrb[0].mxu0
        %v1886 = vadd.f32 0.0, %v1885
        %v1887 = vpop.f32.mrb[0].mxu0
        %1888 = vmatprep.mubr.bf16.mxu0 0
        %1889 = vmatmul.mubr.bf16.gmra.mrb[0].mxu0 %v1810
        %v1890 = vpop.f32.mrb[0].mxu0
        %v1891 = vadd.f32 0.0, %v1890
        %v1892 = vpop.f32.mrb[0].mxu0
        %v1893 = vpop.f32.mrb[0].mxu0
        %v1894 = vadd.f32 0.0, %v1893
        %v1895 = vpop.f32.mrb[0].mxu0
        %1896 = vmatprep.mubr.bf16.mxu0 0
        %1897 = vmatmul.mubr.bf16.gmra.mrb[0].mxu0 %v1813
        %v1898 = vpop.f32.mrb[0].mxu0
        %v1899 = vadd.f32 0.0, %v1898
        %v1900 = vpop.f32.mrb[0].mxu0
        %v1901 = vpop.f32.mrb[0].mxu0
        %v1902 = vadd.f32 0.0, %v1901
        %v1903 = vpop.f32.mrb[0].mxu0
        %1904 = vmatprep.mubr.bf16.mxu0 0
        %1905 = vmatmul.mubr.bf16.gmra.mrb[0].mxu0 %v1816
        %v1906 = vpop.f32.mrb[0].mxu0
        %v1907 = vadd.f32 0.0, %v1906
        %v1908 = vpop.f32.mrb[0].mxu0
        %v1909 = vpop.f32.mrb[0].mxu0
        %v1910 = vadd.f32 0.0, %v1909
        %v1911 = vpop.f32.mrb[0].mxu0
        %1912 = vmatprep.mubr.bf16.mxu0 0
        %1913 = vmatmul.mubr.bf16.gmra.mrb[0].mxu0 %v1819
        %v1914 = vpop.f32.mrb[0].mxu0
        %v1915 = vadd.f32 0.0, %v1914
        %v1916 = vpop.f32.mrb[0].mxu0
        %v1917 = vpop.f32.mrb[0].mxu0
        %v1918 = vadd.f32 0.0, %v1917
        %v1919 = vpop.f32.mrb[0].mxu0
        %1920 = vdwg.mxu0
        %v1921 = vld [vmem:[#allocation3] sm:$0xff]
        %v1922 = vld [vmem:[#allocation3 + $0x8] sm:$0xff]
        %v1923 = vld [vmem:[#allocation3 + $0x10] sm:$0xff]
        %v1924 = vld [vmem:[#allocation3 + $0x18] sm:$0xff]
        %v1925 = vld [vmem:[#allocation3 + $0x20] sm:$0xff]
        %v1926 = vld [vmem:[#allocation3 + $0x28] sm:$0xff]
        %v1927 = vld [vmem:[#allocation3 + $0x30] sm:$0xff]
        %v1928 = vld [vmem:[#allocation3 + $0x38] sm:$0xff]
        %v1929 = vld [vmem:[#allocation3 + $0x40] sm:$0xff]
        %v1930 = vld [vmem:[#allocation3 + $0x48] sm:$0xff]
        %v1931 = vld [vmem:[#allocation3 + $0x50] sm:$0xff]
        %v1932 = vld [vmem:[#allocation3 + $0x58] sm:$0xff]
        %v1933 = vld [vmem:[#allocation3 + $0x60] sm:$0xff]
        %v1934 = vld [vmem:[#allocation3 + $0x68] sm:$0xff]
        %v1935 = vld [vmem:[#allocation3 + $0x70] sm:$0xff]
        %v1936 = vld [vmem:[#allocation3 + $0x78] sm:$0xff]
        %v1937 = vadd.f32 %v1921, %v1859
        %v1938 = vadd.f32 %v1922, %v1862
        %v1939 = vadd.f32 %v1923, %v1867
        %v1940 = vadd.f32 %v1924, %v1870
        %v1941 = vadd.f32 %v1925, %v1875
        %v1942 = vadd.f32 %v1926, %v1878
        %v1943 = vadd.f32 %v1927, %v1883
        %v1944 = vadd.f32 %v1928, %v1886
        %v1945 = vadd.f32 %v1929, %v1891
        %v1946 = vadd.f32 %v1930, %v1894
        %v1947 = vadd.f32 %v1931, %v1899
        %v1948 = vadd.f32 %v1932, %v1902
        %v1949 = vadd.f32 %v1933, %v1907
        %v1950 = vadd.f32 %v1934, %v1910
        %v1951 = vadd.f32 %v1935, %v1915
        %v1952 = vadd.f32 %v1936, %v1918
        %1953 = vst.msk [vmem:[#allocation3] sm:$0xff] %vm996, %v1937
        %1954 = vst.msk [vmem:[#allocation3 + $0x8] sm:$0xff] %vm996, %v1938
        %1955 = vst.msk [vmem:[#allocation3 + $0x10] sm:$0xff] %vm996, %v1939
        %1956 = vst.msk [vmem:[#allocation3 + $0x18] sm:$0xff] %vm996, %v1940
        %1957 = vst.msk [vmem:[#allocation3 + $0x20] sm:$0xff] %vm996, %v1941
        %1958 = vst.msk [vmem:[#allocation3 + $0x28] sm:$0xff] %vm996, %v1942
        %1959 = vst.msk [vmem:[#allocation3 + $0x30] sm:$0xff] %vm996, %v1943
        %1960 = vst.msk [vmem:[#allocation3 + $0x38] sm:$0xff] %vm996, %v1944
        %1961 = vst.msk [vmem:[#allocation3 + $0x40] sm:$0xff] %vm996, %v1945
        %1962 = vst.msk [vmem:[#allocation3 + $0x48] sm:$0xff] %vm996, %v1946
        %1963 = vst.msk [vmem:[#allocation3 + $0x50] sm:$0xff] %vm996, %v1947
        %1964 = vst.msk [vmem:[#allocation3 + $0x58] sm:$0xff] %vm996, %v1948
        %1965 = vst.msk [vmem:[#allocation3 + $0x60] sm:$0xff] %vm996, %v1949
        %1966 = vst.msk [vmem:[#allocation3 + $0x68] sm:$0xff] %vm996, %v1950
        %1967 = vst.msk [vmem:[#allocation3 + $0x70] sm:$0xff] %vm996, %v1951
        %1968 = vst.msk [vmem:[#allocation3 + $0x78] sm:$0xff] %vm996, %v1952
        %v1969 = vld [vmem:[%s1738] sm:$0xf]
        %v1970 = vld [vmem:[%s1738 + $0x4] sm:$0xf]
        %v1971 = vld [vmem:[%s1738 + $0x8] sm:$0x1]
        %v1972 = vld [vmem:[%s1738 + $0xc] sm:$0xf]
        %v1973 = vld [vmem:[%s1738 + $0x10] sm:$0xf]
        %v1974 = vld [vmem:[%s1738 + $0x14] sm:$0x1]
        %v1975 = vld [vmem:[%s1738 + $0x18] sm:$0xf]
        %v1976 = vld [vmem:[%s1738 + $0x1c] sm:$0xf]
        %v1977 = vld [vmem:[%s1738 + $0x20] sm:$0x1]
        %v1978 = vld [vmem:[%s1738 + $0x24] sm:$0xf]
        %v1979 = vld [vmem:[%s1738 + $0x28] sm:$0xf]
        %v1980 = vld [vmem:[%s1738 + $0x2c] sm:$0x1]
        %v1981 = vld [vmem:[%s1738 + $0x30] sm:$0xf]
        %v1982 = vld [vmem:[%s1738 + $0x34] sm:$0xf]
        %v1983 = vld [vmem:[%s1738 + $0x38] sm:$0x1]
        %v1984 = vld [vmem:[%s1738 + $0x3c] sm:$0xf]
        %v1985 = vld [vmem:[%s1738 + $0x40] sm:$0xf]
        %v1986 = vld [vmem:[%s1738 + $0x44] sm:$0x1]
        %v1987 = vld [vmem:[%s1738 + $0x48] sm:$0xf]
        %v1988 = vld [vmem:[%s1738 + $0x4c] sm:$0xf]
        %v1989 = vld [vmem:[%s1738 + $0x50] sm:$0x1]
        %v1990 = vld [vmem:[%s1738 + $0x54] sm:$0xf]
        %v1991 = vld [vmem:[%s1738 + $0x58] sm:$0xf]
        %v1992 = vld [vmem:[%s1738 + $0x5c] sm:$0x1]
        %v1994 = vshrl.u32 %v1969, 16
        %v1996 = vrot.slane %v1994, 4
        %v1997 = vshll.u32 %v1969, 16
        %v1999 = vrot.slane %v1997, 5
        %v2000 = vor.u32 %v1996, %v1999
        %v2001 = vrot.slane %v2000, 4
        %v2003 = vshll.u32 %v1970, 16
        %v2005 = vrot.slane %v2003, 5
        %v2006 = vsel %vm1039, %v2001, %v2005
        %v2007 = vshrl.u32 %v1970, 16
        %v2009 = vrot.slane %v2007, 4
        %v2010 = vor.u32 %v2009, %v2005
        %v2011 = vrot.slane %v2010, 4
        %v2013 = vshll.u32 %v1971, 16
        %v2015 = vrot.slane %v2013, 5
        %v2016 = vsel %vm1039, %v2011, %v2015
        %v2018 = vshrl.u32 %v1972, 16
        %v2020 = vrot.slane %v2018, 4
        %v2021 = vshll.u32 %v1972, 16
        %v2023 = vrot.slane %v2021, 5
        %v2024 = vor.u32 %v2020, %v2023
        %v2025 = vrot.slane %v2024, 4
        %v2027 = vshll.u32 %v1973, 16
        %v2029 = vrot.slane %v2027, 5
        %v2030 = vsel %vm1039, %v2025, %v2029
        %v2031 = vshrl.u32 %v1973, 16
        %v2033 = vrot.slane %v2031, 4
        %v2034 = vor.u32 %v2033, %v2029
        %v2035 = vrot.slane %v2034, 4
        %v2037 = vshll.u32 %v1974, 16
        %v2039 = vrot.slane %v2037, 5
        %v2040 = vsel %vm1039, %v2035, %v2039
        %v2042 = vshrl.u32 %v1975, 16
        %v2044 = vrot.slane %v2042, 4
        %v2045 = vshll.u32 %v1975, 16
        %v2047 = vrot.slane %v2045, 5
        %v2048 = vor.u32 %v2044, %v2047
        %v2049 = vrot.slane %v2048, 4
        %v2051 = vshll.u32 %v1976, 16
        %v2053 = vrot.slane %v2051, 5
        %v2054 = vsel %vm1039, %v2049, %v2053
        %v2055 = vshrl.u32 %v1976, 16
        %v2057 = vrot.slane %v2055, 4
        %v2058 = vor.u32 %v2057, %v2053
        %v2059 = vrot.slane %v2058, 4
        %v2061 = vshll.u32 %v1977, 16
        %v2063 = vrot.slane %v2061, 5
        %v2064 = vsel %vm1039, %v2059, %v2063
        %v2066 = vshrl.u32 %v1978, 16
        %v2068 = vrot.slane %v2066, 4
        %v2069 = vshll.u32 %v1978, 16
        %v2071 = vrot.slane %v2069, 5
        %v2072 = vor.u32 %v2068, %v2071
        %v2073 = vrot.slane %v2072, 4
        %v2075 = vshll.u32 %v1979, 16
        %v2077 = vrot.slane %v2075, 5
        %v2078 = vsel %vm1039, %v2073, %v2077
        %v2079 = vshrl.u32 %v1979, 16
        %v2081 = vrot.slane %v2079, 4
        %v2082 = vor.u32 %v2081, %v2077
        %v2083 = vrot.slane %v2082, 4
        %v2085 = vshll.u32 %v1980, 16
        %v2087 = vrot.slane %v2085, 5
        %v2088 = vsel %vm1039, %v2083, %v2087
        %v2090 = vshrl.u32 %v1981, 16
        %v2092 = vrot.slane %v2090, 4
        %v2093 = vshll.u32 %v1981, 16
        %v2095 = vrot.slane %v2093, 5
        %v2096 = vor.u32 %v2092, %v2095
        %v2097 = vrot.slane %v2096, 4
        %v2099 = vshll.u32 %v1982, 16
        %v2101 = vrot.slane %v2099, 5
        %v2102 = vsel %vm1039, %v2097, %v2101
        %v2103 = vshrl.u32 %v1982, 16
        %v2105 = vrot.slane %v2103, 4
        %v2106 = vor.u32 %v2105, %v2101
        %v2107 = vrot.slane %v2106, 4
        %v2109 = vshll.u32 %v1983, 16
        %v2111 = vrot.slane %v2109, 5
        %v2112 = vsel %vm1039, %v2107, %v2111
        %v2114 = vshrl.u32 %v1984, 16
        %v2116 = vrot.slane %v2114, 4
        %v2117 = vshll.u32 %v1984, 16
        %v2119 = vrot.slane %v2117, 5
        %v2120 = vor.u32 %v2116, %v2119
        %v2121 = vrot.slane %v2120, 4
        %v2123 = vshll.u32 %v1985, 16
        %v2125 = vrot.slane %v2123, 5
        %v2126 = vsel %vm1039, %v2121, %v2125
        %v2127 = vshrl.u32 %v1985, 16
        %v2129 = vrot.slane %v2127, 4
        %v2130 = vor.u32 %v2129, %v2125
        %v2131 = vrot.slane %v2130, 4
        %v2133 = vshll.u32 %v1986, 16
        %v2135 = vrot.slane %v2133, 5
        %v2136 = vsel %vm1039, %v2131, %v2135
        %v2138 = vshrl.u32 %v1987, 16
        %v2140 = vrot.slane %v2138, 4
        %v2141 = vshll.u32 %v1987, 16
        %v2143 = vrot.slane %v2141, 5
        %v2144 = vor.u32 %v2140, %v2143
        %v2145 = vrot.slane %v2144, 4
        %v2147 = vshll.u32 %v1988, 16
        %v2149 = vrot.slane %v2147, 5
        %v2150 = vsel %vm1039, %v2145, %v2149
        %v2151 = vshrl.u32 %v1988, 16
        %v2153 = vrot.slane %v2151, 4
        %v2154 = vor.u32 %v2153, %v2149
        %v2155 = vrot.slane %v2154, 4
        %v2157 = vshll.u32 %v1989, 16
        %v2159 = vrot.slane %v2157, 5
        %v2160 = vsel %vm1039, %v2155, %v2159
        %v2162 = vshrl.u32 %v1990, 16
        %v2164 = vrot.slane %v2162, 4
        %v2165 = vshll.u32 %v1990, 16
        %v2167 = vrot.slane %v2165, 5
        %v2168 = vor.u32 %v2164, %v2167
        %v2169 = vrot.slane %v2168, 4
        %v2171 = vshll.u32 %v1991, 16
        %v2173 = vrot.slane %v2171, 5
        %v2174 = vsel %vm1039, %v2169, %v2173
        %v2175 = vshrl.u32 %v1991, 16
        %v2177 = vrot.slane %v2175, 4
        %v2178 = vor.u32 %v2177, %v2173
        %v2179 = vrot.slane %v2178, 4
        %v2181 = vshll.u32 %v1992, 16
        %v2183 = vrot.slane %v2181, 5
        %v2184 = vsel %vm1039, %v2179, %v2183
        %s2185 = scalar_lea.vmem %s1, 8
        %v2186 = vld [vmem:[%s2185] sm:$0x3]
        %v2187 = vunpack.c.l.b16 %v2006
        %v2188 = vunpack.c.l.b16 %v2016
        %v2189 = vunpack.c.l.b16 %v2030
        %v2190 = vunpack.c.l.b16 %v2040
        %v2191 = vunpack.c.l.b16 %v2054
        %v2192 = vunpack.c.l.b16 %v2064
        %v2193 = vunpack.c.l.b16 %v2078
        %v2194 = vunpack.c.l.b16 %v2088
        %v2195 = vunpack.c.l.b16 %v2102
        %v2196 = vunpack.c.l.b16 %v2112
        %v2197 = vunpack.c.l.b16 %v2126
        %v2198 = vunpack.c.l.b16 %v2136
        %v2199 = vunpack.c.l.b16 %v2150
        %v2200 = vunpack.c.l.b16 %v2160
        %v2201 = vunpack.c.l.b16 %v2174
        %v2202 = vunpack.c.l.b16 %v2184
        %v2203 = vpack.c.b16 %v2188, %v2187
        %v2204 = vpack.c.b16 %v2190, %v2189
        %v2205 = vpack.c.b16 %v2192, %v2191
        %v2206 = vpack.c.b16 %v2194, %v2193
        %v2207 = vpack.c.b16 %v2196, %v2195
        %v2208 = vpack.c.b16 %v2198, %v2197
        %v2209 = vpack.c.b16 %v2200, %v2199
        %v2210 = vpack.c.b16 %v2202, %v2201
        %v2212 = vsel %vm870, %v2203, 0
        %v2215 = vsel %vm870, %v2204, 0
        %v2218 = vsel %vm870, %v2205, 0
        %v2221 = vsel %vm870, %v2206, 0
        %v2224 = vsel %vm870, %v2207, 0
        %v2227 = vsel %vm870, %v2208, 0
        %v2230 = vsel %vm870, %v2209, 0
        %v2233 = vsel %vm870, %v2210, 0
        %v2236 = vsel %vm895, %v2186, 0
        %2238 = vmatprep.subr.bf16.mxu0 0
        %2239 = vmatpush1.bf16.msra.mxu0 %v2236
        %2240 = vmatprep.subr.bf16.mxu0 0
        %2241 = vmatpush1.bf16.msra.mxu0 0
        %2242 = vmatprep.subr.bf16.mxu0 0
        %2243 = vmatpush1.bf16.msra.mxu0 0
        %2244 = vmatprep.subr.bf16.mxu0 0
        %2245 = vmatpush1.bf16.msra.mxu0 0
        %2246 = vmatprep.subr.bf16.mxu0 0
        %2247 = vmatpush1.bf16.msra.mxu0 0
        %2248 = vmatprep.subr.bf16.mxu0 0
        %2249 = vmatpush1.bf16.msra.mxu0 0
        %2250 = vmatprep.subr.bf16.mxu0 0
        %2251 = vmatpush1.bf16.msra.mxu0 0
        %2252 = vmatprep.subr.bf16.mxu0 0
        %2253 = vmatpush1.bf16.msra.mxu0 0
        %2254 = vmatprep.subr.bf16.mxu0 0
        %2255 = vmatpush1.bf16.msra.mxu0 0
        %2256 = vmatprep.subr.bf16.mxu0 0
        %2257 = vmatpush1.bf16.msra.mxu0 0
        %2258 = vmatprep.subr.bf16.mxu0 0
        %2259 = vmatpush1.bf16.msra.mxu0 0
        %2260 = vmatprep.subr.bf16.mxu0 0
        %2261 = vmatpush1.bf16.msra.mxu0 0
        %2262 = vmatprep.subr.bf16.mxu0 0
        %2263 = vmatpush1.bf16.msra.mxu0 0
        %2264 = vmatprep.subr.bf16.mxu0 0
        %2265 = vmatpush1.bf16.msra.mxu0 0
        %2266 = vmatprep.subr.bf16.mxu0 0
        %2267 = vmatpush1.bf16.msra.mxu0 0
        %2268 = vmatprep.subr.bf16.mxu0 0
        %2269 = vmatpush1.bf16.msra.mxu0 0
        %2270 = vmatprep.mubr.bf16.mxu0 0
        %2271 = vmatmul.mubr.bf16.gmra.mrb[0].mxu0 %v2212
        %v2272 = vpop.f32.mrb[0].mxu0
        %v2273 = vadd.f32 0.0, %v2272
        %v2274 = vpop.f32.mrb[0].mxu0
        %v2275 = vpop.f32.mrb[0].mxu0
        %v2276 = vadd.f32 0.0, %v2275
        %v2277 = vpop.f32.mrb[0].mxu0
        %2278 = vmatprep.mubr.bf16.mxu0 0
        %2279 = vmatmul.mubr.bf16.gmra.mrb[0].mxu0 %v2215
        %v2280 = vpop.f32.mrb[0].mxu0
        %v2281 = vadd.f32 0.0, %v2280
        %v2282 = vpop.f32.mrb[0].mxu0
        %v2283 = vpop.f32.mrb[0].mxu0
        %v2284 = vadd.f32 0.0, %v2283
        %v2285 = vpop.f32.mrb[0].mxu0
        %2286 = vmatprep.mubr.bf16.mxu0 0
        %2287 = vmatmul.mubr.bf16.gmra.mrb[0].mxu0 %v2218
        %v2288 = vpop.f32.mrb[0].mxu0
        %v2289 = vadd.f32 0.0, %v2288
        %v2290 = vpop.f32.mrb[0].mxu0
        %v2291 = vpop.f32.mrb[0].mxu0
        %v2292 = vadd.f32 0.0, %v2291
        %v2293 = vpop.f32.mrb[0].mxu0
        %2294 = vmatprep.mubr.bf16.mxu0 0
        %2295 = vmatmul.mubr.bf16.gmra.mrb[0].mxu0 %v2221
        %v2296 = vpop.f32.mrb[0].mxu0
        %v2297 = vadd.f32 0.0, %v2296
        %v2298 = vpop.f32.mrb[0].mxu0
        %v2299 = vpop.f32.mrb[0].mxu0
        %v2300 = vadd.f32 0.0, %v2299
        %v2301 = vpop.f32.mrb[0].mxu0
        %2302 = vmatprep.mubr.bf16.mxu0 0
        %2303 = vmatmul.mubr.bf16.gmra.mrb[0].mxu0 %v2224
        %v2304 = vpop.f32.mrb[0].mxu0
        %v2305 = vadd.f32 0.0, %v2304
        %v2306 = vpop.f32.mrb[0].mxu0
        %v2307 = vpop.f32.mrb[0].mxu0
        %v2308 = vadd.f32 0.0, %v2307
        %v2309 = vpop.f32.mrb[0].mxu0
        %2310 = vmatprep.mubr.bf16.mxu0 0
        %2311 = vmatmul.mubr.bf16.gmra.mrb[0].mxu0 %v2227
        %v2312 = vpop.f32.mrb[0].mxu0
        %v2313 = vadd.f32 0.0, %v2312
        %v2314 = vpop.f32.mrb[0].mxu0
        %v2315 = vpop.f32.mrb[0].mxu0
        %v2316 = vadd.f32 0.0, %v2315
        %v2317 = vpop.f32.mrb[0].mxu0
        %2318 = vmatprep.mubr.bf16.mxu0 0
        %2319 = vmatmul.mubr.bf16.gmra.mrb[0].mxu0 %v2230
        %v2320 = vpop.f32.mrb[0].mxu0
        %v2321 = vadd.f32 0.0, %v2320
        %v2322 = vpop.f32.mrb[0].mxu0
        %v2323 = vpop.f32.mrb[0].mxu0
        %v2324 = vadd.f32 0.0, %v2323
        %v2325 = vpop.f32.mrb[0].mxu0
        %2326 = vmatprep.mubr.bf16.mxu0 0
        %2327 = vmatmul.mubr.bf16.gmra.mrb[0].mxu0 %v2233
        %v2328 = vpop.f32.mrb[0].mxu0
        %v2329 = vadd.f32 0.0, %v2328
        %v2330 = vpop.f32.mrb[0].mxu0
        %v2331 = vpop.f32.mrb[0].mxu0
        %v2332 = vadd.f32 0.0, %v2331
        %v2333 = vpop.f32.mrb[0].mxu0
        %2334 = vdwg.mxu0
        %v2335 = vld [vmem:[#allocation3] sm:$0xff]
        %v2336 = vld [vmem:[#allocation3 + $0x8] sm:$0xff]
        %v2337 = vld [vmem:[#allocation3 + $0x10] sm:$0xff]
        %v2338 = vld [vmem:[#allocation3 + $0x18] sm:$0xff]
        %v2339 = vld [vmem:[#allocation3 + $0x20] sm:$0xff]
        %v2340 = vld [vmem:[#allocation3 + $0x28] sm:$0xff]
        %v2341 = vld [vmem:[#allocation3 + $0x30] sm:$0xff]
        %v2342 = vld [vmem:[#allocation3 + $0x38] sm:$0xff]
        %v2343 = vld [vmem:[#allocation3 + $0x40] sm:$0xff]
        %v2344 = vld [vmem:[#allocation3 + $0x48] sm:$0xff]
        %v2345 = vld [vmem:[#allocation3 + $0x50] sm:$0xff]
        %v2346 = vld [vmem:[#allocation3 + $0x58] sm:$0xff]
        %v2347 = vld [vmem:[#allocation3 + $0x60] sm:$0xff]
        %v2348 = vld [vmem:[#allocation3 + $0x68] sm:$0xff]
        %v2349 = vld [vmem:[#allocation3 + $0x70] sm:$0xff]
        %v2350 = vld [vmem:[#allocation3 + $0x78] sm:$0xff]
        %v2351 = vadd.f32 %v2335, %v2273
        %v2352 = vadd.f32 %v2336, %v2276
        %v2353 = vadd.f32 %v2337, %v2281
        %v2354 = vadd.f32 %v2338, %v2284
        %v2355 = vadd.f32 %v2339, %v2289
        %v2356 = vadd.f32 %v2340, %v2292
        %v2357 = vadd.f32 %v2341, %v2297
        %v2358 = vadd.f32 %v2342, %v2300
        %v2359 = vadd.f32 %v2343, %v2305
        %v2360 = vadd.f32 %v2344, %v2308
        %v2361 = vadd.f32 %v2345, %v2313
        %v2362 = vadd.f32 %v2346, %v2316
        %v2363 = vadd.f32 %v2347, %v2321
        %v2364 = vadd.f32 %v2348, %v2324
        %v2365 = vadd.f32 %v2349, %v2329
        %v2366 = vadd.f32 %v2350, %v2332
        %2367 = vst.msk [vmem:[#allocation3] sm:$0xff] %vm996, %v2351
        %2368 = vst.msk [vmem:[#allocation3 + $0x8] sm:$0xff] %vm996, %v2352
        %2369 = vst.msk [vmem:[#allocation3 + $0x10] sm:$0xff] %vm996, %v2353
        %2370 = vst.msk [vmem:[#allocation3 + $0x18] sm:$0xff] %vm996, %v2354
        %2371 = vst.msk [vmem:[#allocation3 + $0x20] sm:$0xff] %vm996, %v2355
        %2372 = vst.msk [vmem:[#allocation3 + $0x28] sm:$0xff] %vm996, %v2356
        %2373 = vst.msk [vmem:[#allocation3 + $0x30] sm:$0xff] %vm996, %v2357
        %2374 = vst.msk [vmem:[#allocation3 + $0x38] sm:$0xff] %vm996, %v2358
        %2375 = vst.msk [vmem:[#allocation3 + $0x40] sm:$0xff] %vm996, %v2359
        %2376 = vst.msk [vmem:[#allocation3 + $0x48] sm:$0xff] %vm996, %v2360
        %2377 = vst.msk [vmem:[#allocation3 + $0x50] sm:$0xff] %vm996, %v2361
        %2378 = vst.msk [vmem:[#allocation3 + $0x58] sm:$0xff] %vm996, %v2362
        %2379 = vst.msk [vmem:[#allocation3 + $0x60] sm:$0xff] %vm996, %v2363
        %2380 = vst.msk [vmem:[#allocation3 + $0x68] sm:$0xff] %vm996, %v2364
        %2381 = vst.msk [vmem:[#allocation3 + $0x70] sm:$0xff] %vm996, %v2365
        %2382 = vst.msk [vmem:[#allocation3 + $0x78] sm:$0xff] %vm996, %v2366
        %v2383 = vld [vmem:[%s1738] sm:$0xe]
        %v2384 = vld [vmem:[%s1738 + $0x4] sm:$0xf]
        %v2385 = vld [vmem:[%s1738 + $0x8] sm:$0x1]
        %v2386 = vld [vmem:[%s1738 + $0xc] sm:$0xe]
        %v2387 = vld [vmem:[%s1738 + $0x10] sm:$0xf]
        %v2388 = vld [vmem:[%s1738 + $0x14] sm:$0x1]
        %v2389 = vld [vmem:[%s1738 + $0x18] sm:$0xe]
        %v2390 = vld [vmem:[%s1738 + $0x1c] sm:$0xf]
        %v2391 = vld [vmem:[%s1738 + $0x20] sm:$0x1]
        %v2392 = vld [vmem:[%s1738 + $0x24] sm:$0xe]
        %v2393 = vld [vmem:[%s1738 + $0x28] sm:$0xf]
        %v2394 = vld [vmem:[%s1738 + $0x2c] sm:$0x1]
        %v2395 = vld [vmem:[%s1738 + $0x30] sm:$0xe]
        %v2396 = vld [vmem:[%s1738 + $0x34] sm:$0xf]
        %v2397 = vld [vmem:[%s1738 + $0x38] sm:$0x1]
        %v2398 = vld [vmem:[%s1738 + $0x3c] sm:$0xe]
        %v2399 = vld [vmem:[%s1738 + $0x40] sm:$0xf]
        %v2400 = vld [vmem:[%s1738 + $0x44] sm:$0x1]
        %v2401 = vld [vmem:[%s1738 + $0x48] sm:$0xe]
        %v2402 = vld [vmem:[%s1738 + $0x4c] sm:$0xf]
        %v2403 = vld [vmem:[%s1738 + $0x50] sm:$0x1]
        %v2404 = vld [vmem:[%s1738 + $0x54] sm:$0xe]
        %v2405 = vld [vmem:[%s1738 + $0x58] sm:$0xf]
        %v2406 = vld [vmem:[%s1738 + $0x5c] sm:$0x1]
        %v2431 = vrot.slane %v2383, 5
        %v2432 = vrot.slane %v2431, 4
        %v2433 = vrot.slane %v2384, 5
        %v2434 = vsel %vm1480, %v2432, %v2433
        %v2435 = vrot.slane %v2433, 4
        %v2436 = vrot.slane %v2385, 5
        %v2437 = vsel %vm1480, %v2435, %v2436
        %v2438 = vrot.slane %v2386, 5
        %v2439 = vrot.slane %v2438, 4
        %v2440 = vrot.slane %v2387, 5
        %v2441 = vsel %vm1480, %v2439, %v2440
        %v2442 = vrot.slane %v2440, 4
        %v2443 = vrot.slane %v2388, 5
        %v2444 = vsel %vm1480, %v2442, %v2443
        %v2445 = vrot.slane %v2389, 5
        %v2446 = vrot.slane %v2445, 4
        %v2447 = vrot.slane %v2390, 5
        %v2448 = vsel %vm1480, %v2446, %v2447
        %v2449 = vrot.slane %v2447, 4
        %v2450 = vrot.slane %v2391, 5
        %v2451 = vsel %vm1480, %v2449, %v2450
        %v2452 = vrot.slane %v2392, 5
        %v2453 = vrot.slane %v2452, 4
        %v2454 = vrot.slane %v2393, 5
        %v2455 = vsel %vm1480, %v2453, %v2454
        %v2456 = vrot.slane %v2454, 4
        %v2457 = vrot.slane %v2394, 5
        %v2458 = vsel %vm1480, %v2456, %v2457
        %v2459 = vrot.slane %v2395, 5
        %v2460 = vrot.slane %v2459, 4
        %v2461 = vrot.slane %v2396, 5
        %v2462 = vsel %vm1480, %v2460, %v2461
        %v2463 = vrot.slane %v2461, 4
        %v2464 = vrot.slane %v2397, 5
        %v2465 = vsel %vm1480, %v2463, %v2464
        %v2466 = vrot.slane %v2398, 5
        %v2467 = vrot.slane %v2466, 4
        %v2468 = vrot.slane %v2399, 5
        %v2469 = vsel %vm1480, %v2467, %v2468
        %v2470 = vrot.slane %v2468, 4
        %v2471 = vrot.slane %v2400, 5
        %v2472 = vsel %vm1480, %v2470, %v2471
        %v2473 = vrot.slane %v2401, 5
        %v2474 = vrot.slane %v2473, 4
        %v2475 = vrot.slane %v2402, 5
        %v2476 = vsel %vm1480, %v2474, %v2475
        %v2477 = vrot.slane %v2475, 4
        %v2478 = vrot.slane %v2403, 5
        %v2479 = vsel %vm1480, %v2477, %v2478
        %v2480 = vrot.slane %v2404, 5
        %v2481 = vrot.slane %v2480, 4
        %v2482 = vrot.slane %v2405, 5
        %v2483 = vsel %vm1480, %v2481, %v2482
        %v2484 = vrot.slane %v2482, 4
        %v2485 = vrot.slane %v2406, 5
        %v2486 = vsel %vm1480, %v2484, %v2485
        %s2487 = scalar_lea.vmem %s1, 10
        %v2488 = vld [vmem:[%s2487] sm:$0x3]
        %v2489 = vunpack.c.l.b16 %v2434
        %v2490 = vunpack.c.l.b16 %v2437
        %v2491 = vunpack.c.l.b16 %v2441
        %v2492 = vunpack.c.l.b16 %v2444
        %v2493 = vunpack.c.l.b16 %v2448
        %v2494 = vunpack.c.l.b16 %v2451
        %v2495 = vunpack.c.l.b16 %v2455
        %v2496 = vunpack.c.l.b16 %v2458
        %v2497 = vunpack.c.l.b16 %v2462
        %v2498 = vunpack.c.l.b16 %v2465
        %v2499 = vunpack.c.l.b16 %v2469
        %v2500 = vunpack.c.l.b16 %v2472
        %v2501 = vunpack.c.l.b16 %v2476
        %v2502 = vunpack.c.l.b16 %v2479
        %v2503 = vunpack.c.l.b16 %v2483
        %v2504 = vunpack.c.l.b16 %v2486
        %v2505 = vpack.c.b16 %v2490, %v2489
        %v2506 = vpack.c.b16 %v2492, %v2491
        %v2507 = vpack.c.b16 %v2494, %v2493
        %v2508 = vpack.c.b16 %v2496, %v2495
        %v2509 = vpack.c.b16 %v2498, %v2497
        %v2510 = vpack.c.b16 %v2500, %v2499
        %v2511 = vpack.c.b16 %v2502, %v2501
        %v2512 = vpack.c.b16 %v2504, %v2503
        %v2514 = vsel %vm870, %v2505, 0
        %v2517 = vsel %vm870, %v2506, 0
        %v2520 = vsel %vm870, %v2507, 0
        %v2523 = vsel %vm870, %v2508, 0
        %v2526 = vsel %vm870, %v2509, 0
        %v2529 = vsel %vm870, %v2510, 0
        %v2532 = vsel %vm870, %v2511, 0
        %v2535 = vsel %vm870, %v2512, 0
        %v2538 = vsel %vm895, %v2488, 0
        %2540 = vmatprep.subr.bf16.mxu0 0
        %2541 = vmatpush1.bf16.msra.mxu0 %v2538
        %2542 = vmatprep.subr.bf16.mxu0 0
        %2543 = vmatpush1.bf16.msra.mxu0 0
        %2544 = vmatprep.subr.bf16.mxu0 0
        %2545 = vmatpush1.bf16.msra.mxu0 0
        %2546 = vmatprep.subr.bf16.mxu0 0
        %2547 = vmatpush1.bf16.msra.mxu0 0
        %2548 = vmatprep.subr.bf16.mxu0 0
        %2549 = vmatpush1.bf16.msra.mxu0 0
        %2550 = vmatprep.subr.bf16.mxu0 0
        %2551 = vmatpush1.bf16.msra.mxu0 0
        %2552 = vmatprep.subr.bf16.mxu0 0
        %2553 = vmatpush1.bf16.msra.mxu0 0
        %2554 = vmatprep.subr.bf16.mxu0 0
        %2555 = vmatpush1.bf16.msra.mxu0 0
        %2556 = vmatprep.subr.bf16.mxu0 0
        %2557 = vmatpush1.bf16.msra.mxu0 0
        %2558 = vmatprep.subr.bf16.mxu0 0
        %2559 = vmatpush1.bf16.msra.mxu0 0
        %2560 = vmatprep.subr.bf16.mxu0 0
        %2561 = vmatpush1.bf16.msra.mxu0 0
        %2562 = vmatprep.subr.bf16.mxu0 0
        %2563 = vmatpush1.bf16.msra.mxu0 0
        %2564 = vmatprep.subr.bf16.mxu0 0
        %2565 = vmatpush1.bf16.msra.mxu0 0
        %2566 = vmatprep.subr.bf16.mxu0 0
        %2567 = vmatpush1.bf16.msra.mxu0 0
        %2568 = vmatprep.subr.bf16.mxu0 0
        %2569 = vmatpush1.bf16.msra.mxu0 0
        %2570 = vmatprep.subr.bf16.mxu0 0
        %2571 = vmatpush1.bf16.msra.mxu0 0
        %2572 = vmatprep.mubr.bf16.mxu0 0
        %2573 = vmatmul.mubr.bf16.gmra.mrb[0].mxu0 %v2514
        %v2574 = vpop.f32.mrb[0].mxu0
        %v2575 = vadd.f32 0.0, %v2574
        %v2576 = vpop.f32.mrb[0].mxu0
        %v2577 = vpop.f32.mrb[0].mxu0
        %v2578 = vadd.f32 0.0, %v2577
        %v2579 = vpop.f32.mrb[0].mxu0
        %2580 = vmatprep.mubr.bf16.mxu0 0
        %2581 = vmatmul.mubr.bf16.gmra.mrb[0].mxu0 %v2517
        %v2582 = vpop.f32.mrb[0].mxu0
        %v2583 = vadd.f32 0.0, %v2582
        %v2584 = vpop.f32.mrb[0].mxu0
        %v2585 = vpop.f32.mrb[0].mxu0
        %v2586 = vadd.f32 0.0, %v2585
        %v2587 = vpop.f32.mrb[0].mxu0
        %2588 = vmatprep.mubr.bf16.mxu0 0
        %2589 = vmatmul.mubr.bf16.gmra.mrb[0].mxu0 %v2520
        %v2590 = vpop.f32.mrb[0].mxu0
        %v2591 = vadd.f32 0.0, %v2590
        %v2592 = vpop.f32.mrb[0].mxu0
        %v2593 = vpop.f32.mrb[0].mxu0
        %v2594 = vadd.f32 0.0, %v2593
        %v2595 = vpop.f32.mrb[0].mxu0
        %2596 = vmatprep.mubr.bf16.mxu0 0
        %2597 = vmatmul.mubr.bf16.gmra.mrb[0].mxu0 %v2523
        %v2598 = vpop.f32.mrb[0].mxu0
        %v2599 = vadd.f32 0.0, %v2598
        %v2600 = vpop.f32.mrb[0].mxu0
        %v2601 = vpop.f32.mrb[0].mxu0
        %v2602 = vadd.f32 0.0, %v2601
        %v2603 = vpop.f32.mrb[0].mxu0
        %2604 = vmatprep.mubr.bf16.mxu0 0
        %2605 = vmatmul.mubr.bf16.gmra.mrb[0].mxu0 %v2526
        %v2606 = vpop.f32.mrb[0].mxu0
        %v2607 = vadd.f32 0.0, %v2606
        %v2608 = vpop.f32.mrb[0].mxu0
        %v2609 = vpop.f32.mrb[0].mxu0
        %v2610 = vadd.f32 0.0, %v2609
        %v2611 = vpop.f32.mrb[0].mxu0
        %2612 = vmatprep.mubr.bf16.mxu0 0
        %2613 = vmatmul.mubr.bf16.gmra.mrb[0].mxu0 %v2529
        %v2614 = vpop.f32.mrb[0].mxu0
        %v2615 = vadd.f32 0.0, %v2614
        %v2616 = vpop.f32.mrb[0].mxu0
        %v2617 = vpop.f32.mrb[0].mxu0
        %v2618 = vadd.f32 0.0, %v2617
        %v2619 = vpop.f32.mrb[0].mxu0
        %2620 = vmatprep.mubr.bf16.mxu0 0
        %2621 = vmatmul.mubr.bf16.gmra.mrb[0].mxu0 %v2532
        %v2622 = vpop.f32.mrb[0].mxu0
        %v2623 = vadd.f32 0.0, %v2622
        %v2624 = vpop.f32.mrb[0].mxu0
        %v2625 = vpop.f32.mrb[0].mxu0
        %v2626 = vadd.f32 0.0, %v2625
        %v2627 = vpop.f32.mrb[0].mxu0
        %2628 = vmatprep.mubr.bf16.mxu0 0
        %2629 = vmatmul.mubr.bf16.gmra.mrb[0].mxu0 %v2535
        %v2630 = vpop.f32.mrb[0].mxu0
        %v2631 = vadd.f32 0.0, %v2630
        %v2632 = vpop.f32.mrb[0].mxu0
        %v2633 = vpop.f32.mrb[0].mxu0
        %v2634 = vadd.f32 0.0, %v2633
        %v2635 = vpop.f32.mrb[0].mxu0
        %2636 = vdwg.mxu0
        %v2637 = vld [vmem:[#allocation3] sm:$0xff]
        %v2638 = vld [vmem:[#allocation3 + $0x8] sm:$0xff]
        %v2639 = vld [vmem:[#allocation3 + $0x10] sm:$0xff]
        %v2640 = vld [vmem:[#allocation3 + $0x18] sm:$0xff]
        %v2641 = vld [vmem:[#allocation3 + $0x20] sm:$0xff]
        %v2642 = vld [vmem:[#allocation3 + $0x28] sm:$0xff]
        %v2643 = vld [vmem:[#allocation3 + $0x30] sm:$0xff]
        %v2644 = vld [vmem:[#allocation3 + $0x38] sm:$0xff]
        %v2645 = vld [vmem:[#allocation3 + $0x40] sm:$0xff]
        %v2646 = vld [vmem:[#allocation3 + $0x48] sm:$0xff]
        %v2647 = vld [vmem:[#allocation3 + $0x50] sm:$0xff]
        %v2648 = vld [vmem:[#allocation3 + $0x58] sm:$0xff]
        %v2649 = vld [vmem:[#allocation3 + $0x60] sm:$0xff]
        %v2650 = vld [vmem:[#allocation3 + $0x68] sm:$0xff]
        %v2651 = vld [vmem:[#allocation3 + $0x70] sm:$0xff]
        %v2652 = vld [vmem:[#allocation3 + $0x78] sm:$0xff]
        %v2653 = vadd.f32 %v2637, %v2575
        %v2654 = vadd.f32 %v2638, %v2578
        %v2655 = vadd.f32 %v2639, %v2583
        %v2656 = vadd.f32 %v2640, %v2586
        %v2657 = vadd.f32 %v2641, %v2591
        %v2658 = vadd.f32 %v2642, %v2594
        %v2659 = vadd.f32 %v2643, %v2599
        %v2660 = vadd.f32 %v2644, %v2602
        %v2661 = vadd.f32 %v2645, %v2607
        %v2662 = vadd.f32 %v2646, %v2610
        %v2663 = vadd.f32 %v2647, %v2615
        %v2664 = vadd.f32 %v2648, %v2618
        %v2665 = vadd.f32 %v2649, %v2623
        %v2666 = vadd.f32 %v2650, %v2626
        %v2667 = vadd.f32 %v2651, %v2631
        %v2668 = vadd.f32 %v2652, %v2634
        %2669 = vst.msk [vmem:[#allocation3] sm:$0xff] %vm996, %v2653
        %2670 = vst.msk [vmem:[#allocation3 + $0x8] sm:$0xff] %vm996, %v2654
        %2671 = vst.msk [vmem:[#allocation3 + $0x10] sm:$0xff] %vm996, %v2655
        %2672 = vst.msk [vmem:[#allocation3 + $0x18] sm:$0xff] %vm996, %v2656
        %2673 = vst.msk [vmem:[#allocation3 + $0x20] sm:$0xff] %vm996, %v2657
        %2674 = vst.msk [vmem:[#allocation3 + $0x28] sm:$0xff] %vm996, %v2658
        %2675 = vst.msk [vmem:[#allocation3 + $0x30] sm:$0xff] %vm996, %v2659
        %2676 = vst.msk [vmem:[#allocation3 + $0x38] sm:$0xff] %vm996, %v2660
        %2677 = vst.msk [vmem:[#allocation3 + $0x40] sm:$0xff] %vm996, %v2661
        %2678 = vst.msk [vmem:[#allocation3 + $0x48] sm:$0xff] %vm996, %v2662
        %2679 = vst.msk [vmem:[#allocation3 + $0x50] sm:$0xff] %vm996, %v2663
        %2680 = vst.msk [vmem:[#allocation3 + $0x58] sm:$0xff] %vm996, %v2664
        %2681 = vst.msk [vmem:[#allocation3 + $0x60] sm:$0xff] %vm996, %v2665
        %2682 = vst.msk [vmem:[#allocation3 + $0x68] sm:$0xff] %vm996, %v2666
        %2683 = vst.msk [vmem:[#allocation3 + $0x70] sm:$0xff] %vm996, %v2667
        %2684 = vst.msk [vmem:[#allocation3 + $0x78] sm:$0xff] %vm996, %v2668
        %s2685 = sadd.s32 %s809, 2
        %s2686 = smul.u32 %s2685, 3
        %s2687 = smul.addr %s2686, 4
        %s2688 = scalar_lea.vmem [#allocation2], %s2687
        %v2689 = vld [vmem:[%s2688] sm:$0xf]
        %v2690 = vld [vmem:[%s2688 + $0x4] sm:$0xf]
        %v2691 = vld [vmem:[%s2688 + $0xc] sm:$0xf]
        %v2692 = vld [vmem:[%s2688 + $0x10] sm:$0xf]
        %v2693 = vld [vmem:[%s2688 + $0x18] sm:$0xf]
        %v2694 = vld [vmem:[%s2688 + $0x1c] sm:$0xf]
        %v2695 = vld [vmem:[%s2688 + $0x24] sm:$0xf]
        %v2696 = vld [vmem:[%s2688 + $0x28] sm:$0xf]
        %v2697 = vld [vmem:[%s2688 + $0x30] sm:$0xf]
        %v2698 = vld [vmem:[%s2688 + $0x34] sm:$0xf]
        %v2699 = vld [vmem:[%s2688 + $0x3c] sm:$0xf]
        %v2700 = vld [vmem:[%s2688 + $0x40] sm:$0xf]
        %v2701 = vld [vmem:[%s2688 + $0x48] sm:$0xf]
        %v2702 = vld [vmem:[%s2688 + $0x4c] sm:$0xf]
        %v2703 = vld [vmem:[%s2688 + $0x54] sm:$0xf]
        %v2704 = vld [vmem:[%s2688 + $0x58] sm:$0xf]
        %s2705 = scalar_lea.vmem %s1, 12
        %v2706 = vld [vmem:[%s2705] sm:$0x3]
        %v2723 = vunpack.c.l.b16 %v2689
        %v2724 = vunpack.c.l.b16 %v2690
        %v2725 = vunpack.c.l.b16 %v2691
        %v2726 = vunpack.c.l.b16 %v2692
        %v2727 = vunpack.c.l.b16 %v2693
        %v2728 = vunpack.c.l.b16 %v2694
        %v2729 = vunpack.c.l.b16 %v2695
        %v2730 = vunpack.c.l.b16 %v2696
        %v2731 = vunpack.c.l.b16 %v2697
        %v2732 = vunpack.c.l.b16 %v2698
        %v2733 = vunpack.c.l.b16 %v2699
        %v2734 = vunpack.c.l.b16 %v2700
        %v2735 = vunpack.c.l.b16 %v2701
        %v2736 = vunpack.c.l.b16 %v2702
        %v2737 = vunpack.c.l.b16 %v2703
        %v2738 = vunpack.c.l.b16 %v2704
        %v2739 = vpack.c.b16 %v2724, %v2723
        %v2740 = vpack.c.b16 %v2726, %v2725
        %v2741 = vpack.c.b16 %v2728, %v2727
        %v2742 = vpack.c.b16 %v2730, %v2729
        %v2743 = vpack.c.b16 %v2732, %v2731
        %v2744 = vpack.c.b16 %v2734, %v2733
        %v2745 = vpack.c.b16 %v2736, %v2735
        %v2746 = vpack.c.b16 %v2738, %v2737
        %v2748 = vsel %vm870, %v2739, 0
        %v2751 = vsel %vm870, %v2740, 0
        %v2754 = vsel %vm870, %v2741, 0
        %v2757 = vsel %vm870, %v2742, 0
        %v2760 = vsel %vm870, %v2743, 0
        %v2763 = vsel %vm870, %v2744, 0
        %v2766 = vsel %vm870, %v2745, 0
        %v2769 = vsel %vm870, %v2746, 0
        %v2772 = vsel %vm895, %v2706, 0
        %2774 = vmatprep.subr.bf16.mxu0 0
        %2775 = vmatpush1.bf16.msra.mxu0 %v2772
        %2776 = vmatprep.subr.bf16.mxu0 0
        %2777 = vmatpush1.bf16.msra.mxu0 0
        %2778 = vmatprep.subr.bf16.mxu0 0
        %2779 = vmatpush1.bf16.msra.mxu0 0
        %2780 = vmatprep.subr.bf16.mxu0 0
        %2781 = vmatpush1.bf16.msra.mxu0 0
        %2782 = vmatprep.subr.bf16.mxu0 0
        %2783 = vmatpush1.bf16.msra.mxu0 0
        %2784 = vmatprep.subr.bf16.mxu0 0
        %2785 = vmatpush1.bf16.msra.mxu0 0
        %2786 = vmatprep.subr.bf16.mxu0 0
        %2787 = vmatpush1.bf16.msra.mxu0 0
        %2788 = vmatprep.subr.bf16.mxu0 0
        %2789 = vmatpush1.bf16.msra.mxu0 0
        %2790 = vmatprep.subr.bf16.mxu0 0
        %2791 = vmatpush1.bf16.msra.mxu0 0
        %2792 = vmatprep.subr.bf16.mxu0 0
        %2793 = vmatpush1.bf16.msra.mxu0 0
        %2794 = vmatprep.subr.bf16.mxu0 0
        %2795 = vmatpush1.bf16.msra.mxu0 0
        %2796 = vmatprep.subr.bf16.mxu0 0
        %2797 = vmatpush1.bf16.msra.mxu0 0
        %2798 = vmatprep.subr.bf16.mxu0 0
        %2799 = vmatpush1.bf16.msra.mxu0 0
        %2800 = vmatprep.subr.bf16.mxu0 0
        %2801 = vmatpush1.bf16.msra.mxu0 0
        %2802 = vmatprep.subr.bf16.mxu0 0
        %2803 = vmatpush1.bf16.msra.mxu0 0
        %2804 = vmatprep.subr.bf16.mxu0 0
        %2805 = vmatpush1.bf16.msra.mxu0 0
        %2806 = vmatprep.mubr.bf16.mxu0 0
        %2807 = vmatmul.mubr.bf16.gmra.mrb[0].mxu0 %v2748
        %v2808 = vpop.f32.mrb[0].mxu0
        %v2809 = vadd.f32 0.0, %v2808
        %v2810 = vpop.f32.mrb[0].mxu0
        %v2811 = vpop.f32.mrb[0].mxu0
        %v2812 = vadd.f32 0.0, %v2811
        %v2813 = vpop.f32.mrb[0].mxu0
        %2814 = vmatprep.mubr.bf16.mxu0 0
        %2815 = vmatmul.mubr.bf16.gmra.mrb[0].mxu0 %v2751
        %v2816 = vpop.f32.mrb[0].mxu0
        %v2817 = vadd.f32 0.0, %v2816
        %v2818 = vpop.f32.mrb[0].mxu0
        %v2819 = vpop.f32.mrb[0].mxu0
        %v2820 = vadd.f32 0.0, %v2819
        %v2821 = vpop.f32.mrb[0].mxu0
        %2822 = vmatprep.mubr.bf16.mxu0 0
        %2823 = vmatmul.mubr.bf16.gmra.mrb[0].mxu0 %v2754
        %v2824 = vpop.f32.mrb[0].mxu0
        %v2825 = vadd.f32 0.0, %v2824
        %v2826 = vpop.f32.mrb[0].mxu0
        %v2827 = vpop.f32.mrb[0].mxu0
        %v2828 = vadd.f32 0.0, %v2827
        %v2829 = vpop.f32.mrb[0].mxu0
        %2830 = vmatprep.mubr.bf16.mxu0 0
        %2831 = vmatmul.mubr.bf16.gmra.mrb[0].mxu0 %v2757
        %v2832 = vpop.f32.mrb[0].mxu0
        %v2833 = vadd.f32 0.0, %v2832
        %v2834 = vpop.f32.mrb[0].mxu0
        %v2835 = vpop.f32.mrb[0].mxu0
        %v2836 = vadd.f32 0.0, %v2835
        %v2837 = vpop.f32.mrb[0].mxu0
        %2838 = vmatprep.mubr.bf16.mxu0 0
        %2839 = vmatmul.mubr.bf16.gmra.mrb[0].mxu0 %v2760
        %v2840 = vpop.f32.mrb[0].mxu0
        %v2841 = vadd.f32 0.0, %v2840
        %v2842 = vpop.f32.mrb[0].mxu0
        %v2843 = vpop.f32.mrb[0].mxu0
        %v2844 = vadd.f32 0.0, %v2843
        %v2845 = vpop.f32.mrb[0].mxu0
        %2846 = vmatprep.mubr.bf16.mxu0 0
        %2847 = vmatmul.mubr.bf16.gmra.mrb[0].mxu0 %v2763
        %v2848 = vpop.f32.mrb[0].mxu0
        %v2849 = vadd.f32 0.0, %v2848
        %v2850 = vpop.f32.mrb[0].mxu0
        %v2851 = vpop.f32.mrb[0].mxu0
        %v2852 = vadd.f32 0.0, %v2851
        %v2853 = vpop.f32.mrb[0].mxu0
        %2854 = vmatprep.mubr.bf16.mxu0 0
        %2855 = vmatmul.mubr.bf16.gmra.mrb[0].mxu0 %v2766
        %v2856 = vpop.f32.mrb[0].mxu0
        %v2857 = vadd.f32 0.0, %v2856
        %v2858 = vpop.f32.mrb[0].mxu0
        %v2859 = vpop.f32.mrb[0].mxu0
        %v2860 = vadd.f32 0.0, %v2859
        %v2861 = vpop.f32.mrb[0].mxu0
        %2862 = vmatprep.mubr.bf16.mxu0 0
        %2863 = vmatmul.mubr.bf16.gmra.mrb[0].mxu0 %v2769
        %v2864 = vpop.f32.mrb[0].mxu0
        %v2865 = vadd.f32 0.0, %v2864
        %v2866 = vpop.f32.mrb[0].mxu0
        %v2867 = vpop.f32.mrb[0].mxu0
        %v2868 = vadd.f32 0.0, %v2867
        %v2869 = vpop.f32.mrb[0].mxu0
        %2870 = vdwg.mxu0
        %v2871 = vld [vmem:[#allocation3] sm:$0xff]
        %v2872 = vld [vmem:[#allocation3 + $0x8] sm:$0xff]
        %v2873 = vld [vmem:[#allocation3 + $0x10] sm:$0xff]
        %v2874 = vld [vmem:[#allocation3 + $0x18] sm:$0xff]
        %v2875 = vld [vmem:[#allocation3 + $0x20] sm:$0xff]
        %v2876 = vld [vmem:[#allocation3 + $0x28] sm:$0xff]
        %v2877 = vld [vmem:[#allocation3 + $0x30] sm:$0xff]
        %v2878 = vld [vmem:[#allocation3 + $0x38] sm:$0xff]
        %v2879 = vld [vmem:[#allocation3 + $0x40] sm:$0xff]
        %v2880 = vld [vmem:[#allocation3 + $0x48] sm:$0xff]
        %v2881 = vld [vmem:[#allocation3 + $0x50] sm:$0xff]
        %v2882 = vld [vmem:[#allocation3 + $0x58] sm:$0xff]
        %v2883 = vld [vmem:[#allocation3 + $0x60] sm:$0xff]
        %v2884 = vld [vmem:[#allocation3 + $0x68] sm:$0xff]
        %v2885 = vld [vmem:[#allocation3 + $0x70] sm:$0xff]
        %v2886 = vld [vmem:[#allocation3 + $0x78] sm:$0xff]
        %v2887 = vadd.f32 %v2871, %v2809
        %v2888 = vadd.f32 %v2872, %v2812
        %v2889 = vadd.f32 %v2873, %v2817
        %v2890 = vadd.f32 %v2874, %v2820
        %v2891 = vadd.f32 %v2875, %v2825
        %v2892 = vadd.f32 %v2876, %v2828
        %v2893 = vadd.f32 %v2877, %v2833
        %v2894 = vadd.f32 %v2878, %v2836
        %v2895 = vadd.f32 %v2879, %v2841
        %v2896 = vadd.f32 %v2880, %v2844
        %v2897 = vadd.f32 %v2881, %v2849
        %v2898 = vadd.f32 %v2882, %v2852
        %v2899 = vadd.f32 %v2883, %v2857
        %v2900 = vadd.f32 %v2884, %v2860
        %v2901 = vadd.f32 %v2885, %v2865
        %v2902 = vadd.f32 %v2886, %v2868
        %2903 = vst.msk [vmem:[#allocation3] sm:$0xff] %vm996, %v2887
        %2904 = vst.msk [vmem:[#allocation3 + $0x8] sm:$0xff] %vm996, %v2888
        %2905 = vst.msk [vmem:[#allocation3 + $0x10] sm:$0xff] %vm996, %v2889
        %2906 = vst.msk [vmem:[#allocation3 + $0x18] sm:$0xff] %vm996, %v2890
        %2907 = vst.msk [vmem:[#allocation3 + $0x20] sm:$0xff] %vm996, %v2891
        %2908 = vst.msk [vmem:[#allocation3 + $0x28] sm:$0xff] %vm996, %v2892
        %2909 = vst.msk [vmem:[#allocation3 + $0x30] sm:$0xff] %vm996, %v2893
        %2910 = vst.msk [vmem:[#allocation3 + $0x38] sm:$0xff] %vm996, %v2894
        %2911 = vst.msk [vmem:[#allocation3 + $0x40] sm:$0xff] %vm996, %v2895
        %2912 = vst.msk [vmem:[#allocation3 + $0x48] sm:$0xff] %vm996, %v2896
        %2913 = vst.msk [vmem:[#allocation3 + $0x50] sm:$0xff] %vm996, %v2897
        %2914 = vst.msk [vmem:[#allocation3 + $0x58] sm:$0xff] %vm996, %v2898
        %2915 = vst.msk [vmem:[#allocation3 + $0x60] sm:$0xff] %vm996, %v2899
        %2916 = vst.msk [vmem:[#allocation3 + $0x68] sm:$0xff] %vm996, %v2900
        %2917 = vst.msk [vmem:[#allocation3 + $0x70] sm:$0xff] %vm996, %v2901
        %2918 = vst.msk [vmem:[#allocation3 + $0x78] sm:$0xff] %vm996, %v2902
        %v2919 = vld [vmem:[%s2688] sm:$0xf]
        %v2920 = vld [vmem:[%s2688 + $0x4] sm:$0xf]
        %v2921 = vld [vmem:[%s2688 + $0x8] sm:$0x1]
        %v2922 = vld [vmem:[%s2688 + $0xc] sm:$0xf]
        %v2923 = vld [vmem:[%s2688 + $0x10] sm:$0xf]
        %v2924 = vld [vmem:[%s2688 + $0x14] sm:$0x1]
        %v2925 = vld [vmem:[%s2688 + $0x18] sm:$0xf]
        %v2926 = vld [vmem:[%s2688 + $0x1c] sm:$0xf]
        %v2927 = vld [vmem:[%s2688 + $0x20] sm:$0x1]
        %v2928 = vld [vmem:[%s2688 + $0x24] sm:$0xf]
        %v2929 = vld [vmem:[%s2688 + $0x28] sm:$0xf]
        %v2930 = vld [vmem:[%s2688 + $0x2c] sm:$0x1]
        %v2931 = vld [vmem:[%s2688 + $0x30] sm:$0xf]
        %v2932 = vld [vmem:[%s2688 + $0x34] sm:$0xf]
        %v2933 = vld [vmem:[%s2688 + $0x38] sm:$0x1]
        %v2934 = vld [vmem:[%s2688 + $0x3c] sm:$0xf]
        %v2935 = vld [vmem:[%s2688 + $0x40] sm:$0xf]
        %v2936 = vld [vmem:[%s2688 + $0x44] sm:$0x1]
        %v2937 = vld [vmem:[%s2688 + $0x48] sm:$0xf]
        %v2938 = vld [vmem:[%s2688 + $0x4c] sm:$0xf]
        %v2939 = vld [vmem:[%s2688 + $0x50] sm:$0x1]
        %v2940 = vld [vmem:[%s2688 + $0x54] sm:$0xf]
        %v2941 = vld [vmem:[%s2688 + $0x58] sm:$0xf]
        %v2942 = vld [vmem:[%s2688 + $0x5c] sm:$0x1]
        %v2944 = vshrl.u32 %v2919, 16
        %v2946 = vrot.slane %v2944, 4
        %v2947 = vshll.u32 %v2919, 16
        %v2949 = vrot.slane %v2947, 5
        %v2950 = vor.u32 %v2946, %v2949
        %v2951 = vrot.slane %v2950, 4
        %v2953 = vshll.u32 %v2920, 16
        %v2955 = vrot.slane %v2953, 5
        %v2956 = vsel %vm1039, %v2951, %v2955
        %v2957 = vshrl.u32 %v2920, 16
        %v2959 = vrot.slane %v2957, 4
        %v2960 = vor.u32 %v2959, %v2955
        %v2961 = vrot.slane %v2960, 4
        %v2963 = vshll.u32 %v2921, 16
        %v2965 = vrot.slane %v2963, 5
        %v2966 = vsel %vm1039, %v2961, %v2965
        %v2968 = vshrl.u32 %v2922, 16
        %v2970 = vrot.slane %v2968, 4
        %v2971 = vshll.u32 %v2922, 16
        %v2973 = vrot.slane %v2971, 5
        %v2974 = vor.u32 %v2970, %v2973
        %v2975 = vrot.slane %v2974, 4
        %v2977 = vshll.u32 %v2923, 16
        %v2979 = vrot.slane %v2977, 5
        %v2980 = vsel %vm1039, %v2975, %v2979
        %v2981 = vshrl.u32 %v2923, 16
        %v2983 = vrot.slane %v2981, 4
        %v2984 = vor.u32 %v2983, %v2979
        %v2985 = vrot.slane %v2984, 4
        %v2987 = vshll.u32 %v2924, 16
        %v2989 = vrot.slane %v2987, 5
        %v2990 = vsel %vm1039, %v2985, %v2989
        %v2992 = vshrl.u32 %v2925, 16
        %v2994 = vrot.slane %v2992, 4
        %v2995 = vshll.u32 %v2925, 16
        %v2997 = vrot.slane %v2995, 5
        %v2998 = vor.u32 %v2994, %v2997
        %v2999 = vrot.slane %v2998, 4
        %v3001 = vshll.u32 %v2926, 16
        %v3003 = vrot.slane %v3001, 5
        %v3004 = vsel %vm1039, %v2999, %v3003
        %v3005 = vshrl.u32 %v2926, 16
        %v3007 = vrot.slane %v3005, 4
        %v3008 = vor.u32 %v3007, %v3003
        %v3009 = vrot.slane %v3008, 4
        %v3011 = vshll.u32 %v2927, 16
        %v3013 = vrot.slane %v3011, 5
        %v3014 = vsel %vm1039, %v3009, %v3013
        %v3016 = vshrl.u32 %v2928, 16
        %v3018 = vrot.slane %v3016, 4
        %v3019 = vshll.u32 %v2928, 16
        %v3021 = vrot.slane %v3019, 5
        %v3022 = vor.u32 %v3018, %v3021
        %v3023 = vrot.slane %v3022, 4
        %v3025 = vshll.u32 %v2929, 16
        %v3027 = vrot.slane %v3025, 5
        %v3028 = vsel %vm1039, %v3023, %v3027
        %v3029 = vshrl.u32 %v2929, 16
        %v3031 = vrot.slane %v3029, 4
        %v3032 = vor.u32 %v3031, %v3027
        %v3033 = vrot.slane %v3032, 4
        %v3035 = vshll.u32 %v2930, 16
        %v3037 = vrot.slane %v3035, 5
        %v3038 = vsel %vm1039, %v3033, %v3037
        %v3040 = vshrl.u32 %v2931, 16
        %v3042 = vrot.slane %v3040, 4
        %v3043 = vshll.u32 %v2931, 16
        %v3045 = vrot.slane %v3043, 5
        %v3046 = vor.u32 %v3042, %v3045
        %v3047 = vrot.slane %v3046, 4
        %v3049 = vshll.u32 %v2932, 16
        %v3051 = vrot.slane %v3049, 5
        %v3052 = vsel %vm1039, %v3047, %v3051
        %v3053 = vshrl.u32 %v2932, 16
        %v3055 = vrot.slane %v3053, 4
        %v3056 = vor.u32 %v3055, %v3051
        %v3057 = vrot.slane %v3056, 4
        %v3059 = vshll.u32 %v2933, 16
        %v3061 = vrot.slane %v3059, 5
        %v3062 = vsel %vm1039, %v3057, %v3061
        %v3064 = vshrl.u32 %v2934, 16
        %v3066 = vrot.slane %v3064, 4
        %v3067 = vshll.u32 %v2934, 16
        %v3069 = vrot.slane %v3067, 5
        %v3070 = vor.u32 %v3066, %v3069
        %v3071 = vrot.slane %v3070, 4
        %v3073 = vshll.u32 %v2935, 16
        %v3075 = vrot.slane %v3073, 5
        %v3076 = vsel %vm1039, %v3071, %v3075
        %v3077 = vshrl.u32 %v2935, 16
        %v3079 = vrot.slane %v3077, 4
        %v3080 = vor.u32 %v3079, %v3075
        %v3081 = vrot.slane %v3080, 4
        %v3083 = vshll.u32 %v2936, 16
        %v3085 = vrot.slane %v3083, 5
        %v3086 = vsel %vm1039, %v3081, %v3085
        %v3088 = vshrl.u32 %v2937, 16
        %v3090 = vrot.slane %v3088, 4
        %v3091 = vshll.u32 %v2937, 16
        %v3093 = vrot.slane %v3091, 5
        %v3094 = vor.u32 %v3090, %v3093
        %v3095 = vrot.slane %v3094, 4
        %v3097 = vshll.u32 %v2938, 16
        %v3099 = vrot.slane %v3097, 5
        %v3100 = vsel %vm1039, %v3095, %v3099
        %v3101 = vshrl.u32 %v2938, 16
        %v3103 = vrot.slane %v3101, 4
        %v3104 = vor.u32 %v3103, %v3099
        %v3105 = vrot.slane %v3104, 4
        %v3107 = vshll.u32 %v2939, 16
        %v3109 = vrot.slane %v3107, 5
        %v3110 = vsel %vm1039, %v3105, %v3109
        %v3112 = vshrl.u32 %v2940, 16
        %v3114 = vrot.slane %v3112, 4
        %v3115 = vshll.u32 %v2940, 16
        %v3117 = vrot.slane %v3115, 5
        %v3118 = vor.u32 %v3114, %v3117
        %v3119 = vrot.slane %v3118, 4
        %v3121 = vshll.u32 %v2941, 16
        %v3123 = vrot.slane %v3121, 5
        %v3124 = vsel %vm1039, %v3119, %v3123
        %v3125 = vshrl.u32 %v2941, 16
        %v3127 = vrot.slane %v3125, 4
        %v3128 = vor.u32 %v3127, %v3123
        %v3129 = vrot.slane %v3128, 4
        %v3131 = vshll.u32 %v2942, 16
        %v3133 = vrot.slane %v3131, 5
        %v3134 = vsel %vm1039, %v3129, %v3133
        %s3135 = scalar_lea.vmem %s1, 14
        %v3136 = vld [vmem:[%s3135] sm:$0x3]
        %v3137 = vunpack.c.l.b16 %v2956
        %v3138 = vunpack.c.l.b16 %v2966
        %v3139 = vunpack.c.l.b16 %v2980
        %v3140 = vunpack.c.l.b16 %v2990
        %v3141 = vunpack.c.l.b16 %v3004
        %v3142 = vunpack.c.l.b16 %v3014
        %v3143 = vunpack.c.l.b16 %v3028
        %v3144 = vunpack.c.l.b16 %v3038
        %v3145 = vunpack.c.l.b16 %v3052
        %v3146 = vunpack.c.l.b16 %v3062
        %v3147 = vunpack.c.l.b16 %v3076
        %v3148 = vunpack.c.l.b16 %v3086
        %v3149 = vunpack.c.l.b16 %v3100
        %v3150 = vunpack.c.l.b16 %v3110
        %v3151 = vunpack.c.l.b16 %v3124
        %v3152 = vunpack.c.l.b16 %v3134
        %v3153 = vpack.c.b16 %v3138, %v3137
        %v3154 = vpack.c.b16 %v3140, %v3139
        %v3155 = vpack.c.b16 %v3142, %v3141
        %v3156 = vpack.c.b16 %v3144, %v3143
        %v3157 = vpack.c.b16 %v3146, %v3145
        %v3158 = vpack.c.b16 %v3148, %v3147
        %v3159 = vpack.c.b16 %v3150, %v3149
        %v3160 = vpack.c.b16 %v3152, %v3151
        %v3162 = vsel %vm870, %v3153, 0
        %v3165 = vsel %vm870, %v3154, 0
        %v3168 = vsel %vm870, %v3155, 0
        %v3171 = vsel %vm870, %v3156, 0
        %v3174 = vsel %vm870, %v3157, 0
        %v3177 = vsel %vm870, %v3158, 0
        %v3180 = vsel %vm870, %v3159, 0
        %v3183 = vsel %vm870, %v3160, 0
        %v3186 = vsel %vm895, %v3136, 0
        %3188 = vmatprep.subr.bf16.mxu0 0
        %3189 = vmatpush1.bf16.msra.mxu0 %v3186
        %3190 = vmatprep.subr.bf16.mxu0 0
        %3191 = vmatpush1.bf16.msra.mxu0 0
        %3192 = vmatprep.subr.bf16.mxu0 0
        %3193 = vmatpush1.bf16.msra.mxu0 0
        %3194 = vmatprep.subr.bf16.mxu0 0
        %3195 = vmatpush1.bf16.msra.mxu0 0
        %3196 = vmatprep.subr.bf16.mxu0 0
        %3197 = vmatpush1.bf16.msra.mxu0 0
        %3198 = vmatprep.subr.bf16.mxu0 0
        %3199 = vmatpush1.bf16.msra.mxu0 0
        %3200 = vmatprep.subr.bf16.mxu0 0
        %3201 = vmatpush1.bf16.msra.mxu0 0
        %3202 = vmatprep.subr.bf16.mxu0 0
        %3203 = vmatpush1.bf16.msra.mxu0 0
        %3204 = vmatprep.subr.bf16.mxu0 0
        %3205 = vmatpush1.bf16.msra.mxu0 0
        %3206 = vmatprep.subr.bf16.mxu0 0
        %3207 = vmatpush1.bf16.msra.mxu0 0
        %3208 = vmatprep.subr.bf16.mxu0 0
        %3209 = vmatpush1.bf16.msra.mxu0 0
        %3210 = vmatprep.subr.bf16.mxu0 0
        %3211 = vmatpush1.bf16.msra.mxu0 0
        %3212 = vmatprep.subr.bf16.mxu0 0
        %3213 = vmatpush1.bf16.msra.mxu0 0
        %3214 = vmatprep.subr.bf16.mxu0 0
        %3215 = vmatpush1.bf16.msra.mxu0 0
        %3216 = vmatprep.subr.bf16.mxu0 0
        %3217 = vmatpush1.bf16.msra.mxu0 0
        %3218 = vmatprep.subr.bf16.mxu0 0
        %3219 = vmatpush1.bf16.msra.mxu0 0
        %3220 = vmatprep.mubr.bf16.mxu0 0
        %3221 = vmatmul.mubr.bf16.gmra.mrb[0].mxu0 %v3162
        %v3222 = vpop.f32.mrb[0].mxu0
        %v3223 = vadd.f32 0.0, %v3222
        %v3224 = vpop.f32.mrb[0].mxu0
        %v3225 = vpop.f32.mrb[0].mxu0
        %v3226 = vadd.f32 0.0, %v3225
        %v3227 = vpop.f32.mrb[0].mxu0
        %3228 = vmatprep.mubr.bf16.mxu0 0
        %3229 = vmatmul.mubr.bf16.gmra.mrb[0].mxu0 %v3165
        %v3230 = vpop.f32.mrb[0].mxu0
        %v3231 = vadd.f32 0.0, %v3230
        %v3232 = vpop.f32.mrb[0].mxu0
        %v3233 = vpop.f32.mrb[0].mxu0
        %v3234 = vadd.f32 0.0, %v3233
        %v3235 = vpop.f32.mrb[0].mxu0
        %3236 = vmatprep.mubr.bf16.mxu0 0
        %3237 = vmatmul.mubr.bf16.gmra.mrb[0].mxu0 %v3168
        %v3238 = vpop.f32.mrb[0].mxu0
        %v3239 = vadd.f32 0.0, %v3238
        %v3240 = vpop.f32.mrb[0].mxu0
        %v3241 = vpop.f32.mrb[0].mxu0
        %v3242 = vadd.f32 0.0, %v3241
        %v3243 = vpop.f32.mrb[0].mxu0
        %3244 = vmatprep.mubr.bf16.mxu0 0
        %3245 = vmatmul.mubr.bf16.gmra.mrb[0].mxu0 %v3171
        %v3246 = vpop.f32.mrb[0].mxu0
        %v3247 = vadd.f32 0.0, %v3246
        %v3248 = vpop.f32.mrb[0].mxu0
        %v3249 = vpop.f32.mrb[0].mxu0
        %v3250 = vadd.f32 0.0, %v3249
        %v3251 = vpop.f32.mrb[0].mxu0
        %3252 = vmatprep.mubr.bf16.mxu0 0
        %3253 = vmatmul.mubr.bf16.gmra.mrb[0].mxu0 %v3174
        %v3254 = vpop.f32.mrb[0].mxu0
        %v3255 = vadd.f32 0.0, %v3254
        %v3256 = vpop.f32.mrb[0].mxu0
        %v3257 = vpop.f32.mrb[0].mxu0
        %v3258 = vadd.f32 0.0, %v3257
        %v3259 = vpop.f32.mrb[0].mxu0
        %3260 = vmatprep.mubr.bf16.mxu0 0
        %3261 = vmatmul.mubr.bf16.gmra.mrb[0].mxu0 %v3177
        %v3262 = vpop.f32.mrb[0].mxu0
        %v3263 = vadd.f32 0.0, %v3262
        %v3264 = vpop.f32.mrb[0].mxu0
        %v3265 = vpop.f32.mrb[0].mxu0
        %v3266 = vadd.f32 0.0, %v3265
        %v3267 = vpop.f32.mrb[0].mxu0
        %3268 = vmatprep.mubr.bf16.mxu0 0
        %3269 = vmatmul.mubr.bf16.gmra.mrb[0].mxu0 %v3180
        %v3270 = vpop.f32.mrb[0].mxu0
        %v3271 = vadd.f32 0.0, %v3270
        %v3272 = vpop.f32.mrb[0].mxu0
        %v3273 = vpop.f32.mrb[0].mxu0
        %v3274 = vadd.f32 0.0, %v3273
        %v3275 = vpop.f32.mrb[0].mxu0
        %3276 = vmatprep.mubr.bf16.mxu0 0
        %3277 = vmatmul.mubr.bf16.gmra.mrb[0].mxu0 %v3183
        %v3278 = vpop.f32.mrb[0].mxu0
        %v3279 = vadd.f32 0.0, %v3278
        %v3280 = vpop.f32.mrb[0].mxu0
        %v3281 = vpop.f32.mrb[0].mxu0
        %v3282 = vadd.f32 0.0, %v3281
        %v3283 = vpop.f32.mrb[0].mxu0
        %3284 = vdwg.mxu0
        %v3285 = vld [vmem:[#allocation3] sm:$0xff]
        %v3286 = vld [vmem:[#allocation3 + $0x8] sm:$0xff]
        %v3287 = vld [vmem:[#allocation3 + $0x10] sm:$0xff]
        %v3288 = vld [vmem:[#allocation3 + $0x18] sm:$0xff]
        %v3289 = vld [vmem:[#allocation3 + $0x20] sm:$0xff]
        %v3290 = vld [vmem:[#allocation3 + $0x28] sm:$0xff]
        %v3291 = vld [vmem:[#allocation3 + $0x30] sm:$0xff]
        %v3292 = vld [vmem:[#allocation3 + $0x38] sm:$0xff]
        %v3293 = vld [vmem:[#allocation3 + $0x40] sm:$0xff]
        %v3294 = vld [vmem:[#allocation3 + $0x48] sm:$0xff]
        %v3295 = vld [vmem:[#allocation3 + $0x50] sm:$0xff]
        %v3296 = vld [vmem:[#allocation3 + $0x58] sm:$0xff]
        %v3297 = vld [vmem:[#allocation3 + $0x60] sm:$0xff]
        %v3298 = vld [vmem:[#allocation3 + $0x68] sm:$0xff]
        %v3299 = vld [vmem:[#allocation3 + $0x70] sm:$0xff]
        %v3300 = vld [vmem:[#allocation3 + $0x78] sm:$0xff]
        %v3301 = vadd.f32 %v3285, %v3223
        %v3302 = vadd.f32 %v3286, %v3226
        %v3303 = vadd.f32 %v3287, %v3231
        %v3304 = vadd.f32 %v3288, %v3234
        %v3305 = vadd.f32 %v3289, %v3239
        %v3306 = vadd.f32 %v3290, %v3242
        %v3307 = vadd.f32 %v3291, %v3247
        %v3308 = vadd.f32 %v3292, %v3250
        %v3309 = vadd.f32 %v3293, %v3255
        %v3310 = vadd.f32 %v3294, %v3258
        %v3311 = vadd.f32 %v3295, %v3263
        %v3312 = vadd.f32 %v3296, %v3266
        %v3313 = vadd.f32 %v3297, %v3271
        %v3314 = vadd.f32 %v3298, %v3274
        %v3315 = vadd.f32 %v3299, %v3279
        %v3316 = vadd.f32 %v3300, %v3282
        %3317 = vst.msk [vmem:[#allocation3] sm:$0xff] %vm996, %v3301
        %3318 = vst.msk [vmem:[#allocation3 + $0x8] sm:$0xff] %vm996, %v3302
        %3319 = vst.msk [vmem:[#allocation3 + $0x10] sm:$0xff] %vm996, %v3303
        %3320 = vst.msk [vmem:[#allocation3 + $0x18] sm:$0xff] %vm996, %v3304
        %3321 = vst.msk [vmem:[#allocation3 + $0x20] sm:$0xff] %vm996, %v3305
        %3322 = vst.msk [vmem:[#allocation3 + $0x28] sm:$0xff] %vm996, %v3306
        %3323 = vst.msk [vmem:[#allocation3 + $0x30] sm:$0xff] %vm996, %v3307
        %3324 = vst.msk [vmem:[#allocation3 + $0x38] sm:$0xff] %vm996, %v3308
        %3325 = vst.msk [vmem:[#allocation3 + $0x40] sm:$0xff] %vm996, %v3309
        %3326 = vst.msk [vmem:[#allocation3 + $0x48] sm:$0xff] %vm996, %v3310
        %3327 = vst.msk [vmem:[#allocation3 + $0x50] sm:$0xff] %vm996, %v3311
        %3328 = vst.msk [vmem:[#allocation3 + $0x58] sm:$0xff] %vm996, %v3312
        %3329 = vst.msk [vmem:[#allocation3 + $0x60] sm:$0xff] %vm996, %v3313
        %3330 = vst.msk [vmem:[#allocation3 + $0x68] sm:$0xff] %vm996, %v3314
        %3331 = vst.msk [vmem:[#allocation3 + $0x70] sm:$0xff] %vm996, %v3315
        %3332 = vst.msk [vmem:[#allocation3 + $0x78] sm:$0xff] %vm996, %v3316
        %v3333 = vld [vmem:[%s2688] sm:$0xe]
        %v3334 = vld [vmem:[%s2688 + $0x4] sm:$0xf]
        %v3335 = vld [vmem:[%s2688 + $0x8] sm:$0x1]
        %v3336 = vld [vmem:[%s2688 + $0xc] sm:$0xe]
        %v3337 = vld [vmem:[%s2688 + $0x10] sm:$0xf]
        %v3338 = vld [vmem:[%s2688 + $0x14] sm:$0x1]
        %v3339 = vld [vmem:[%s2688 + $0x18] sm:$0xe]
        %v3340 = vld [vmem:[%s2688 + $0x1c] sm:$0xf]
        %v3341 = vld [vmem:[%s2688 + $0x20] sm:$0x1]
        %v3342 = vld [vmem:[%s2688 + $0x24] sm:$0xe]
        %v3343 = vld [vmem:[%s2688 + $0x28] sm:$0xf]
        %v3344 = vld [vmem:[%s2688 + $0x2c] sm:$0x1]
        %v3345 = vld [vmem:[%s2688 + $0x30] sm:$0xe]
        %v3346 = vld [vmem:[%s2688 + $0x34] sm:$0xf]
        %v3347 = vld [vmem:[%s2688 + $0x38] sm:$0x1]
        %v3348 = vld [vmem:[%s2688 + $0x3c] sm:$0xe]
        %v3349 = vld [vmem:[%s2688 + $0x40] sm:$0xf]
        %v3350 = vld [vmem:[%s2688 + $0x44] sm:$0x1]
        %v3351 = vld [vmem:[%s2688 + $0x48] sm:$0xe]
        %v3352 = vld [vmem:[%s2688 + $0x4c] sm:$0xf]
        %v3353 = vld [vmem:[%s2688 + $0x50] sm:$0x1]
        %v3354 = vld [vmem:[%s2688 + $0x54] sm:$0xe]
        %v3355 = vld [vmem:[%s2688 + $0x58] sm:$0xf]
        %v3356 = vld [vmem:[%s2688 + $0x5c] sm:$0x1]
        %v3381 = vrot.slane %v3333, 5
        %v3382 = vrot.slane %v3381, 4
        %v3383 = vrot.slane %v3334, 5
        %v3384 = vsel %vm1480, %v3382, %v3383
        %v3385 = vrot.slane %v3383, 4
        %v3386 = vrot.slane %v3335, 5
        %v3387 = vsel %vm1480, %v3385, %v3386
        %v3388 = vrot.slane %v3336, 5
        %v3389 = vrot.slane %v3388, 4
        %v3390 = vrot.slane %v3337, 5
        %v3391 = vsel %vm1480, %v3389, %v3390
        %v3392 = vrot.slane %v3390, 4
        %v3393 = vrot.slane %v3338, 5
        %v3394 = vsel %vm1480, %v3392, %v3393
        %v3395 = vrot.slane %v3339, 5
        %v3396 = vrot.slane %v3395, 4
        %v3397 = vrot.slane %v3340, 5
        %v3398 = vsel %vm1480, %v3396, %v3397
        %v3399 = vrot.slane %v3397, 4
        %v3400 = vrot.slane %v3341, 5
        %v3401 = vsel %vm1480, %v3399, %v3400
        %v3402 = vrot.slane %v3342, 5
        %v3403 = vrot.slane %v3402, 4
        %v3404 = vrot.slane %v3343, 5
        %v3405 = vsel %vm1480, %v3403, %v3404
        %v3406 = vrot.slane %v3404, 4
        %v3407 = vrot.slane %v3344, 5
        %v3408 = vsel %vm1480, %v3406, %v3407
        %v3409 = vrot.slane %v3345, 5
        %v3410 = vrot.slane %v3409, 4
        %v3411 = vrot.slane %v3346, 5
        %v3412 = vsel %vm1480, %v3410, %v3411
        %v3413 = vrot.slane %v3411, 4
        %v3414 = vrot.slane %v3347, 5
        %v3415 = vsel %vm1480, %v3413, %v3414
        %v3416 = vrot.slane %v3348, 5
        %v3417 = vrot.slane %v3416, 4
        %v3418 = vrot.slane %v3349, 5
        %v3419 = vsel %vm1480, %v3417, %v3418
        %v3420 = vrot.slane %v3418, 4
        %v3421 = vrot.slane %v3350, 5
        %v3422 = vsel %vm1480, %v3420, %v3421
        %v3423 = vrot.slane %v3351, 5
        %v3424 = vrot.slane %v3423, 4
        %v3425 = vrot.slane %v3352, 5
        %v3426 = vsel %vm1480, %v3424, %v3425
        %v3427 = vrot.slane %v3425, 4
        %v3428 = vrot.slane %v3353, 5
        %v3429 = vsel %vm1480, %v3427, %v3428
        %v3430 = vrot.slane %v3354, 5
        %v3431 = vrot.slane %v3430, 4
        %v3432 = vrot.slane %v3355, 5
        %v3433 = vsel %vm1480, %v3431, %v3432
        %v3434 = vrot.slane %v3432, 4
        %v3435 = vrot.slane %v3356, 5
        %v3436 = vsel %vm1480, %v3434, %v3435
        %s3437 = scalar_lea.vmem %s1, 16
        %v3438 = vld [vmem:[%s3437] sm:$0x3]
        %v3439 = vunpack.c.l.b16 %v3384
        %v3440 = vunpack.c.l.b16 %v3387
        %v3441 = vunpack.c.l.b16 %v3391
        %v3442 = vunpack.c.l.b16 %v3394
        %v3443 = vunpack.c.l.b16 %v3398
        %v3444 = vunpack.c.l.b16 %v3401
        %v3445 = vunpack.c.l.b16 %v3405
        %v3446 = vunpack.c.l.b16 %v3408
        %v3447 = vunpack.c.l.b16 %v3412
        %v3448 = vunpack.c.l.b16 %v3415
        %v3449 = vunpack.c.l.b16 %v3419
        %v3450 = vunpack.c.l.b16 %v3422
        %v3451 = vunpack.c.l.b16 %v3426
        %v3452 = vunpack.c.l.b16 %v3429
        %v3453 = vunpack.c.l.b16 %v3433
        %v3454 = vunpack.c.l.b16 %v3436
        %v3455 = vpack.c.b16 %v3440, %v3439
        %v3456 = vpack.c.b16 %v3442, %v3441
        %v3457 = vpack.c.b16 %v3444, %v3443
        %v3458 = vpack.c.b16 %v3446, %v3445
        %v3459 = vpack.c.b16 %v3448, %v3447
        %v3460 = vpack.c.b16 %v3450, %v3449
        %v3461 = vpack.c.b16 %v3452, %v3451
        %v3462 = vpack.c.b16 %v3454, %v3453
        %v3464 = vsel %vm870, %v3455, 0
        %v3467 = vsel %vm870, %v3456, 0
        %v3470 = vsel %vm870, %v3457, 0
        %v3473 = vsel %vm870, %v3458, 0
        %v3476 = vsel %vm870, %v3459, 0
        %v3479 = vsel %vm870, %v3460, 0
        %v3482 = vsel %vm870, %v3461, 0
        %v3485 = vsel %vm870, %v3462, 0
        %v3488 = vsel %vm895, %v3438, 0
        %3490 = vmatprep.subr.bf16.mxu0 0
        %3491 = vmatpush1.bf16.msra.mxu0 %v3488
        %3492 = vmatprep.subr.bf16.mxu0 0
        %3493 = vmatpush1.bf16.msra.mxu0 0
        %3494 = vmatprep.subr.bf16.mxu0 0
        %3495 = vmatpush1.bf16.msra.mxu0 0
        %3496 = vmatprep.subr.bf16.mxu0 0
        %3497 = vmatpush1.bf16.msra.mxu0 0
        %3498 = vmatprep.subr.bf16.mxu0 0
        %3499 = vmatpush1.bf16.msra.mxu0 0
        %3500 = vmatprep.subr.bf16.mxu0 0
        %3501 = vmatpush1.bf16.msra.mxu0 0
        %3502 = vmatprep.subr.bf16.mxu0 0
        %3503 = vmatpush1.bf16.msra.mxu0 0
        %3504 = vmatprep.subr.bf16.mxu0 0
        %3505 = vmatpush1.bf16.msra.mxu0 0
        %3506 = vmatprep.subr.bf16.mxu0 0
        %3507 = vmatpush1.bf16.msra.mxu0 0
        %3508 = vmatprep.subr.bf16.mxu0 0
        %3509 = vmatpush1.bf16.msra.mxu0 0
        %3510 = vmatprep.subr.bf16.mxu0 0
        %3511 = vmatpush1.bf16.msra.mxu0 0
        %3512 = vmatprep.subr.bf16.mxu0 0
        %3513 = vmatpush1.bf16.msra.mxu0 0
        %3514 = vmatprep.subr.bf16.mxu0 0
        %3515 = vmatpush1.bf16.msra.mxu0 0
        %3516 = vmatprep.subr.bf16.mxu0 0
        %3517 = vmatpush1.bf16.msra.mxu0 0
        %3518 = vmatprep.subr.bf16.mxu0 0
        %3519 = vmatpush1.bf16.msra.mxu0 0
        %3520 = vmatprep.subr.bf16.mxu0 0
        %3521 = vmatpush1.bf16.msra.mxu0 0
        %3522 = vmatprep.mubr.bf16.mxu0 0
        %3523 = vmatmul.mubr.bf16.gmra.mrb[0].mxu0 %v3464
        %v3524 = vpop.f32.mrb[0].mxu0
        %v3525 = vadd.f32 0.0, %v3524
        %v3526 = vpop.f32.mrb[0].mxu0
        %v3527 = vpop.f32.mrb[0].mxu0
        %v3528 = vadd.f32 0.0, %v3527
        %v3529 = vpop.f32.mrb[0].mxu0
        %3530 = vmatprep.mubr.bf16.mxu0 0
        %3531 = vmatmul.mubr.bf16.gmra.mrb[0].mxu0 %v3467
        %v3532 = vpop.f32.mrb[0].mxu0
        %v3533 = vadd.f32 0.0, %v3532
        %v3534 = vpop.f32.mrb[0].mxu0
        %v3535 = vpop.f32.mrb[0].mxu0
        %v3536 = vadd.f32 0.0, %v3535
        %v3537 = vpop.f32.mrb[0].mxu0
        %3538 = vmatprep.mubr.bf16.mxu0 0
        %3539 = vmatmul.mubr.bf16.gmra.mrb[0].mxu0 %v3470
        %v3540 = vpop.f32.mrb[0].mxu0
        %v3541 = vadd.f32 0.0, %v3540
        %v3542 = vpop.f32.mrb[0].mxu0
        %v3543 = vpop.f32.mrb[0].mxu0
        %v3544 = vadd.f32 0.0, %v3543
        %v3545 = vpop.f32.mrb[0].mxu0
        %3546 = vmatprep.mubr.bf16.mxu0 0
        %3547 = vmatmul.mubr.bf16.gmra.mrb[0].mxu0 %v3473
        %v3548 = vpop.f32.mrb[0].mxu0
        %v3549 = vadd.f32 0.0, %v3548
        %v3550 = vpop.f32.mrb[0].mxu0
        %v3551 = vpop.f32.mrb[0].mxu0
        %v3552 = vadd.f32 0.0, %v3551
        %v3553 = vpop.f32.mrb[0].mxu0
        %3554 = vmatprep.mubr.bf16.mxu0 0
        %3555 = vmatmul.mubr.bf16.gmra.mrb[0].mxu0 %v3476
        %v3556 = vpop.f32.mrb[0].mxu0
        %v3557 = vadd.f32 0.0, %v3556
        %v3558 = vpop.f32.mrb[0].mxu0
        %v3559 = vpop.f32.mrb[0].mxu0
        %v3560 = vadd.f32 0.0, %v3559
        %v3561 = vpop.f32.mrb[0].mxu0
        %3562 = vmatprep.mubr.bf16.mxu0 0
        %3563 = vmatmul.mubr.bf16.gmra.mrb[0].mxu0 %v3479
        %v3564 = vpop.f32.mrb[0].mxu0
        %v3565 = vadd.f32 0.0, %v3564
        %v3566 = vpop.f32.mrb[0].mxu0
        %v3567 = vpop.f32.mrb[0].mxu0
        %v3568 = vadd.f32 0.0, %v3567
        %v3569 = vpop.f32.mrb[0].mxu0
        %3570 = vmatprep.mubr.bf16.mxu0 0
        %3571 = vmatmul.mubr.bf16.gmra.mrb[0].mxu0 %v3482
        %v3572 = vpop.f32.mrb[0].mxu0
        %v3573 = vadd.f32 0.0, %v3572
        %v3574 = vpop.f32.mrb[0].mxu0
        %v3575 = vpop.f32.mrb[0].mxu0
        %v3576 = vadd.f32 0.0, %v3575
        %v3577 = vpop.f32.mrb[0].mxu0
        %3578 = vmatprep.mubr.bf16.mxu0 0
        %3579 = vmatmul.mubr.bf16.gmra.mrb[0].mxu0 %v3485
        %v3580 = vpop.f32.mrb[0].mxu0
        %v3581 = vadd.f32 0.0, %v3580
        %v3582 = vpop.f32.mrb[0].mxu0
        %v3583 = vpop.f32.mrb[0].mxu0
        %v3584 = vadd.f32 0.0, %v3583
        %v3585 = vpop.f32.mrb[0].mxu0
        %3586 = vdwg.mxu0
        %v3587 = vld [vmem:[#allocation3] sm:$0xff]
        %v3588 = vld [vmem:[#allocation3 + $0x8] sm:$0xff]
        %v3589 = vld [vmem:[#allocation3 + $0x10] sm:$0xff]
        %v3590 = vld [vmem:[#allocation3 + $0x18] sm:$0xff]
        %v3591 = vld [vmem:[#allocation3 + $0x20] sm:$0xff]
        %v3592 = vld [vmem:[#allocation3 + $0x28] sm:$0xff]
        %v3593 = vld [vmem:[#allocation3 + $0x30] sm:$0xff]
        %v3594 = vld [vmem:[#allocation3 + $0x38] sm:$0xff]
        %v3595 = vld [vmem:[#allocation3 + $0x40] sm:$0xff]
        %v3596 = vld [vmem:[#allocation3 + $0x48] sm:$0xff]
        %v3597 = vld [vmem:[#allocation3 + $0x50] sm:$0xff]
        %v3598 = vld [vmem:[#allocation3 + $0x58] sm:$0xff]
        %v3599 = vld [vmem:[#allocation3 + $0x60] sm:$0xff]
        %v3600 = vld [vmem:[#allocation3 + $0x68] sm:$0xff]
        %v3601 = vld [vmem:[#allocation3 + $0x70] sm:$0xff]
        %v3602 = vld [vmem:[#allocation3 + $0x78] sm:$0xff]
        %v3603 = vadd.f32 %v3587, %v3525
        %v3604 = vadd.f32 %v3588, %v3528
        %v3605 = vadd.f32 %v3589, %v3533
        %v3606 = vadd.f32 %v3590, %v3536
        %v3607 = vadd.f32 %v3591, %v3541
        %v3608 = vadd.f32 %v3592, %v3544
        %v3609 = vadd.f32 %v3593, %v3549
        %v3610 = vadd.f32 %v3594, %v3552
        %v3611 = vadd.f32 %v3595, %v3557
        %v3612 = vadd.f32 %v3596, %v3560
        %v3613 = vadd.f32 %v3597, %v3565
        %v3614 = vadd.f32 %v3598, %v3568
        %v3615 = vadd.f32 %v3599, %v3573
        %v3616 = vadd.f32 %v3600, %v3576
        %v3617 = vadd.f32 %v3601, %v3581
        %v3618 = vadd.f32 %v3602, %v3584
        %3619 = vst.msk [vmem:[#allocation3] sm:$0xff] %vm996, %v3603
        %3620 = vst.msk [vmem:[#allocation3 + $0x8] sm:$0xff] %vm996, %v3604
        %3621 = vst.msk [vmem:[#allocation3 + $0x10] sm:$0xff] %vm996, %v3605
        %3622 = vst.msk [vmem:[#allocation3 + $0x18] sm:$0xff] %vm996, %v3606
        %3623 = vst.msk [vmem:[#allocation3 + $0x20] sm:$0xff] %vm996, %v3607
        %3624 = vst.msk [vmem:[#allocation3 + $0x28] sm:$0xff] %vm996, %v3608
        %3625 = vst.msk [vmem:[#allocation3 + $0x30] sm:$0xff] %vm996, %v3609
        %3626 = vst.msk [vmem:[#allocation3 + $0x38] sm:$0xff] %vm996, %v3610
        %3627 = vst.msk [vmem:[#allocation3 + $0x40] sm:$0xff] %vm996, %v3611
        %3628 = vst.msk [vmem:[#allocation3 + $0x48] sm:$0xff] %vm996, %v3612
        %3629 = vst.msk [vmem:[#allocation3 + $0x50] sm:$0xff] %vm996, %v3613
        %3630 = vst.msk [vmem:[#allocation3 + $0x58] sm:$0xff] %vm996, %v3614
        %3631 = vst.msk [vmem:[#allocation3 + $0x60] sm:$0xff] %vm996, %v3615
        %3632 = vst.msk [vmem:[#allocation3 + $0x68] sm:$0xff] %vm996, %v3616
        %3633 = vst.msk [vmem:[#allocation3 + $0x70] sm:$0xff] %vm996, %v3617
        %3634 = vst.msk [vmem:[#allocation3 + $0x78] sm:$0xff] %vm996, %v3618
        %v3635 = vld [vmem:[#allocation3] sm:$0xff]
        %v3636 = vld [vmem:[#allocation3 + $0x8] sm:$0xff]
        %v3637 = vld [vmem:[#allocation3 + $0x10] sm:$0xff]
        %v3638 = vld [vmem:[#allocation3 + $0x18] sm:$0xff]
        %v3639 = vld [vmem:[#allocation3 + $0x20] sm:$0xff]
        %v3640 = vld [vmem:[#allocation3 + $0x28] sm:$0xff]
        %v3641 = vld [vmem:[#allocation3 + $0x30] sm:$0xff]
        %v3642 = vld [vmem:[#allocation3 + $0x38] sm:$0xff]
        %v3643 = vld [vmem:[#allocation3 + $0x40] sm:$0xff]
        %v3644 = vld [vmem:[#allocation3 + $0x48] sm:$0xff]
        %v3645 = vld [vmem:[#allocation3 + $0x50] sm:$0xff]
        %v3646 = vld [vmem:[#allocation3 + $0x58] sm:$0xff]
        %v3647 = vld [vmem:[#allocation3 + $0x60] sm:$0xff]
        %v3648 = vld [vmem:[#allocation3 + $0x68] sm:$0xff]
        %v3649 = vld [vmem:[#allocation3 + $0x70] sm:$0xff]
        %v3650 = vld [vmem:[#allocation3 + $0x78] sm:$0xff]
        %3651 = vst.msk [vmem:[%s273] sm:$0xff] %vm996, %v3635
        %3652 = vst.msk [vmem:[%s273 + $0x8] sm:$0xff] %vm996, %v3636
        %3653 = vst.msk [vmem:[%s273 + $0x10] sm:$0xff] %vm996, %v3637
        %3654 = vst.msk [vmem:[%s273 + $0x18] sm:$0xff] %vm996, %v3638
        %3655 = vst.msk [vmem:[%s273 + $0x20] sm:$0xff] %vm996, %v3639
        %3656 = vst.msk [vmem:[%s273 + $0x28] sm:$0xff] %vm996, %v3640
        %3657 = vst.msk [vmem:[%s273 + $0x30] sm:$0xff] %vm996, %v3641
        %3658 = vst.msk [vmem:[%s273 + $0x38] sm:$0xff] %vm996, %v3642
        %3659 = vst.msk [vmem:[%s273 + $0x40] sm:$0xff] %vm996, %v3643
        %3660 = vst.msk [vmem:[%s273 + $0x48] sm:$0xff] %vm996, %v3644
        %3661 = vst.msk [vmem:[%s273 + $0x50] sm:$0xff] %vm996, %v3645
        %3662 = vst.msk [vmem:[%s273 + $0x58] sm:$0xff] %vm996, %v3646
        %3663 = vst.msk [vmem:[%s273 + $0x60] sm:$0xff] %vm996, %v3647
        %3664 = vst.msk [vmem:[%s273 + $0x68] sm:$0xff] %vm996, %v3648
        %3665 = vst.msk [vmem:[%s273 + $0x70] sm:$0xff] %vm996, %v3649
        %3666 = vst.msk [vmem:[%s273 + $0x78] sm:$0xff] %vm996, %v3650
        %v3667 = vsel %vm996, %v3635, 0.0
        %v3668 = vsel %vm996, %v3636, 0.0
        %v3669 = vadd.f32 %v3667, %v3668
        %v3670 = vsel %vm996, %v3637, 0.0
        %v3671 = vadd.f32 %v3669, %v3670
        %v3672 = vsel %vm996, %v3638, 0.0
        %v3673 = vadd.f32 %v3671, %v3672
        %v3674 = vsel %vm996, %v3639, 0.0
        %v3675 = vadd.f32 %v3673, %v3674
        %v3676 = vsel %vm996, %v3640, 0.0
        %v3677 = vadd.f32 %v3675, %v3676
        %v3678 = vsel %vm996, %v3641, 0.0
        %v3679 = vadd.f32 %v3677, %v3678
        %v3680 = vsel %vm996, %v3642, 0.0
        %v3681 = vadd.f32 %v3679, %v3680
        %v3682 = vsel %vm996, %v3643, 0.0
        %v3683 = vadd.f32 %v3681, %v3682
        %v3684 = vsel %vm996, %v3644, 0.0
        %v3685 = vadd.f32 %v3683, %v3684
        %v3686 = vsel %vm996, %v3645, 0.0
        %v3687 = vadd.f32 %v3685, %v3686
        %v3688 = vsel %vm996, %v3646, 0.0
        %v3689 = vadd.f32 %v3687, %v3688
        %v3690 = vsel %vm996, %v3647, 0.0
        %v3691 = vadd.f32 %v3689, %v3690
        %v3692 = vsel %vm996, %v3648, 0.0
        %v3693 = vadd.f32 %v3691, %v3692
        %v3694 = vsel %vm996, %v3649, 0.0
        %v3695 = vadd.f32 %v3693, %v3694
        %v3696 = vsel %vm996, %v3650, 0.0
        %v3697 = vadd.f32 %v3695, %v3696
        %v3698 = vrot.slane %v3697, 4
        %v3699 = vadd.f32 %v3697, %v3698
        %v3700 = vrot.slane %v3699, 2
        %v3701 = vadd.f32 %v3699, %v3700
        %v3702 = vrot.slane %v3701, 1
        %v3703 = vadd.f32 %v3701, %v3702
        %v3704 = vmul.f32 %v3635, %v3635
        %v3705 = vmul.f32 %v3636, %v3636
        %v3706 = vmul.f32 %v3637, %v3637
        %v3707 = vmul.f32 %v3638, %v3638
        %v3708 = vmul.f32 %v3639, %v3639
        %v3709 = vmul.f32 %v3640, %v3640
        %v3710 = vmul.f32 %v3641, %v3641
        %v3711 = vmul.f32 %v3642, %v3642
        %v3712 = vmul.f32 %v3643, %v3643
        %v3713 = vmul.f32 %v3644, %v3644
        %v3714 = vmul.f32 %v3645, %v3645
        %v3715 = vmul.f32 %v3646, %v3646
        %v3716 = vmul.f32 %v3647, %v3647
        %v3717 = vmul.f32 %v3648, %v3648
        %v3718 = vmul.f32 %v3649, %v3649
        %v3719 = vmul.f32 %v3650, %v3650
        %v3720 = vsel %vm996, %v3704, 0.0
        %v3721 = vsel %vm996, %v3705, 0.0
        %v3722 = vadd.f32 %v3720, %v3721
        %v3723 = vsel %vm996, %v3706, 0.0
        %v3724 = vadd.f32 %v3722, %v3723
        %v3725 = vsel %vm996, %v3707, 0.0
        %v3726 = vadd.f32 %v3724, %v3725
        %v3727 = vsel %vm996, %v3708, 0.0
        %v3728 = vadd.f32 %v3726, %v3727
        %v3729 = vsel %vm996, %v3709, 0.0
        %v3730 = vadd.f32 %v3728, %v3729
        %v3731 = vsel %vm996, %v3710, 0.0
        %v3732 = vadd.f32 %v3730, %v3731
        %v3733 = vsel %vm996, %v3711, 0.0
        %v3734 = vadd.f32 %v3732, %v3733
        %v3735 = vsel %vm996, %v3712, 0.0
        %v3736 = vadd.f32 %v3734, %v3735
        %v3737 = vsel %vm996, %v3713, 0.0
        %v3738 = vadd.f32 %v3736, %v3737
        %v3739 = vsel %vm996, %v3714, 0.0
        %v3740 = vadd.f32 %v3738, %v3739
        %v3741 = vsel %vm996, %v3715, 0.0
        %v3742 = vadd.f32 %v3740, %v3741
        %v3743 = vsel %vm996, %v3716, 0.0
        %v3744 = vadd.f32 %v3742, %v3743
        %v3745 = vsel %vm996, %v3717, 0.0
        %v3746 = vadd.f32 %v3744, %v3745
        %v3747 = vsel %vm996, %v3718, 0.0
        %v3748 = vadd.f32 %v3746, %v3747
        %v3749 = vsel %vm996, %v3719, 0.0
        %v3750 = vadd.f32 %v3748, %v3749
        %v3751 = vrot.slane %v3750, 4
        %v3752 = vadd.f32 %v3750, %v3751
        %v3753 = vrot.slane %v3752, 2
        %v3754 = vadd.f32 %v3752, %v3753
        %v3755 = vrot.slane %v3754, 1
        %v3756 = vadd.f32 %v3754, %v3755
        %3757 = vst.msk [vmem:[%s251] sm:$0xff] %vm996, %v3703
        %3758 = vst.msk [vmem:[%s258] sm:$0xff] %vm996, %v3756
        %s3759 = smul.u32 8, %s28
        %p3760 = scmp.lt.s32.totalorder %s27, 1
        %s3761 = scalar_select %p3760, %s27, 1
        %p3762 = scmp.lt.s32.totalorder %s3759, 15
        %s3763 = scalar_select %p3762, %s3759, 15
        %s3764 = smul.addr %s3763, 2
        %s3765 = smul.addr %s3761, 32
        %s3766 = sadd.s32 %s3764, %s3765
        %s3767 = smul.addr %s3766, 8
        %s3768 = scalar_lea.vmem %s3, %s3767
        %s3769 = sand.u32 %s141, 1
        %s3770 = scalar_lea.sflag [#allocation5], %s3769
        %s3771 = sand.u32 %s141, 1
        %s3772 = smul.addr %s3771, 8
        %s3773 = scalar_lea.vmem [#allocation4], %s3772
        %s3774 = sand.u32 %s169, 1
        %s3775 = scalar_lea.sflag [#allocation7], %s3774
        %s3776 = sand.u32 %s169, 1
        %s3777 = smul.addr %s3776, 8
        %s3778 = scalar_lea.vmem [#allocation6], %s3777
        // Predicated region
        $region37: #{tpu_custom_call.1} parent=31 // pred_check
          %p3779 = pneg %p123
        $region38: #{tpu_custom_call.1} parent=31 // pred_check_branch
          %3781 = sbr.rel (%p3779) target = $region40
        $region39: #{tpu_custom_call.1} parent=31 // pred_region
          %s3782 = smul.u32 8, %s28
        $region40: #{tpu_custom_call.1} parent=31 // pred_fallthru
          _
        // Predicated region
        $region41: #{tpu_custom_call.1} parent=31 // pred_check
          %p3783 = pneg %p151
        $region42: #{tpu_custom_call.1} parent=31 // pred_check_branch
          %3785 = sbr.rel (%p3783) target = $region44
        $region43: #{tpu_custom_call.1} parent=31 // pred_region
          %s3787 = ssub.s32 128, 128
          %3788 = vsyncadd %s3770, %s3787
          %s3789 = smul.addr %s27, 2
          %s3790 = sadd.s32 %s28, %s3789
          %s3791 = smul.addr %s3790, 128
          %s3792 = scalar_lea.hbm %s4, %s3791
          %s3794 = sshll.u32 %s3773, 4
          %s3795 = int_to_ptr.vmem [resolvable:$true] %s3794
          %3797 = dma.vmem_to_hbm [thread:$0]  %s3795, 128, %s3792, %s3770
        $region44: #{tpu_custom_call.1} parent=31 // pred_fallthru
          _
        // Predicated region
        $region45: #{tpu_custom_call.1} parent=31 // pred_check
          %p3798 = pneg %p179
        $region46: #{tpu_custom_call.1} parent=31 // pred_check_branch
          %3800 = sbr.rel (%p3798) target = $region48
        $region47: #{tpu_custom_call.1} parent=31 // pred_region
          %s3802 = ssub.s32 128, 128
          %3803 = vsyncadd %s3775, %s3802
          %s3804 = smul.addr %s27, 2
          %s3805 = sadd.s32 %s28, %s3804
          %s3806 = smul.addr %s3805, 128
          %s3807 = scalar_lea.hbm %s5, %s3806
          %s3809 = sshll.u32 %s3778, 4
          %s3810 = int_to_ptr.vmem [resolvable:$true] %s3809
          %3812 = dma.vmem_to_hbm [thread:$0]  %s3810, 128, %s3807, %s3775
        $region48: #{tpu_custom_call.1} parent=31 // pred_fallthru
          _
      $region32: #{tpu_custom_call.1} parent=5 // pred_fallthru
        _
      %p3813 = scmp.le.s32.totalorder 2, %s18
      // Predicated region
      $region49: #{tpu_custom_call.1} parent=5 // pred_check
        %p3814 = pneg %p3813
      $region50: #{tpu_custom_call.1} parent=5 // pred_check_branch
        %3816 = sbr.rel (%p3814) target = $region52
      $region51: #{tpu_custom_call.1} parent=5 // pred_region
        %s3817 = ssub.s32 %s18, 2
        // Predicated region
        $region53: #{tpu_custom_call.1} parent=51 // pred_check
          %p3818 = pneg %p129
        $region54: #{tpu_custom_call.1} parent=51 // pred_check_branch
          %3820 = sbr.rel (%p3818) target = $region56
        $region55: #{tpu_custom_call.1} parent=51 // pred_region
          %s3821 = smul.u32 8, %s30
          %p3822 = scmp.lt.s32.totalorder %s29, 1
          %s3823 = scalar_select %p3822, %s29, 1
          %p3824 = scmp.lt.s32.totalorder %s3821, 15
          %s3825 = scalar_select %p3824, %s3821, 15
          %s3826 = smul.addr %s3825, 2
          %s3827 = smul.addr %s3823, 32
          %s3828 = sadd.s32 %s3826, %s3827
          %s3829 = smul.addr %s3828, 8
          %s3830 = scalar_lea.vmem %s3, %s3829
        $region56: #{tpu_custom_call.1} parent=51 // pred_fallthru
          _
        // Predicated region
        $region57: #{tpu_custom_call.1} parent=51 // pred_check
          %p3831 = pneg %p157
        $region58: #{tpu_custom_call.1} parent=51 // pred_check_branch
          %3833 = sbr.rel (%p3831) target = $region60
        $region59: #{tpu_custom_call.1} parent=51 // pred_region
          %s3834 = sand.u32 %s142, 1
          %s3835 = scalar_lea.sflag [#allocation5], %s3834
          %s3836 = sand.u32 %s142, 1
          %s3837 = smul.addr %s3836, 8
          %s3838 = scalar_lea.vmem [#allocation4], %s3837
          %3839 = dma.done %s3835, 128
        $region60: #{tpu_custom_call.1} parent=51 // pred_fallthru
          _
        // Predicated region
        $region61: #{tpu_custom_call.1} parent=51 // pred_check
          %p3840 = pneg %p185
        $region62: #{tpu_custom_call.1} parent=51 // pred_check_branch
          %3842 = sbr.rel (%p3840) target = $region64
        $region63: #{tpu_custom_call.1} parent=51 // pred_region
          %s3843 = sand.u32 %s170, 1
          %s3844 = scalar_lea.sflag [#allocation7], %s3843
          %s3845 = sand.u32 %s170, 1
          %s3846 = smul.addr %s3845, 8
          %s3847 = scalar_lea.vmem [#allocation6], %s3846
          %3848 = dma.done %s3844, 128
        $region64: #{tpu_custom_call.1} parent=51 // pred_fallthru
          _
      $region52: #{tpu_custom_call.1} parent=5 // pred_fallthru
        _
    $region6: #{tpu_custom_call.1} parent=1 // loop_footer
      %s22 = sadd.s32 1, %s18
    $region7: #{tpu_custom_call.1} parent=1 // loop_footer_branch
      %17 = sbr.rel target = $region3
    $region8: #{tpu_custom_call.1} parent=1 // loop_exit
      _
    %3849 = vsyncpa [#allocation5], 1
    %s3850 = scalar_lea.sflag [#allocation5], 1
    %3851 = vsyncpa %s3850, 1
    %3852 = vsyncpa [#allocation7], 1
    %s3853 = scalar_lea.sflag [#allocation7], 1
    %3854 = vsyncpa %s3853, 1

</llo_original>
